<compile_context>
chip_gen: v6e
topology: v6e:2x2x1
jax: 0.10.0
libtpu: 0.0.40
codegen_flags: <defaults>
</compile_context>

<pallas_src>
import functools

import jax
import jax.numpy as jnp
from jax.experimental import pallas as pl
from jax.experimental.pallas import tpu as pltpu

FC_PAD = 128  # lane-dense width for the FC tail (fc1 width 50 and fc2 output padded)


def _round_up(n, m):
    return -(-n // m) * m


def hybrid_lstm_kernel(x_ref,      # (1, S*BB, D)  time-major rows for this batch block
                       lstm_ref,   # (4, R, H)     per-gate [W_ih^T | W_hh^T | bias] pack
                       fc_ref,     # (R2, 128)     [fc1^T | fc2^T | b1 | b2] pack (lane padded)
                       out_ref,    # (BB, 128)
                       gx_ref,     # VMEM scratch (4, S*BB, H)
                       *, seq_len, batch_block, input_dim, hidden):
    S, BB, D, H = seq_len, batch_block, input_dim, hidden
    f32 = jnp.float32

    # Row offsets inside the packed operands (must match the wrapper packing).
    r_hh = _round_up(D, 8)          # W_hh^T rows start (sublane aligned)
    r_b = r_hh + H                  # fused bias row
    r_w2 = H                        # fc2^T rows start
    r_b1 = H + FC_PAD               # fc1 bias row (sublane aligned for H % 8 == 0)
    r_b2 = r_b1 + 8                 # fc2 bias row

    x2d = x_ref[0]                  # (S*BB, D)

    # Hoisted per-gate input projection + fused bias -> VMEM scratch.
    # One matmul per gate (MXU has large slack at these shapes) and every
    # result is lane-0 aligned, so nothing in the recurrence needs a relayout.
    for k in range(4):
        wih_k = lstm_ref[k, 0:D, :]                               # (D, H)
        b_k = lstm_ref[k, r_b:r_b + 1, :]                         # (1, H)
        gx_ref[k] = jnp.dot(x2d, wih_k, preferred_element_type=f32) + b_k

    # Per-gate recurrent weights, hoisted once (PyTorch gate order: i, f, g, o).
    whh_i = lstm_ref[0, r_hh:r_hh + H, :]
    whh_f = lstm_ref[1, r_hh:r_hh + H, :]
    whh_g = lstm_ref[2, r_hh:r_hh + H, :]
    whh_o = lstm_ref[3, r_hh:r_hh + H, :]

    h = jnp.zeros((BB, H), f32)
    c = jnp.zeros((BB, H), f32)

    # LSTM recurrence.  S is small & static, so the Python loop unrolls into
    # straight-line work; all per-step tensors are lane-aligned (BB, H) tiles.
    for t in range(S):
        lo, hi = t * BB, (t + 1) * BB
        pre_i = gx_ref[0, lo:hi, :] + jnp.dot(h, whh_i, preferred_element_type=f32)
        pre_f = gx_ref[1, lo:hi, :] + jnp.dot(h, whh_f, preferred_element_type=f32)
        pre_g = gx_ref[2, lo:hi, :] + jnp.dot(h, whh_g, preferred_element_type=f32)
        pre_o = gx_ref[3, lo:hi, :] + jnp.dot(h, whh_o, preferred_element_type=f32)
        i_g = jax.nn.sigmoid(pre_i)
        f_g = jax.nn.sigmoid(pre_f)
        o_g = jax.nn.sigmoid(pre_o)
        g_g = jnp.tanh(pre_g)
        c = f_g * c + i_g * g_g
        h = o_g * jnp.tanh(c)

    # Lane-dense FC tail on the last hidden state (128-wide unmasked stores).
    w1 = fc_ref[0:H, :]                                           # (H, 128)
    w2 = fc_ref[r_w2:r_w2 + FC_PAD, :]                            # (128, 128)
    b1 = fc_ref[r_b1:r_b1 + 1, :]                                 # (1, 128)
    b2 = fc_ref[r_b2:r_b2 + 1, :]                                 # (1, 128)
    y = jnp.maximum(jnp.dot(h, w1, preferred_element_type=f32) + b1, 0.0)
    out_ref[...] = jnp.dot(y, w2, preferred_element_type=f32) + b2


def _pack_lstm_params(params, D, H):
    """Per-gate [W_ih^T ; W_hh^T ; (b_ih + b_hh)] packed into one (4, R, H) array."""
    r_hh = _round_up(D, 8)
    r_b = r_hh + H
    R = _round_up(r_b + 1, 8)
    w_ih = params["w_ih"].astype(jnp.float32)                     # (4H, D)
    w_hh = params["w_hh"].astype(jnp.float32)                     # (4H, H)
    b = (params["b_ih"] + params["b_hh"]).astype(jnp.float32)     # (4H,)
    pack = jnp.zeros((4, R, H), jnp.float32)
    for k in range(4):                                            # PyTorch gate order i,f,g,o
        rows = slice(k * H, (k + 1) * H)
        pack = pack.at[k, 0:D, :].set(w_ih[rows, :].T)
        pack = pack.at[k, r_hh:r_hh + H, :].set(w_hh[rows, :].T)
        pack = pack.at[k, r_b, :].set(b[rows])
    return pack


def _pack_fc_params(params, H, O):
    """[fc1^T | fc2^T | b1 | b2] zero-padded to 128 lanes in one (R2, 128) array."""
    F = params["w_fc1"].shape[0]                                  # 50
    r_b1 = H + FC_PAD
    r_b2 = r_b1 + 8
    R2 = r_b2 + 8
    pack = jnp.zeros((R2, FC_PAD), jnp.float32)
    pack = pack.at[0:H, 0:F].set(params["w_fc1"].astype(jnp.float32).T)      # (H, 50)
    pack = pack.at[H:H + F, 0:O].set(params["w_fc2"].astype(jnp.float32).T)  # (50, O)
    pack = pack.at[r_b1, 0:F].set(params["b_fc1"].astype(jnp.float32))
    pack = pack.at[r_b2, 0:O].set(params["b_fc2"].astype(jnp.float32))
    return pack


@jax.jit
def hybrid_lstm_forward(x, params):
    """x: (batch, seq, input_dim) float32 — PyTorch batch_first convention."""
    B, S, D = x.shape
    H = params["w_hh"].shape[1]
    O = params["w_fc2"].shape[0]
    assert O <= FC_PAD and params["w_fc1"].shape[0] <= FC_PAD

    # Pad batch to a sublane multiple and chunk into <=128-row blocks; the
    # leading "parallel" grid axis pipelines large batches and can shard the
    # work across both TensorCores on v7x (grid=(1,) at demo shapes).
    B_pad = _round_up(B, 8)
    if B_pad > 128:
        B_pad = _round_up(B_pad, 128)
        BB = 128
    else:
        BB = B_pad
    n_blocks = B_pad // BB

    # (B, S, D) -> per-block time-major rows: x_blk[b, t*BB + j] = x[b*BB + j, t].
    x_p = jnp.pad(x.astype(jnp.float32), ((0, B_pad - B), (0, 0), (0, 0)))
    x_blk = (x_p.reshape(n_blocks, BB, S, D)
                 .transpose(0, 2, 1, 3)
                 .reshape(n_blocks, S * BB, D))

    lstm_pack = _pack_lstm_params(params, D, H)
    fc_pack = _pack_fc_params(params, H, O)

    kernel = functools.partial(hybrid_lstm_kernel, seq_len=S, batch_block=BB,
                               input_dim=D, hidden=H)
    out_pad = pl.pallas_call(
        kernel,
        out_shape=jax.ShapeDtypeStruct((B_pad, FC_PAD), jnp.float32),
        grid_spec=pltpu.PrefetchScalarGridSpec(
            num_scalar_prefetch=0,
            grid=(n_blocks,),
            in_specs=[
                pl.BlockSpec((1, S * BB, D), lambda b: (b, 0, 0)),
                pl.BlockSpec(lstm_pack.shape, lambda b: (0, 0, 0)),
                pl.BlockSpec(fc_pack.shape, lambda b: (0, 0)),
            ],
            out_specs=pl.BlockSpec((BB, FC_PAD), lambda b: (b, 0)),
            scratch_shapes=[pltpu.VMEM((4, S * BB, H), jnp.float32)],
        ),
        compiler_params=pltpu.CompilerParams(
            dimension_semantics=("parallel",)),
    )(x_blk, lstm_pack, fc_pack)
    return out_pad[:B, :O]


def init_params(key, input_dim, hidden_dim, output_dim=1):
    """Deterministic init matching PyTorch shapes (uniform +/- 1/sqrt(fan))."""
    ks = jax.random.split(key, 8)
    k_lstm = 1.0 / jnp.sqrt(hidden_dim)
    k_fc1 = 1.0 / jnp.sqrt(hidden_dim)
    k_fc2 = 1.0 / jnp.sqrt(50.0)
    u = lambda k, shape, lim: jax.random.uniform(k, shape, jnp.float32, -lim, lim)
    return {
        "w_ih": u(ks[0], (4 * hidden_dim, input_dim), k_lstm),
        "w_hh": u(ks[1], (4 * hidden_dim, hidden_dim), k_lstm),
        "b_ih": u(ks[2], (4 * hidden_dim,), k_lstm),
        "b_hh": u(ks[3], (4 * hidden_dim,), k_lstm),
        "w_fc1": u(ks[4], (50, hidden_dim), k_fc1),
        "b_fc1": u(ks[5], (50,), k_fc1),
        "w_fc2": u(ks[6], (output_dim, 50), k_fc2),
        "b_fc2": u(ks[7], (output_dim,), k_fc2),
    }


def reference_forward(x, params):
    """Pure-JAX reference (mirrors the PyTorch forward, original gate order)."""
    B, S, D = x.shape
    H = params["w_hh"].shape[1]
    h = jnp.zeros((B, H), jnp.float32)
    c = jnp.zeros((B, H), jnp.float32)
    wih_t = params["w_ih"].T
    whh_t = params["w_hh"].T
    b = params["b_ih"] + params["b_hh"]
    for t in range(S):
        gates = x[:, t, :] @ wih_t + h @ whh_t + b
        i_g = jax.nn.sigmoid(gates[:, 0 * H:1 * H])
        f_g = jax.nn.sigmoid(gates[:, 1 * H:2 * H])
        g_g = jnp.tanh(gates[:, 2 * H:3 * H])
        o_g = jax.nn.sigmoid(gates[:, 3 * H:4 * H])
        c = f_g * c + i_g * g_g
        h = o_g * jnp.tanh(c)
    y = jnp.maximum(h @ params["w_fc1"].T + params["b_fc1"], 0.0)
    return y @ params["w_fc2"].T + params["b_fc2"]


if __name__ == "__main__":
    # Small shapes implied by the module: univariate forecasting style.
    batch, seq, input_dim, hidden_dim, output_dim = 8, 8, 4, 32, 1

    key = jax.random.PRNGKey(0)
    kx, kp = jax.random.split(key)
    x = jax.random.normal(kx, (batch, seq, input_dim), jnp.float32)
    params = init_params(kp, input_dim, hidden_dim, output_dim)

    out = hybrid_lstm_forward(x, params)
    out = jax.block_until_ready(out)

    ref = reference_forward(x, params)
    assert out.shape == (batch, output_dim)
    assert jnp.allclose(out, ref, atol=1e-4, rtol=1e-4), (out, ref)

    print("KERNEL_OK")
</pallas_src>

<mosaic_0001>
module attributes {stable_mosaic.version = 11 : i64} {
  func.func @hybrid_lstm_kernel(%arg0: i32, %arg1: memref<1x64x4xf32, #tpu.memory_space<vmem>>, %arg2: memref<4x48x32xf32, #tpu.memory_space<vmem>>, %arg3: memref<176x128xf32, #tpu.memory_space<vmem>>, %arg4: memref<8x128xf32, #tpu.memory_space<vmem>>, %arg5: memref<4x64x32xf32, #tpu.memory_space<vmem>>) attributes {dimension_semantics = [#tpu.dimension_semantics<parallel>], iteration_bounds = array<i64: 1>, scalar_prefetch = 0 : i64, scratch_operands = 1 : i64, tpu.core_type = #tpu.core_type<tc>, window_params = [{transform_indices = @transform_0, window_bounds = array<i64: 1, 64, 4>}, {pipeline_mode = #tpu.pipeline_mode<synchronous>, transform_indices = @transform_1, window_bounds = array<i64: 4, 48, 32>}, {pipeline_mode = #tpu.pipeline_mode<synchronous>, transform_indices = @transform_2, window_bounds = array<i64: 176, 128>}, {transform_indices = @transform_3, window_bounds = array<i64: 8, 128>}]} {
    %c0 = arith.constant 0 : index
    %c0_0 = arith.constant 0 : index
    %c0_1 = arith.constant 0 : index
    %0 = vector.load %arg1[%c0, %c0_0, %c0_1] : memref<1x64x4xf32, #tpu.memory_space<vmem>>, vector<1x64x4xf32>
    %1 = vector.shape_cast %0 : vector<1x64x4xf32> to vector<64x4xf32>
    %c0_2 = arith.constant 0 : index
    %c0_3 = arith.constant 0 : index
    %c0_4 = arith.constant 0 : index
    %2 = vector.load %arg2[%c0_2, %c0_3, %c0_4] : memref<4x48x32xf32, #tpu.memory_space<vmem>>, vector<1x4x32xf32>
    %3 = vector.shape_cast %2 : vector<1x4x32xf32> to vector<4x32xf32>
    %c0_5 = arith.constant 0 : index
    %c40 = arith.constant 40 : index
    %c0_6 = arith.constant 0 : index
    %4 = vector.load %arg2[%c0_5, %c40, %c0_6] : memref<4x48x32xf32, #tpu.memory_space<vmem>>, vector<1x1x32xf32>
    %5 = vector.shape_cast %4 : vector<1x1x32xf32> to vector<1x32xf32>
    %cst = arith.constant dense<0.000000e+00> : vector<64x32xf32>
    %6 = tpu.matmul %1, %3, %cst {dimension_numbers = #tpu.dot_dimension_numbers<[1], [0], [0], [1], [0, 0, 1, 1], [], []>} : vector<64x4xf32>, vector<4x32xf32>, vector<64x32xf32> -> vector<64x32xf32>
    %7 = vector.broadcast %5 : vector<1x32xf32> to vector<64x32xf32>
    %8 = arith.addf %6, %7 : vector<64x32xf32>
    %c0_7 = arith.constant 0 : index
    %c0_8 = arith.constant 0 : index
    %c0_9 = arith.constant 0 : index
    %9 = vector.load %arg5[%c0_7, %c0_8, %c0_9] : memref<4x64x32xf32, #tpu.memory_space<vmem>>, vector<1x64x32xf32>
    %10 = vector.shape_cast %9 : vector<1x64x32xf32> to vector<64x32xf32>
    %11 = vector.shape_cast %8 : vector<64x32xf32> to vector<1x64x32xf32>
    tpu.vector_store %arg5[%c0_7, %c0_8, %c0_9], %11 {strides = array<i32>} : memref<4x64x32xf32, #tpu.memory_space<vmem>>, vector<1x64x32xf32>,
    %c1 = arith.constant 1 : index
    %c0_10 = arith.constant 0 : index
    %c0_11 = arith.constant 0 : index
    %12 = vector.load %arg2[%c1, %c0_10, %c0_11] : memref<4x48x32xf32, #tpu.memory_space<vmem>>, vector<1x4x32xf32>
    %13 = vector.shape_cast %12 : vector<1x4x32xf32> to vector<4x32xf32>
    %c1_12 = arith.constant 1 : index
    %c40_13 = arith.constant 40 : index
    %c0_14 = arith.constant 0 : index
    %14 = vector.load %arg2[%c1_12, %c40_13, %c0_14] : memref<4x48x32xf32, #tpu.memory_space<vmem>>, vector<1x1x32xf32>
    %15 = vector.shape_cast %14 : vector<1x1x32xf32> to vector<1x32xf32>
    %cst_15 = arith.constant dense<0.000000e+00> : vector<64x32xf32>
    %16 = tpu.matmul %1, %13, %cst_15 {dimension_numbers = #tpu.dot_dimension_numbers<[1], [0], [0], [1], [0, 0, 1, 1], [], []>} : vector<64x4xf32>, vector<4x32xf32>, vector<64x32xf32> -> vector<64x32xf32>
    %17 = vector.broadcast %15 : vector<1x32xf32> to vector<64x32xf32>
    %18 = arith.addf %16, %17 : vector<64x32xf32>
    %c1_16 = arith.constant 1 : index
    %c0_17 = arith.constant 0 : index
    %c0_18 = arith.constant 0 : index
    %19 = vector.load %arg5[%c1_16, %c0_17, %c0_18] : memref<4x64x32xf32, #tpu.memory_space<vmem>>, vector<1x64x32xf32>
    %20 = vector.shape_cast %19 : vector<1x64x32xf32> to vector<64x32xf32>
    %21 = vector.shape_cast %18 : vector<64x32xf32> to vector<1x64x32xf32>
    tpu.vector_store %arg5[%c1_16, %c0_17, %c0_18], %21 {strides = array<i32>} : memref<4x64x32xf32, #tpu.memory_space<vmem>>, vector<1x64x32xf32>,
    %c2 = arith.constant 2 : index
    %c0_19 = arith.constant 0 : index
    %c0_20 = arith.constant 0 : index
    %22 = vector.load %arg2[%c2, %c0_19, %c0_20] : memref<4x48x32xf32, #tpu.memory_space<vmem>>, vector<1x4x32xf32>
    %23 = vector.shape_cast %22 : vector<1x4x32xf32> to vector<4x32xf32>
    %c2_21 = arith.constant 2 : index
    %c40_22 = arith.constant 40 : index
    %c0_23 = arith.constant 0 : index
    %24 = vector.load %arg2[%c2_21, %c40_22, %c0_23] : memref<4x48x32xf32, #tpu.memory_space<vmem>>, vector<1x1x32xf32>
    %25 = vector.shape_cast %24 : vector<1x1x32xf32> to vector<1x32xf32>
    %cst_24 = arith.constant dense<0.000000e+00> : vector<64x32xf32>
    %26 = tpu.matmul %1, %23, %cst_24 {dimension_numbers = #tpu.dot_dimension_numbers<[1], [0], [0], [1], [0, 0, 1, 1], [], []>} : vector<64x4xf32>, vector<4x32xf32>, vector<64x32xf32> -> vector<64x32xf32>
    %27 = vector.broadcast %25 : vector<1x32xf32> to vector<64x32xf32>
    %28 = arith.addf %26, %27 : vector<64x32xf32>
    %c2_25 = arith.constant 2 : index
    %c0_26 = arith.constant 0 : index
    %c0_27 = arith.constant 0 : index
    %29 = vector.load %arg5[%c2_25, %c0_26, %c0_27] : memref<4x64x32xf32, #tpu.memory_space<vmem>>, vector<1x64x32xf32>
    %30 = vector.shape_cast %29 : vector<1x64x32xf32> to vector<64x32xf32>
    %31 = vector.shape_cast %28 : vector<64x32xf32> to vector<1x64x32xf32>
    tpu.vector_store %arg5[%c2_25, %c0_26, %c0_27], %31 {strides = array<i32>} : memref<4x64x32xf32, #tpu.memory_space<vmem>>, vector<1x64x32xf32>,
    %c3 = arith.constant 3 : index
    %c0_28 = arith.constant 0 : index
    %c0_29 = arith.constant 0 : index
    %32 = vector.load %arg2[%c3, %c0_28, %c0_29] : memref<4x48x32xf32, #tpu.memory_space<vmem>>, vector<1x4x32xf32>
    %33 = vector.shape_cast %32 : vector<1x4x32xf32> to vector<4x32xf32>
    %c3_30 = arith.constant 3 : index
    %c40_31 = arith.constant 40 : index
    %c0_32 = arith.constant 0 : index
    %34 = vector.load %arg2[%c3_30, %c40_31, %c0_32] : memref<4x48x32xf32, #tpu.memory_space<vmem>>, vector<1x1x32xf32>
    %35 = vector.shape_cast %34 : vector<1x1x32xf32> to vector<1x32xf32>
    %cst_33 = arith.constant dense<0.000000e+00> : vector<64x32xf32>
    %36 = tpu.matmul %1, %33, %cst_33 {dimension_numbers = #tpu.dot_dimension_numbers<[1], [0], [0], [1], [0, 0, 1, 1], [], []>} : vector<64x4xf32>, vector<4x32xf32>, vector<64x32xf32> -> vector<64x32xf32>
    %37 = vector.broadcast %35 : vector<1x32xf32> to vector<64x32xf32>
    %38 = arith.addf %36, %37 : vector<64x32xf32>
    %c3_34 = arith.constant 3 : index
    %c0_35 = arith.constant 0 : index
    %c0_36 = arith.constant 0 : index
    %39 = vector.load %arg5[%c3_34, %c0_35, %c0_36] : memref<4x64x32xf32, #tpu.memory_space<vmem>>, vector<1x64x32xf32>
    %40 = vector.shape_cast %39 : vector<1x64x32xf32> to vector<64x32xf32>
    %41 = vector.shape_cast %38 : vector<64x32xf32> to vector<1x64x32xf32>
    tpu.vector_store %arg5[%c3_34, %c0_35, %c0_36], %41 {strides = array<i32>} : memref<4x64x32xf32, #tpu.memory_space<vmem>>, vector<1x64x32xf32>,
    %c0_37 = arith.constant 0 : index
    %c8 = arith.constant 8 : index
    %c0_38 = arith.constant 0 : index
    %42 = vector.load %arg2[%c0_37, %c8, %c0_38] : memref<4x48x32xf32, #tpu.memory_space<vmem>>, vector<1x32x32xf32>
    %43 = vector.shape_cast %42 : vector<1x32x32xf32> to vector<32x32xf32>
    %c1_39 = arith.constant 1 : index
    %c8_40 = arith.constant 8 : index
    %c0_41 = arith.constant 0 : index
    %44 = vector.load %arg2[%c1_39, %c8_40, %c0_41] : memref<4x48x32xf32, #tpu.memory_space<vmem>>, vector<1x32x32xf32>
    %45 = vector.shape_cast %44 : vector<1x32x32xf32> to vector<32x32xf32>
    %c2_42 = arith.constant 2 : index
    %c8_43 = arith.constant 8 : index
    %c0_44 = arith.constant 0 : index
    %46 = vector.load %arg2[%c2_42, %c8_43, %c0_44] : memref<4x48x32xf32, #tpu.memory_space<vmem>>, vector<1x32x32xf32>
    %47 = vector.shape_cast %46 : vector<1x32x32xf32> to vector<32x32xf32>
    %c3_45 = arith.constant 3 : index
    %c8_46 = arith.constant 8 : index
    %c0_47 = arith.constant 0 : index
    %48 = vector.load %arg2[%c3_45, %c8_46, %c0_47] : memref<4x48x32xf32, #tpu.memory_space<vmem>>, vector<1x32x32xf32>
    %49 = vector.shape_cast %48 : vector<1x32x32xf32> to vector<32x32xf32>
    %cst_48 = arith.constant 0.000000e+00 : f32
    %50 = vector.broadcast %cst_48 : f32 to vector<8x32xf32>
    %cst_49 = arith.constant 0.000000e+00 : f32
    %51 = vector.broadcast %cst_49 : f32 to vector<8x32xf32>
    %c0_50 = arith.constant 0 : index
    %c0_51 = arith.constant 0 : index
    %c0_52 = arith.constant 0 : index
    %52 = vector.load %arg5[%c0_50, %c0_51, %c0_52] : memref<4x64x32xf32, #tpu.memory_space<vmem>>, vector<1x8x32xf32>
    %53 = vector.shape_cast %52 : vector<1x8x32xf32> to vector<8x32xf32>
    %cst_53 = arith.constant dense<0.000000e+00> : vector<8x32xf32>
    %54 = tpu.matmul %50, %43, %cst_53 {dimension_numbers = #tpu.dot_dimension_numbers<[1], [0], [0], [1], [0, 0, 1, 1], [], []>} : vector<8x32xf32>, vector<32x32xf32>, vector<8x32xf32> -> vector<8x32xf32>
    %55 = arith.addf %53, %54 : vector<8x32xf32>
    %c1_54 = arith.constant 1 : index
    %c0_55 = arith.constant 0 : index
    %c0_56 = arith.constant 0 : index
    %56 = vector.load %arg5[%c1_54, %c0_55, %c0_56] : memref<4x64x32xf32, #tpu.memory_space<vmem>>, vector<1x8x32xf32>
    %57 = vector.shape_cast %56 : vector<1x8x32xf32> to vector<8x32xf32>
    %cst_57 = arith.constant dense<0.000000e+00> : vector<8x32xf32>
    %58 = tpu.matmul %50, %45, %cst_57 {dimension_numbers = #tpu.dot_dimension_numbers<[1], [0], [0], [1], [0, 0, 1, 1], [], []>} : vector<8x32xf32>, vector<32x32xf32>, vector<8x32xf32> -> vector<8x32xf32>
    %59 = arith.addf %57, %58 : vector<8x32xf32>
    %c2_58 = arith.constant 2 : index
    %c0_59 = arith.constant 0 : index
    %c0_60 = arith.constant 0 : index
    %60 = vector.load %arg5[%c2_58, %c0_59, %c0_60] : memref<4x64x32xf32, #tpu.memory_space<vmem>>, vector<1x8x32xf32>
    %61 = vector.shape_cast %60 : vector<1x8x32xf32> to vector<8x32xf32>
    %cst_61 = arith.constant dense<0.000000e+00> : vector<8x32xf32>
    %62 = tpu.matmul %50, %47, %cst_61 {dimension_numbers = #tpu.dot_dimension_numbers<[1], [0], [0], [1], [0, 0, 1, 1], [], []>} : vector<8x32xf32>, vector<32x32xf32>, vector<8x32xf32> -> vector<8x32xf32>
    %63 = arith.addf %61, %62 : vector<8x32xf32>
    %c3_62 = arith.constant 3 : index
    %c0_63 = arith.constant 0 : index
    %c0_64 = arith.constant 0 : index
    %64 = vector.load %arg5[%c3_62, %c0_63, %c0_64] : memref<4x64x32xf32, #tpu.memory_space<vmem>>, vector<1x8x32xf32>
    %65 = vector.shape_cast %64 : vector<1x8x32xf32> to vector<8x32xf32>
    %cst_65 = arith.constant dense<0.000000e+00> : vector<8x32xf32>
    %66 = tpu.matmul %50, %49, %cst_65 {dimension_numbers = #tpu.dot_dimension_numbers<[1], [0], [0], [1], [0, 0, 1, 1], [], []>} : vector<8x32xf32>, vector<32x32xf32>, vector<8x32xf32> -> vector<8x32xf32>
    %67 = arith.addf %65, %66 : vector<8x32xf32>
    %68 = arith.negf %55 : vector<8x32xf32>
    %69 = math.exp %68 : vector<8x32xf32>
    %cst_66 = arith.constant 1.000000e+00 : f32
    %70 = vector.broadcast %cst_66 : f32 to vector<8x32xf32>
    %71 = arith.addf %70, %69 : vector<8x32xf32>
    %72 = arith.divf %70, %71 : vector<8x32xf32>
    %73 = arith.negf %59 : vector<8x32xf32>
    %74 = math.exp %73 : vector<8x32xf32>
    %cst_67 = arith.constant 1.000000e+00 : f32
    %75 = vector.broadcast %cst_67 : f32 to vector<8x32xf32>
    %76 = arith.addf %75, %74 : vector<8x32xf32>
    %77 = arith.divf %75, %76 : vector<8x32xf32>
    %78 = arith.negf %67 : vector<8x32xf32>
    %79 = math.exp %78 : vector<8x32xf32>
    %cst_68 = arith.constant 1.000000e+00 : f32
    %80 = vector.broadcast %cst_68 : f32 to vector<8x32xf32>
    %81 = arith.addf %80, %79 : vector<8x32xf32>
    %82 = arith.divf %80, %81 : vector<8x32xf32>
    %83 = math.tanh %63 : vector<8x32xf32>
    %84 = arith.mulf %77, %51 : vector<8x32xf32>
    %85 = arith.mulf %72, %83 : vector<8x32xf32>
    %86 = arith.addf %84, %85 : vector<8x32xf32>
    %87 = math.tanh %86 : vector<8x32xf32>
    %88 = arith.mulf %82, %87 : vector<8x32xf32>
    %c0_69 = arith.constant 0 : index
    %c8_70 = arith.constant 8 : index
    %c0_71 = arith.constant 0 : index
    %89 = vector.load %arg5[%c0_69, %c8_70, %c0_71] : memref<4x64x32xf32, #tpu.memory_space<vmem>>, vector<1x8x32xf32>
    %90 = vector.shape_cast %89 : vector<1x8x32xf32> to vector<8x32xf32>
    %cst_72 = arith.constant dense<0.000000e+00> : vector<8x32xf32>
    %91 = tpu.matmul %88, %43, %cst_72 {dimension_numbers = #tpu.dot_dimension_numbers<[1], [0], [0], [1], [0, 0, 1, 1], [], []>} : vector<8x32xf32>, vector<32x32xf32>, vector<8x32xf32> -> vector<8x32xf32>
    %92 = arith.addf %90, %91 : vector<8x32xf32>
    %c1_73 = arith.constant 1 : index
    %c8_74 = arith.constant 8 : index
    %c0_75 = arith.constant 0 : index
    %93 = vector.load %arg5[%c1_73, %c8_74, %c0_75] : memref<4x64x32xf32, #tpu.memory_space<vmem>>, vector<1x8x32xf32>
    %94 = vector.shape_cast %93 : vector<1x8x32xf32> to vector<8x32xf32>
    %cst_76 = arith.constant dense<0.000000e+00> : vector<8x32xf32>
    %95 = tpu.matmul %88, %45, %cst_76 {dimension_numbers = #tpu.dot_dimension_numbers<[1], [0], [0], [1], [0, 0, 1, 1], [], []>} : vector<8x32xf32>, vector<32x32xf32>, vector<8x32xf32> -> vector<8x32xf32>
    %96 = arith.addf %94, %95 : vector<8x32xf32>
    %c2_77 = arith.constant 2 : index
    %c8_78 = arith.constant 8 : index
    %c0_79 = arith.constant 0 : index
    %97 = vector.load %arg5[%c2_77, %c8_78, %c0_79] : memref<4x64x32xf32, #tpu.memory_space<vmem>>, vector<1x8x32xf32>
    %98 = vector.shape_cast %97 : vector<1x8x32xf32> to vector<8x32xf32>
    %cst_80 = arith.constant dense<0.000000e+00> : vector<8x32xf32>
    %99 = tpu.matmul %88, %47, %cst_80 {dimension_numbers = #tpu.dot_dimension_numbers<[1], [0], [0], [1], [0, 0, 1, 1], [], []>} : vector<8x32xf32>, vector<32x32xf32>, vector<8x32xf32> -> vector<8x32xf32>
    %100 = arith.addf %98, %99 : vector<8x32xf32>
    %c3_81 = arith.constant 3 : index
    %c8_82 = arith.constant 8 : index
    %c0_83 = arith.constant 0 : index
    %101 = vector.load %arg5[%c3_81, %c8_82, %c0_83] : memref<4x64x32xf32, #tpu.memory_space<vmem>>, vector<1x8x32xf32>
    %102 = vector.shape_cast %101 : vector<1x8x32xf32> to vector<8x32xf32>
    %cst_84 = arith.constant dense<0.000000e+00> : vector<8x32xf32>
    %103 = tpu.matmul %88, %49, %cst_84 {dimension_numbers = #tpu.dot_dimension_numbers<[1], [0], [0], [1], [0, 0, 1, 1], [], []>} : vector<8x32xf32>, vector<32x32xf32>, vector<8x32xf32> -> vector<8x32xf32>
    %104 = arith.addf %102, %103 : vector<8x32xf32>
    %105 = arith.negf %92 : vector<8x32xf32>
    %106 = math.exp %105 : vector<8x32xf32>
    %cst_85 = arith.constant 1.000000e+00 : f32
    %107 = vector.broadcast %cst_85 : f32 to vector<8x32xf32>
    %108 = arith.addf %107, %106 : vector<8x32xf32>
    %109 = arith.divf %107, %108 : vector<8x32xf32>
    %110 = arith.negf %96 : vector<8x32xf32>
    %111 = math.exp %110 : vector<8x32xf32>
    %cst_86 = arith.constant 1.000000e+00 : f32
    %112 = vector.broadcast %cst_86 : f32 to vector<8x32xf32>
    %113 = arith.addf %112, %111 : vector<8x32xf32>
    %114 = arith.divf %112, %113 : vector<8x32xf32>
    %115 = arith.negf %104 : vector<8x32xf32>
    %116 = math.exp %115 : vector<8x32xf32>
    %cst_87 = arith.constant 1.000000e+00 : f32
    %117 = vector.broadcast %cst_87 : f32 to vector<8x32xf32>
    %118 = arith.addf %117, %116 : vector<8x32xf32>
    %119 = arith.divf %117, %118 : vector<8x32xf32>
    %120 = math.tanh %100 : vector<8x32xf32>
    %121 = arith.mulf %114, %86 : vector<8x32xf32>
    %122 = arith.mulf %109, %120 : vector<8x32xf32>
    %123 = arith.addf %121, %122 : vector<8x32xf32>
    %124 = math.tanh %123 : vector<8x32xf32>
    %125 = arith.mulf %119, %124 : vector<8x32xf32>
    %c0_88 = arith.constant 0 : index
    %c16 = arith.constant 16 : index
    %c0_89 = arith.constant 0 : index
    %126 = vector.load %arg5[%c0_88, %c16, %c0_89] : memref<4x64x32xf32, #tpu.memory_space<vmem>>, vector<1x8x32xf32>
    %127 = vector.shape_cast %126 : vector<1x8x32xf32> to vector<8x32xf32>
    %cst_90 = arith.constant dense<0.000000e+00> : vector<8x32xf32>
    %128 = tpu.matmul %125, %43, %cst_90 {dimension_numbers = #tpu.dot_dimension_numbers<[1], [0], [0], [1], [0, 0, 1, 1], [], []>} : vector<8x32xf32>, vector<32x32xf32>, vector<8x32xf32> -> vector<8x32xf32>
    %129 = arith.addf %127, %128 : vector<8x32xf32>
    %c1_91 = arith.constant 1 : index
    %c16_92 = arith.constant 16 : index
    %c0_93 = arith.constant 0 : index
    %130 = vector.load %arg5[%c1_91, %c16_92, %c0_93] : memref<4x64x32xf32, #tpu.memory_space<vmem>>, vector<1x8x32xf32>
    %131 = vector.shape_cast %130 : vector<1x8x32xf32> to vector<8x32xf32>
    %cst_94 = arith.constant dense<0.000000e+00> : vector<8x32xf32>
    %132 = tpu.matmul %125, %45, %cst_94 {dimension_numbers = #tpu.dot_dimension_numbers<[1], [0], [0], [1], [0, 0, 1, 1], [], []>} : vector<8x32xf32>, vector<32x32xf32>, vector<8x32xf32> -> vector<8x32xf32>
    %133 = arith.addf %131, %132 : vector<8x32xf32>
    %c2_95 = arith.constant 2 : index
    %c16_96 = arith.constant 16 : index
    %c0_97 = arith.constant 0 : index
    %134 = vector.load %arg5[%c2_95, %c16_96, %c0_97] : memref<4x64x32xf32, #tpu.memory_space<vmem>>, vector<1x8x32xf32>
    %135 = vector.shape_cast %134 : vector<1x8x32xf32> to vector<8x32xf32>
    %cst_98 = arith.constant dense<0.000000e+00> : vector<8x32xf32>
    %136 = tpu.matmul %125, %47, %cst_98 {dimension_numbers = #tpu.dot_dimension_numbers<[1], [0], [0], [1], [0, 0, 1, 1], [], []>} : vector<8x32xf32>, vector<32x32xf32>, vector<8x32xf32> -> vector<8x32xf32>
    %137 = arith.addf %135, %136 : vector<8x32xf32>
    %c3_99 = arith.constant 3 : index
    %c16_100 = arith.constant 16 : index
    %c0_101 = arith.constant 0 : index
    %138 = vector.load %arg5[%c3_99, %c16_100, %c0_101] : memref<4x64x32xf32, #tpu.memory_space<vmem>>, vector<1x8x32xf32>
    %139 = vector.shape_cast %138 : vector<1x8x32xf32> to vector<8x32xf32>
    %cst_102 = arith.constant dense<0.000000e+00> : vector<8x32xf32>
    %140 = tpu.matmul %125, %49, %cst_102 {dimension_numbers = #tpu.dot_dimension_numbers<[1], [0], [0], [1], [0, 0, 1, 1], [], []>} : vector<8x32xf32>, vector<32x32xf32>, vector<8x32xf32> -> vector<8x32xf32>
    %141 = arith.addf %139, %140 : vector<8x32xf32>
    %142 = arith.negf %129 : vector<8x32xf32>
    %143 = math.exp %142 : vector<8x32xf32>
    %cst_103 = arith.constant 1.000000e+00 : f32
    %144 = vector.broadcast %cst_103 : f32 to vector<8x32xf32>
    %145 = arith.addf %144, %143 : vector<8x32xf32>
    %146 = arith.divf %144, %145 : vector<8x32xf32>
    %147 = arith.negf %133 : vector<8x32xf32>
    %148 = math.exp %147 : vector<8x32xf32>
    %cst_104 = arith.constant 1.000000e+00 : f32
    %149 = vector.broadcast %cst_104 : f32 to vector<8x32xf32>
    %150 = arith.addf %149, %148 : vector<8x32xf32>
    %151 = arith.divf %149, %150 : vector<8x32xf32>
    %152 = arith.negf %141 : vector<8x32xf32>
    %153 = math.exp %152 : vector<8x32xf32>
    %cst_105 = arith.constant 1.000000e+00 : f32
    %154 = vector.broadcast %cst_105 : f32 to vector<8x32xf32>
    %155 = arith.addf %154, %153 : vector<8x32xf32>
    %156 = arith.divf %154, %155 : vector<8x32xf32>
    %157 = math.tanh %137 : vector<8x32xf32>
    %158 = arith.mulf %151, %123 : vector<8x32xf32>
    %159 = arith.mulf %146, %157 : vector<8x32xf32>
    %160 = arith.addf %158, %159 : vector<8x32xf32>
    %161 = math.tanh %160 : vector<8x32xf32>
    %162 = arith.mulf %156, %161 : vector<8x32xf32>
    %c0_106 = arith.constant 0 : index
    %c24 = arith.constant 24 : index
    %c0_107 = arith.constant 0 : index
    %163 = vector.load %arg5[%c0_106, %c24, %c0_107] : memref<4x64x32xf32, #tpu.memory_space<vmem>>, vector<1x8x32xf32>
    %164 = vector.shape_cast %163 : vector<1x8x32xf32> to vector<8x32xf32>
    %cst_108 = arith.constant dense<0.000000e+00> : vector<8x32xf32>
    %165 = tpu.matmul %162, %43, %cst_108 {dimension_numbers = #tpu.dot_dimension_numbers<[1], [0], [0], [1], [0, 0, 1, 1], [], []>} : vector<8x32xf32>, vector<32x32xf32>, vector<8x32xf32> -> vector<8x32xf32>
    %166 = arith.addf %164, %165 : vector<8x32xf32>
    %c1_109 = arith.constant 1 : index
    %c24_110 = arith.constant 24 : index
    %c0_111 = arith.constant 0 : index
    %167 = vector.load %arg5[%c1_109, %c24_110, %c0_111] : memref<4x64x32xf32, #tpu.memory_space<vmem>>, vector<1x8x32xf32>
    %168 = vector.shape_cast %167 : vector<1x8x32xf32> to vector<8x32xf32>
    %cst_112 = arith.constant dense<0.000000e+00> : vector<8x32xf32>
    %169 = tpu.matmul %162, %45, %cst_112 {dimension_numbers = #tpu.dot_dimension_numbers<[1], [0], [0], [1], [0, 0, 1, 1], [], []>} : vector<8x32xf32>, vector<32x32xf32>, vector<8x32xf32> -> vector<8x32xf32>
    %170 = arith.addf %168, %169 : vector<8x32xf32>
    %c2_113 = arith.constant 2 : index
    %c24_114 = arith.constant 24 : index
    %c0_115 = arith.constant 0 : index
    %171 = vector.load %arg5[%c2_113, %c24_114, %c0_115] : memref<4x64x32xf32, #tpu.memory_space<vmem>>, vector<1x8x32xf32>
    %172 = vector.shape_cast %171 : vector<1x8x32xf32> to vector<8x32xf32>
    %cst_116 = arith.constant dense<0.000000e+00> : vector<8x32xf32>
    %173 = tpu.matmul %162, %47, %cst_116 {dimension_numbers = #tpu.dot_dimension_numbers<[1], [0], [0], [1], [0, 0, 1, 1], [], []>} : vector<8x32xf32>, vector<32x32xf32>, vector<8x32xf32> -> vector<8x32xf32>
    %174 = arith.addf %172, %173 : vector<8x32xf32>
    %c3_117 = arith.constant 3 : index
    %c24_118 = arith.constant 24 : index
    %c0_119 = arith.constant 0 : index
    %175 = vector.load %arg5[%c3_117, %c24_118, %c0_119] : memref<4x64x32xf32, #tpu.memory_space<vmem>>, vector<1x8x32xf32>
    %176 = vector.shape_cast %175 : vector<1x8x32xf32> to vector<8x32xf32>
    %cst_120 = arith.constant dense<0.000000e+00> : vector<8x32xf32>
    %177 = tpu.matmul %162, %49, %cst_120 {dimension_numbers = #tpu.dot_dimension_numbers<[1], [0], [0], [1], [0, 0, 1, 1], [], []>} : vector<8x32xf32>, vector<32x32xf32>, vector<8x32xf32> -> vector<8x32xf32>
    %178 = arith.addf %176, %177 : vector<8x32xf32>
    %179 = arith.negf %166 : vector<8x32xf32>
    %180 = math.exp %179 : vector<8x32xf32>
    %cst_121 = arith.constant 1.000000e+00 : f32
    %181 = vector.broadcast %cst_121 : f32 to vector<8x32xf32>
    %182 = arith.addf %181, %180 : vector<8x32xf32>
    %183 = arith.divf %181, %182 : vector<8x32xf32>
    %184 = arith.negf %170 : vector<8x32xf32>
    %185 = math.exp %184 : vector<8x32xf32>
    %cst_122 = arith.constant 1.000000e+00 : f32
    %186 = vector.broadcast %cst_122 : f32 to vector<8x32xf32>
    %187 = arith.addf %186, %185 : vector<8x32xf32>
    %188 = arith.divf %186, %187 : vector<8x32xf32>
    %189 = arith.negf %178 : vector<8x32xf32>
    %190 = math.exp %189 : vector<8x32xf32>
    %cst_123 = arith.constant 1.000000e+00 : f32
    %191 = vector.broadcast %cst_123 : f32 to vector<8x32xf32>
    %192 = arith.addf %191, %190 : vector<8x32xf32>
    %193 = arith.divf %191, %192 : vector<8x32xf32>
    %194 = math.tanh %174 : vector<8x32xf32>
    %195 = arith.mulf %188, %160 : vector<8x32xf32>
    %196 = arith.mulf %183, %194 : vector<8x32xf32>
    %197 = arith.addf %195, %196 : vector<8x32xf32>
    %198 = math.tanh %197 : vector<8x32xf32>
    %199 = arith.mulf %193, %198 : vector<8x32xf32>
    %c0_124 = arith.constant 0 : index
    %c32 = arith.constant 32 : index
    %c0_125 = arith.constant 0 : index
    %200 = vector.load %arg5[%c0_124, %c32, %c0_125] : memref<4x64x32xf32, #tpu.memory_space<vmem>>, vector<1x8x32xf32>
    %201 = vector.shape_cast %200 : vector<1x8x32xf32> to vector<8x32xf32>
    %cst_126 = arith.constant dense<0.000000e+00> : vector<8x32xf32>
    %202 = tpu.matmul %199, %43, %cst_126 {dimension_numbers = #tpu.dot_dimension_numbers<[1], [0], [0], [1], [0, 0, 1, 1], [], []>} : vector<8x32xf32>, vector<32x32xf32>, vector<8x32xf32> -> vector<8x32xf32>
    %203 = arith.addf %201, %202 : vector<8x32xf32>
    %c1_127 = arith.constant 1 : index
    %c32_128 = arith.constant 32 : index
    %c0_129 = arith.constant 0 : index
    %204 = vector.load %arg5[%c1_127, %c32_128, %c0_129] : memref<4x64x32xf32, #tpu.memory_space<vmem>>, vector<1x8x32xf32>
    %205 = vector.shape_cast %204 : vector<1x8x32xf32> to vector<8x32xf32>
    %cst_130 = arith.constant dense<0.000000e+00> : vector<8x32xf32>
    %206 = tpu.matmul %199, %45, %cst_130 {dimension_numbers = #tpu.dot_dimension_numbers<[1], [0], [0], [1], [0, 0, 1, 1], [], []>} : vector<8x32xf32>, vector<32x32xf32>, vector<8x32xf32> -> vector<8x32xf32>
    %207 = arith.addf %205, %206 : vector<8x32xf32>
    %c2_131 = arith.constant 2 : index
    %c32_132 = arith.constant 32 : index
    %c0_133 = arith.constant 0 : index
    %208 = vector.load %arg5[%c2_131, %c32_132, %c0_133] : memref<4x64x32xf32, #tpu.memory_space<vmem>>, vector<1x8x32xf32>
    %209 = vector.shape_cast %208 : vector<1x8x32xf32> to vector<8x32xf32>
    %cst_134 = arith.constant dense<0.000000e+00> : vector<8x32xf32>
    %210 = tpu.matmul %199, %47, %cst_134 {dimension_numbers = #tpu.dot_dimension_numbers<[1], [0], [0], [1], [0, 0, 1, 1], [], []>} : vector<8x32xf32>, vector<32x32xf32>, vector<8x32xf32> -> vector<8x32xf32>
    %211 = arith.addf %209, %210 : vector<8x32xf32>
    %c3_135 = arith.constant 3 : index
    %c32_136 = arith.constant 32 : index
    %c0_137 = arith.constant 0 : index
    %212 = vector.load %arg5[%c3_135, %c32_136, %c0_137] : memref<4x64x32xf32, #tpu.memory_space<vmem>>, vector<1x8x32xf32>
    %213 = vector.shape_cast %212 : vector<1x8x32xf32> to vector<8x32xf32>
    %cst_138 = arith.constant dense<0.000000e+00> : vector<8x32xf32>
    %214 = tpu.matmul %199, %49, %cst_138 {dimension_numbers = #tpu.dot_dimension_numbers<[1], [0], [0], [1], [0, 0, 1, 1], [], []>} : vector<8x32xf32>, vector<32x32xf32>, vector<8x32xf32> -> vector<8x32xf32>
    %215 = arith.addf %213, %214 : vector<8x32xf32>
    %216 = arith.negf %203 : vector<8x32xf32>
    %217 = math.exp %216 : vector<8x32xf32>
    %cst_139 = arith.constant 1.000000e+00 : f32
    %218 = vector.broadcast %cst_139 : f32 to vector<8x32xf32>
    %219 = arith.addf %218, %217 : vector<8x32xf32>
    %220 = arith.divf %218, %219 : vector<8x32xf32>
    %221 = arith.negf %207 : vector<8x32xf32>
    %222 = math.exp %221 : vector<8x32xf32>
    %cst_140 = arith.constant 1.000000e+00 : f32
    %223 = vector.broadcast %cst_140 : f32 to vector<8x32xf32>
    %224 = arith.addf %223, %222 : vector<8x32xf32>
    %225 = arith.divf %223, %224 : vector<8x32xf32>
    %226 = arith.negf %215 : vector<8x32xf32>
    %227 = math.exp %226 : vector<8x32xf32>
    %cst_141 = arith.constant 1.000000e+00 : f32
    %228 = vector.broadcast %cst_141 : f32 to vector<8x32xf32>
    %229 = arith.addf %228, %227 : vector<8x32xf32>
    %230 = arith.divf %228, %229 : vector<8x32xf32>
    %231 = math.tanh %211 : vector<8x32xf32>
    %232 = arith.mulf %225, %197 : vector<8x32xf32>
    %233 = arith.mulf %220, %231 : vector<8x32xf32>
    %234 = arith.addf %232, %233 : vector<8x32xf32>
    %235 = math.tanh %234 : vector<8x32xf32>
    %236 = arith.mulf %230, %235 : vector<8x32xf32>
    %c0_142 = arith.constant 0 : index
    %c40_143 = arith.constant 40 : index
    %c0_144 = arith.constant 0 : index
    %237 = vector.load %arg5[%c0_142, %c40_143, %c0_144] : memref<4x64x32xf32, #tpu.memory_space<vmem>>, vector<1x8x32xf32>
    %238 = vector.shape_cast %237 : vector<1x8x32xf32> to vector<8x32xf32>
    %cst_145 = arith.constant dense<0.000000e+00> : vector<8x32xf32>
    %239 = tpu.matmul %236, %43, %cst_145 {dimension_numbers = #tpu.dot_dimension_numbers<[1], [0], [0], [1], [0, 0, 1, 1], [], []>} : vector<8x32xf32>, vector<32x32xf32>, vector<8x32xf32> -> vector<8x32xf32>
    %240 = arith.addf %238, %239 : vector<8x32xf32>
    %c1_146 = arith.constant 1 : index
    %c40_147 = arith.constant 40 : index
    %c0_148 = arith.constant 0 : index
    %241 = vector.load %arg5[%c1_146, %c40_147, %c0_148] : memref<4x64x32xf32, #tpu.memory_space<vmem>>, vector<1x8x32xf32>
    %242 = vector.shape_cast %241 : vector<1x8x32xf32> to vector<8x32xf32>
    %cst_149 = arith.constant dense<0.000000e+00> : vector<8x32xf32>
    %243 = tpu.matmul %236, %45, %cst_149 {dimension_numbers = #tpu.dot_dimension_numbers<[1], [0], [0], [1], [0, 0, 1, 1], [], []>} : vector<8x32xf32>, vector<32x32xf32>, vector<8x32xf32> -> vector<8x32xf32>
    %244 = arith.addf %242, %243 : vector<8x32xf32>
    %c2_150 = arith.constant 2 : index
    %c40_151 = arith.constant 40 : index
    %c0_152 = arith.constant 0 : index
    %245 = vector.load %arg5[%c2_150, %c40_151, %c0_152] : memref<4x64x32xf32, #tpu.memory_space<vmem>>, vector<1x8x32xf32>
    %246 = vector.shape_cast %245 : vector<1x8x32xf32> to vector<8x32xf32>
    %cst_153 = arith.constant dense<0.000000e+00> : vector<8x32xf32>
    %247 = tpu.matmul %236, %47, %cst_153 {dimension_numbers = #tpu.dot_dimension_numbers<[1], [0], [0], [1], [0, 0, 1, 1], [], []>} : vector<8x32xf32>, vector<32x32xf32>, vector<8x32xf32> -> vector<8x32xf32>
    %248 = arith.addf %246, %247 : vector<8x32xf32>
    %c3_154 = arith.constant 3 : index
    %c40_155 = arith.constant 40 : index
    %c0_156 = arith.constant 0 : index
    %249 = vector.load %arg5[%c3_154, %c40_155, %c0_156] : memref<4x64x32xf32, #tpu.memory_space<vmem>>, vector<1x8x32xf32>
    %250 = vector.shape_cast %249 : vector<1x8x32xf32> to vector<8x32xf32>
    %cst_157 = arith.constant dense<0.000000e+00> : vector<8x32xf32>
    %251 = tpu.matmul %236, %49, %cst_157 {dimension_numbers = #tpu.dot_dimension_numbers<[1], [0], [0], [1], [0, 0, 1, 1], [], []>} : vector<8x32xf32>, vector<32x32xf32>, vector<8x32xf32> -> vector<8x32xf32>
    %252 = arith.addf %250, %251 : vector<8x32xf32>
    %253 = arith.negf %240 : vector<8x32xf32>
    %254 = math.exp %253 : vector<8x32xf32>
    %cst_158 = arith.constant 1.000000e+00 : f32
    %255 = vector.broadcast %cst_158 : f32 to vector<8x32xf32>
    %256 = arith.addf %255, %254 : vector<8x32xf32>
    %257 = arith.divf %255, %256 : vector<8x32xf32>
    %258 = arith.negf %244 : vector<8x32xf32>
    %259 = math.exp %258 : vector<8x32xf32>
    %cst_159 = arith.constant 1.000000e+00 : f32
    %260 = vector.broadcast %cst_159 : f32 to vector<8x32xf32>
    %261 = arith.addf %260, %259 : vector<8x32xf32>
    %262 = arith.divf %260, %261 : vector<8x32xf32>
    %263 = arith.negf %252 : vector<8x32xf32>
    %264 = math.exp %263 : vector<8x32xf32>
    %cst_160 = arith.constant 1.000000e+00 : f32
    %265 = vector.broadcast %cst_160 : f32 to vector<8x32xf32>
    %266 = arith.addf %265, %264 : vector<8x32xf32>
    %267 = arith.divf %265, %266 : vector<8x32xf32>
    %268 = math.tanh %248 : vector<8x32xf32>
    %269 = arith.mulf %262, %234 : vector<8x32xf32>
    %270 = arith.mulf %257, %268 : vector<8x32xf32>
    %271 = arith.addf %269, %270 : vector<8x32xf32>
    %272 = math.tanh %271 : vector<8x32xf32>
    %273 = arith.mulf %267, %272 : vector<8x32xf32>
    %c0_161 = arith.constant 0 : index
    %c48 = arith.constant 48 : index
    %c0_162 = arith.constant 0 : index
    %274 = vector.load %arg5[%c0_161, %c48, %c0_162] : memref<4x64x32xf32, #tpu.memory_space<vmem>>, vector<1x8x32xf32>
    %275 = vector.shape_cast %274 : vector<1x8x32xf32> to vector<8x32xf32>
    %cst_163 = arith.constant dense<0.000000e+00> : vector<8x32xf32>
    %276 = tpu.matmul %273, %43, %cst_163 {dimension_numbers = #tpu.dot_dimension_numbers<[1], [0], [0], [1], [0, 0, 1, 1], [], []>} : vector<8x32xf32>, vector<32x32xf32>, vector<8x32xf32> -> vector<8x32xf32>
    %277 = arith.addf %275, %276 : vector<8x32xf32>
    %c1_164 = arith.constant 1 : index
    %c48_165 = arith.constant 48 : index
    %c0_166 = arith.constant 0 : index
    %278 = vector.load %arg5[%c1_164, %c48_165, %c0_166] : memref<4x64x32xf32, #tpu.memory_space<vmem>>, vector<1x8x32xf32>
    %279 = vector.shape_cast %278 : vector<1x8x32xf32> to vector<8x32xf32>
    %cst_167 = arith.constant dense<0.000000e+00> : vector<8x32xf32>
    %280 = tpu.matmul %273, %45, %cst_167 {dimension_numbers = #tpu.dot_dimension_numbers<[1], [0], [0], [1], [0, 0, 1, 1], [], []>} : vector<8x32xf32>, vector<32x32xf32>, vector<8x32xf32> -> vector<8x32xf32>
    %281 = arith.addf %279, %280 : vector<8x32xf32>
    %c2_168 = arith.constant 2 : index
    %c48_169 = arith.constant 48 : index
    %c0_170 = arith.constant 0 : index
    %282 = vector.load %arg5[%c2_168, %c48_169, %c0_170] : memref<4x64x32xf32, #tpu.memory_space<vmem>>, vector<1x8x32xf32>
    %283 = vector.shape_cast %282 : vector<1x8x32xf32> to vector<8x32xf32>
    %cst_171 = arith.constant dense<0.000000e+00> : vector<8x32xf32>
    %284 = tpu.matmul %273, %47, %cst_171 {dimension_numbers = #tpu.dot_dimension_numbers<[1], [0], [0], [1], [0, 0, 1, 1], [], []>} : vector<8x32xf32>, vector<32x32xf32>, vector<8x32xf32> -> vector<8x32xf32>
    %285 = arith.addf %283, %284 : vector<8x32xf32>
    %c3_172 = arith.constant 3 : index
    %c48_173 = arith.constant 48 : index
    %c0_174 = arith.constant 0 : index
    %286 = vector.load %arg5[%c3_172, %c48_173, %c0_174] : memref<4x64x32xf32, #tpu.memory_space<vmem>>, vector<1x8x32xf32>
    %287 = vector.shape_cast %286 : vector<1x8x32xf32> to vector<8x32xf32>
    %cst_175 = arith.constant dense<0.000000e+00> : vector<8x32xf32>
    %288 = tpu.matmul %273, %49, %cst_175 {dimension_numbers = #tpu.dot_dimension_numbers<[1], [0], [0], [1], [0, 0, 1, 1], [], []>} : vector<8x32xf32>, vector<32x32xf32>, vector<8x32xf32> -> vector<8x32xf32>
    %289 = arith.addf %287, %288 : vector<8x32xf32>
    %290 = arith.negf %277 : vector<8x32xf32>
    %291 = math.exp %290 : vector<8x32xf32>
    %cst_176 = arith.constant 1.000000e+00 : f32
    %292 = vector.broadcast %cst_176 : f32 to vector<8x32xf32>
    %293 = arith.addf %292, %291 : vector<8x32xf32>
    %294 = arith.divf %292, %293 : vector<8x32xf32>
    %295 = arith.negf %281 : vector<8x32xf32>
    %296 = math.exp %295 : vector<8x32xf32>
    %cst_177 = arith.constant 1.000000e+00 : f32
    %297 = vector.broadcast %cst_177 : f32 to vector<8x32xf32>
    %298 = arith.addf %297, %296 : vector<8x32xf32>
    %299 = arith.divf %297, %298 : vector<8x32xf32>
    %300 = arith.negf %289 : vector<8x32xf32>
    %301 = math.exp %300 : vector<8x32xf32>
    %cst_178 = arith.constant 1.000000e+00 : f32
    %302 = vector.broadcast %cst_178 : f32 to vector<8x32xf32>
    %303 = arith.addf %302, %301 : vector<8x32xf32>
    %304 = arith.divf %302, %303 : vector<8x32xf32>
    %305 = math.tanh %285 : vector<8x32xf32>
    %306 = arith.mulf %299, %271 : vector<8x32xf32>
    %307 = arith.mulf %294, %305 : vector<8x32xf32>
    %308 = arith.addf %306, %307 : vector<8x32xf32>
    %309 = math.tanh %308 : vector<8x32xf32>
    %310 = arith.mulf %304, %309 : vector<8x32xf32>
    %c0_179 = arith.constant 0 : index
    %c56 = arith.constant 56 : index
    %c0_180 = arith.constant 0 : index
    %311 = vector.load %arg5[%c0_179, %c56, %c0_180] : memref<4x64x32xf32, #tpu.memory_space<vmem>>, vector<1x8x32xf32>
    %312 = vector.shape_cast %311 : vector<1x8x32xf32> to vector<8x32xf32>
    %cst_181 = arith.constant dense<0.000000e+00> : vector<8x32xf32>
    %313 = tpu.matmul %310, %43, %cst_181 {dimension_numbers = #tpu.dot_dimension_numbers<[1], [0], [0], [1], [0, 0, 1, 1], [], []>} : vector<8x32xf32>, vector<32x32xf32>, vector<8x32xf32> -> vector<8x32xf32>
    %314 = arith.addf %312, %313 : vector<8x32xf32>
    %c1_182 = arith.constant 1 : index
    %c56_183 = arith.constant 56 : index
    %c0_184 = arith.constant 0 : index
    %315 = vector.load %arg5[%c1_182, %c56_183, %c0_184] : memref<4x64x32xf32, #tpu.memory_space<vmem>>, vector<1x8x32xf32>
    %316 = vector.shape_cast %315 : vector<1x8x32xf32> to vector<8x32xf32>
    %cst_185 = arith.constant dense<0.000000e+00> : vector<8x32xf32>
    %317 = tpu.matmul %310, %45, %cst_185 {dimension_numbers = #tpu.dot_dimension_numbers<[1], [0], [0], [1], [0, 0, 1, 1], [], []>} : vector<8x32xf32>, vector<32x32xf32>, vector<8x32xf32> -> vector<8x32xf32>
    %318 = arith.addf %316, %317 : vector<8x32xf32>
    %c2_186 = arith.constant 2 : index
    %c56_187 = arith.constant 56 : index
    %c0_188 = arith.constant 0 : index
    %319 = vector.load %arg5[%c2_186, %c56_187, %c0_188] : memref<4x64x32xf32, #tpu.memory_space<vmem>>, vector<1x8x32xf32>
    %320 = vector.shape_cast %319 : vector<1x8x32xf32> to vector<8x32xf32>
    %cst_189 = arith.constant dense<0.000000e+00> : vector<8x32xf32>
    %321 = tpu.matmul %310, %47, %cst_189 {dimension_numbers = #tpu.dot_dimension_numbers<[1], [0], [0], [1], [0, 0, 1, 1], [], []>} : vector<8x32xf32>, vector<32x32xf32>, vector<8x32xf32> -> vector<8x32xf32>
    %322 = arith.addf %320, %321 : vector<8x32xf32>
    %c3_190 = arith.constant 3 : index
    %c56_191 = arith.constant 56 : index
    %c0_192 = arith.constant 0 : index
    %323 = vector.load %arg5[%c3_190, %c56_191, %c0_192] : memref<4x64x32xf32, #tpu.memory_space<vmem>>, vector<1x8x32xf32>
    %324 = vector.shape_cast %323 : vector<1x8x32xf32> to vector<8x32xf32>
    %cst_193 = arith.constant dense<0.000000e+00> : vector<8x32xf32>
    %325 = tpu.matmul %310, %49, %cst_193 {dimension_numbers = #tpu.dot_dimension_numbers<[1], [0], [0], [1], [0, 0, 1, 1], [], []>} : vector<8x32xf32>, vector<32x32xf32>, vector<8x32xf32> -> vector<8x32xf32>
    %326 = arith.addf %324, %325 : vector<8x32xf32>
    %327 = arith.negf %314 : vector<8x32xf32>
    %328 = math.exp %327 : vector<8x32xf32>
    %cst_194 = arith.constant 1.000000e+00 : f32
    %329 = vector.broadcast %cst_194 : f32 to vector<8x32xf32>
    %330 = arith.addf %329, %328 : vector<8x32xf32>
    %331 = arith.divf %329, %330 : vector<8x32xf32>
    %332 = arith.negf %318 : vector<8x32xf32>
    %333 = math.exp %332 : vector<8x32xf32>
    %cst_195 = arith.constant 1.000000e+00 : f32
    %334 = vector.broadcast %cst_195 : f32 to vector<8x32xf32>
    %335 = arith.addf %334, %333 : vector<8x32xf32>
    %336 = arith.divf %334, %335 : vector<8x32xf32>
    %337 = arith.negf %326 : vector<8x32xf32>
    %338 = math.exp %337 : vector<8x32xf32>
    %cst_196 = arith.constant 1.000000e+00 : f32
    %339 = vector.broadcast %cst_196 : f32 to vector<8x32xf32>
    %340 = arith.addf %339, %338 : vector<8x32xf32>
    %341 = arith.divf %339, %340 : vector<8x32xf32>
    %342 = math.tanh %322 : vector<8x32xf32>
    %343 = arith.mulf %336, %308 : vector<8x32xf32>
    %344 = arith.mulf %331, %342 : vector<8x32xf32>
    %345 = arith.addf %343, %344 : vector<8x32xf32>
    %346 = math.tanh %345 : vector<8x32xf32>
    %347 = arith.mulf %341, %346 : vector<8x32xf32>
    %c0_197 = arith.constant 0 : index
    %c0_198 = arith.constant 0 : index
    %348 = vector.load %arg3[%c0_197, %c0_198] : memref<176x128xf32, #tpu.memory_space<vmem>>, vector<32x128xf32>
    %c32_199 = arith.constant 32 : index
    %c0_200 = arith.constant 0 : index
    %349 = vector.load %arg3[%c32_199, %c0_200] : memref<176x128xf32, #tpu.memory_space<vmem>>, vector<128x128xf32>
    %c160 = arith.constant 160 : index
    %c0_201 = arith.constant 0 : index
    %350 = vector.load %arg3[%c160, %c0_201] : memref<176x128xf32, #tpu.memory_space<vmem>>, vector<1x128xf32>
    %c168 = arith.constant 168 : index
    %c0_202 = arith.constant 0 : index
    %351 = vector.load %arg3[%c168, %c0_202] : memref<176x128xf32, #tpu.memory_space<vmem>>, vector<1x128xf32>
    %cst_203 = arith.constant dense<0.000000e+00> : vector<8x128xf32>
    %352 = tpu.matmul %347, %348, %cst_203 {dimension_numbers = #tpu.dot_dimension_numbers<[1], [0], [0], [1], [0, 0, 1, 1], [], []>} : vector<8x32xf32>, vector<32x128xf32>, vector<8x128xf32> -> vector<8x128xf32>
    %353 = vector.broadcast %350 : vector<1x128xf32> to vector<8x128xf32>
    %354 = arith.addf %352, %353 : vector<8x128xf32>
    %cst_204 = arith.constant 0.000000e+00 : f32
    %355 = vector.broadcast %cst_204 : f32 to vector<8x128xf32>
    %356 = arith.maximumf %354, %355 : vector<8x128xf32>
    %cst_205 = arith.constant dense<0.000000e+00> : vector<8x128xf32>
    %357 = tpu.matmul %356, %349, %cst_205 {dimension_numbers = #tpu.dot_dimension_numbers<[1], [0], [0], [1], [0, 0, 1, 1], [], []>} : vector<8x128xf32>, vector<128x128xf32>, vector<8x128xf32> -> vector<8x128xf32>
    %358 = vector.broadcast %351 : vector<1x128xf32> to vector<8x128xf32>
    %359 = arith.addf %357, %358 : vector<8x128xf32>
    %c0_206 = arith.constant 0 : index
    %c0_207 = arith.constant 0 : index
    %360 = vector.load %arg4[%c0_206, %c0_207] : memref<8x128xf32, #tpu.memory_space<vmem>>, vector<8x128xf32>
    tpu.vector_store %arg4[%c0_206, %c0_207], %359 {strides = array<i32>} : memref<8x128xf32, #tpu.memory_space<vmem>>, vector<8x128xf32>,
    return
  }
  func.func @transform_0(%arg0: i32) -> (i32, i32, i32) {
    %c0_i32 = arith.constant 0 : i32
    %c0_i32_0 = arith.constant 0 : i32
    %c0_i32_1 = arith.constant 0 : i32
    return %arg0, %c0_i32, %c0_i32_0 : i32, i32, i32
  }
  func.func @transform_1(%arg0: i32) -> (i32, i32, i32) {
    %c0_i32 = arith.constant 0 : i32
    %c0_i32_0 = arith.constant 0 : i32
    %c0_i32_1 = arith.constant 0 : i32
    %c0_i32_2 = arith.constant 0 : i32
    return %c0_i32, %c0_i32_0, %c0_i32_1 : i32, i32, i32
  }
  func.func @transform_2(%arg0: i32) -> (i32, i32) {
    %c0_i32 = arith.constant 0 : i32
    %c0_i32_0 = arith.constant 0 : i32
    %c0_i32_1 = arith.constant 0 : i32
    return %c0_i32, %c0_i32_0 : i32, i32
  }
  func.func @transform_3(%arg0: i32) -> (i32, i32) {
    %c0_i32 = arith.constant 0 : i32
    %c0_i32_0 = arith.constant 0 : i32
    return %arg0, %c0_i32 : i32, i32
  }
}

</mosaic_0001>

<llo_original>
// kernel: hybrid_lstm_forward.1
$region0: #{hybrid_lstm_forward.1}
  #allocation0 [shape = 'u32[]', space=smem, size = 0x4, offset = 0x4, fixed_abs, tag = 'smem constant byte address 0x4 - core index']
  #allocation1 [shape = 'u32[144,128]{1,0:T(1,128)}', space=vmem, size = 0x12000, scoped, tag = 'internal scratch']
  #allocation2 [shape = 'f32[4,64,32]{2,1,0:T(8,128)}', space=vmem, size = 0x20000, scoped, tag = 'scratch operand']
  %s0 = inlined_call_operand.vmem [shape: f32[1,64,4], index: 0, kind: input, shape index: {}]
  %s1 = inlined_call_operand.vmem [shape: f32[4,48,32], index: 1, kind: input, shape index: {}]
  %s2 = inlined_call_operand.vmem [shape: f32[176,128], index: 2, kind: input, shape index: {}]
  %s3 = inlined_call_operand.vmem [shape: f32[8,128], index: 3, kind: output, shape index: {}]
  %s4 = sld [smem:[#allocation0]]
  $region22: #{hybrid_lstm_forward.1} parent=0
    _
  %s6 = ssub.s32 1, %s4
  %s7 = scalar_select 0, %s6, %s4
  // Predicated region
  $region2: #{hybrid_lstm_forward.1} parent=0 // pred_check
    _
  $region3: #{hybrid_lstm_forward.1} parent=0 // pred_check_branch
    %9 = sbr.rel (0) target = $region5
  $region4: #{hybrid_lstm_forward.1} parent=0 // pred_region
    _
  $region5: #{hybrid_lstm_forward.1} parent=0 // pred_fallthru
    _
  // Predicated region
  $region6: #{hybrid_lstm_forward.1} parent=0 // pred_check
    _
  $region7: #{hybrid_lstm_forward.1} parent=0 // pred_check_branch
    %11 = sbr.rel (0) target = $region9
  $region8: #{hybrid_lstm_forward.1} parent=0 // pred_region
    _
  $region9: #{hybrid_lstm_forward.1} parent=0 // pred_fallthru
    _
  // Predicated region
  $region10: #{hybrid_lstm_forward.1} parent=0 // pred_check
    _
  $region11: #{hybrid_lstm_forward.1} parent=0 // pred_check_branch
    %13 = sbr.rel (0) target = $region13
  $region12: #{hybrid_lstm_forward.1} parent=0 // pred_region
    _
  $region13: #{hybrid_lstm_forward.1} parent=0 // pred_fallthru
    _
  %v14 = vld [vmem:[%s0] sm:$0xff]
  %v15 = vld [vmem:[%s0 + $0x8] sm:$0xff]
  %v16 = vld [vmem:[%s0 + $0x10] sm:$0xff]
  %v17 = vld [vmem:[%s0 + $0x18] sm:$0xff]
  %v18 = vld [vmem:[%s0 + $0x20] sm:$0xff]
  %v19 = vld [vmem:[%s0 + $0x28] sm:$0xff]
  %v20 = vld [vmem:[%s0 + $0x30] sm:$0xff]
  %v21 = vld [vmem:[%s0 + $0x38] sm:$0xff]
  %v22 = vld [vmem:[%s1] sm:$0xf]
  %v23 = vld [vmem:[%s1 + $0x28] sm:$0x1]
  %v24 = vlaneseq
  %v25 = vshrl.u32 %v24, 7
  %v26 = vsub.s32 0, %v25
  %v27 = vrot.slane %v23, %v26
  %vm28 = vcmask 31744
  %v30 = vsel %vm28, %v14, 0
  %v33 = vsel %vm28, %v15, 0
  %v36 = vsel %vm28, %v16, 0
  %v39 = vsel %vm28, %v17, 0
  %v42 = vsel %vm28, %v18, 0
  %v45 = vsel %vm28, %v19, 0
  %v48 = vsel %vm28, %v20, 0
  %v51 = vsel %vm28, %v21, 0
  %vm53 = vcmask 1043456
  %v55 = vsel %vm53, %v22, 0
  %57 = vmatprep.subr.mxu0 0.0
  %58 = vmatpush1.msra.mxu0 0.0
  %59 = vmatprep.subr.mxu0 0.0
  %60 = vmatpush1.msra.mxu0 0.0
  %61 = vmatprep.subr.mxu0 0.0
  %62 = vmatpush1.msra.mxu0 0.0
  %63 = vmatprep.subr.mxu0 0.0
  %64 = vmatpush1.msra.mxu0 0.0
  %65 = vmatprep.subr.mxu0 0.0
  %66 = vmatpush1.msra.mxu0 0.0
  %67 = vmatprep.subr.mxu0 0.0
  %68 = vmatpush1.msra.mxu0 0.0
  %69 = vmatprep.subr.mxu0 0.0
  %70 = vmatpush1.msra.mxu0 0.0
  %71 = vmatprep.subr.mxu0 0.0
  %72 = vmatpush1.msra.mxu0 0.0
  %73 = vmatprep.subr.mxu0 0.0
  %74 = vmatpush1.msra.mxu0 0.0
  %75 = vmatprep.subr.mxu0 0.0
  %76 = vmatpush1.msra.mxu0 0.0
  %77 = vmatprep.subr.mxu0 0.0
  %78 = vmatpush1.msra.mxu0 0.0
  %79 = vmatprep.subr.mxu0 0.0
  %80 = vmatpush1.msra.mxu0 0.0
  %81 = vmatprep.subr.mxu0 0.0
  %82 = vmatpush1.msra.mxu0 0.0
  %83 = vmatprep.subr.mxu0 0.0
  %84 = vmatpush1.msra.mxu0 0.0
  %85 = vmatprep.subr.mxu0 0.0
  %86 = vmatpush1.msra.mxu0 0.0
  %87 = vmatprep.subr.mxu0 0.0
  %88 = vmatpush1.msra.mxu0 %v55
  %89 = vmatprep.subr.mxu0 0.0
  %90 = vmatpush2.msra.mxu0 0.0
  %91 = vmatprep.subr.mxu0 0.0
  %92 = vmatpush2.msra.mxu0 0.0
  %93 = vmatprep.subr.mxu0 0.0
  %94 = vmatpush2.msra.mxu0 0.0
  %95 = vmatprep.subr.mxu0 0.0
  %96 = vmatpush2.msra.mxu0 0.0
  %97 = vmatprep.subr.mxu0 0.0
  %98 = vmatpush2.msra.mxu0 0.0
  %99 = vmatprep.subr.mxu0 0.0
  %100 = vmatpush2.msra.mxu0 0.0
  %101 = vmatprep.subr.mxu0 0.0
  %102 = vmatpush2.msra.mxu0 0.0
  %103 = vmatprep.subr.mxu0 0.0
  %104 = vmatpush2.msra.mxu0 0.0
  %105 = vmatprep.subr.mxu0 0.0
  %106 = vmatpush2.msra.mxu0 0.0
  %107 = vmatprep.subr.mxu0 0.0
  %108 = vmatpush2.msra.mxu0 0.0
  %109 = vmatprep.subr.mxu0 0.0
  %110 = vmatpush2.msra.mxu0 0.0
  %111 = vmatprep.subr.mxu0 0.0
  %112 = vmatpush2.msra.mxu0 0.0
  %113 = vmatprep.subr.mxu0 0.0
  %114 = vmatpush2.msra.mxu0 0.0
  %115 = vmatprep.subr.mxu0 0.0
  %116 = vmatpush2.msra.mxu0 0.0
  %117 = vmatprep.subr.mxu0 0.0
  %118 = vmatpush2.msra.mxu0 0.0
  %119 = vmatprep.subr.mxu0 0.0
  %120 = vmatpush2.msra.mxu0 0.0
  %121 = vmatprep.mubr.f32.mxu0 0.0
  %122 = vmatmul.mubr.f32.gmra.mxu0 %v30
  %v123 = vpop.f32.mrf.mxu0
  %v124 = vadd.f32 %v27, %v123
  %v125 = vpop.f32.mrf.mxu0
  %126 = vmatprep.mubr.f32.mxu0 0.0
  %127 = vmatmul.mubr.f32.gmra.mxu0 %v33
  %v128 = vpop.f32.mrf.mxu0
  %v129 = vadd.f32 %v27, %v128
  %v130 = vpop.f32.mrf.mxu0
  %131 = vmatprep.mubr.f32.mxu0 0.0
  %132 = vmatmul.mubr.f32.gmra.mxu0 %v36
  %v133 = vpop.f32.mrf.mxu0
  %v134 = vadd.f32 %v27, %v133
  %v135 = vpop.f32.mrf.mxu0
  %136 = vmatprep.mubr.f32.mxu0 0.0
  %137 = vmatmul.mubr.f32.gmra.mxu0 %v39
  %v138 = vpop.f32.mrf.mxu0
  %v139 = vadd.f32 %v27, %v138
  %v140 = vpop.f32.mrf.mxu0
  %141 = vmatprep.mubr.f32.mxu0 0.0
  %142 = vmatmul.mubr.f32.gmra.mxu0 %v42
  %v143 = vpop.f32.mrf.mxu0
  %v144 = vadd.f32 %v27, %v143
  %v145 = vpop.f32.mrf.mxu0
  %146 = vmatprep.mubr.f32.mxu0 0.0
  %147 = vmatmul.mubr.f32.gmra.mxu0 %v45
  %v148 = vpop.f32.mrf.mxu0
  %v149 = vadd.f32 %v27, %v148
  %v150 = vpop.f32.mrf.mxu0
  %151 = vmatprep.mubr.f32.mxu0 0.0
  %152 = vmatmul.mubr.f32.gmra.mxu0 %v48
  %v153 = vpop.f32.mrf.mxu0
  %v154 = vadd.f32 %v27, %v153
  %v155 = vpop.f32.mrf.mxu0
  %156 = vmatprep.mubr.f32.mxu0 0.0
  %157 = vmatmul.mubr.f32.gmra.mxu0 %v51
  %v158 = vpop.f32.mrf.mxu0
  %v159 = vadd.f32 %v27, %v158
  %v160 = vpop.f32.mrf.mxu0
  %161 = vdwg.mxu0
  %vm162 = vcmask 261120
  %163 = vst.msk [vmem:[#allocation2] sm:$0xff] %vm162, %v124
  %164 = vst.msk [vmem:[#allocation2 + $0x8] sm:$0xff] %vm162, %v129
  %165 = vst.msk [vmem:[#allocation2 + $0x10] sm:$0xff] %vm162, %v134
  %166 = vst.msk [vmem:[#allocation2 + $0x18] sm:$0xff] %vm162, %v139
  %167 = vst.msk [vmem:[#allocation2 + $0x20] sm:$0xff] %vm162, %v144
  %168 = vst.msk [vmem:[#allocation2 + $0x28] sm:$0xff] %vm162, %v149
  %169 = vst.msk [vmem:[#allocation2 + $0x30] sm:$0xff] %vm162, %v154
  %170 = vst.msk [vmem:[#allocation2 + $0x38] sm:$0xff] %vm162, %v159
  %s171 = scalar_lea.vmem %s1, 48
  %v172 = vld [vmem:[%s171] sm:$0xf]
  %v173 = vld [vmem:[%s171 + $0x28] sm:$0x1]
  %v174 = vlaneseq
  %v175 = vshrl.u32 %v174, 7
  %v176 = vsub.s32 0, %v175
  %v177 = vrot.slane %v173, %v176
  %v179 = vsel %vm53, %v172, 0
  %181 = vmatprep.subr.mxu0 0.0
  %182 = vmatpush1.msra.mxu0 0.0
  %183 = vmatprep.subr.mxu0 0.0
  %184 = vmatpush1.msra.mxu0 0.0
  %185 = vmatprep.subr.mxu0 0.0
  %186 = vmatpush1.msra.mxu0 0.0
  %187 = vmatprep.subr.mxu0 0.0
  %188 = vmatpush1.msra.mxu0 0.0
  %189 = vmatprep.subr.mxu0 0.0
  %190 = vmatpush1.msra.mxu0 0.0
  %191 = vmatprep.subr.mxu0 0.0
  %192 = vmatpush1.msra.mxu0 0.0
  %193 = vmatprep.subr.mxu0 0.0
  %194 = vmatpush1.msra.mxu0 0.0
  %195 = vmatprep.subr.mxu0 0.0
  %196 = vmatpush1.msra.mxu0 0.0
  %197 = vmatprep.subr.mxu0 0.0
  %198 = vmatpush1.msra.mxu0 0.0
  %199 = vmatprep.subr.mxu0 0.0
  %200 = vmatpush1.msra.mxu0 0.0
  %201 = vmatprep.subr.mxu0 0.0
  %202 = vmatpush1.msra.mxu0 0.0
  %203 = vmatprep.subr.mxu0 0.0
  %204 = vmatpush1.msra.mxu0 0.0
  %205 = vmatprep.subr.mxu0 0.0
  %206 = vmatpush1.msra.mxu0 0.0
  %207 = vmatprep.subr.mxu0 0.0
  %208 = vmatpush1.msra.mxu0 0.0
  %209 = vmatprep.subr.mxu0 0.0
  %210 = vmatpush1.msra.mxu0 0.0
  %211 = vmatprep.subr.mxu0 0.0
  %212 = vmatpush1.msra.mxu0 %v179
  %213 = vmatprep.subr.mxu0 0.0
  %214 = vmatpush2.msra.mxu0 0.0
  %215 = vmatprep.subr.mxu0 0.0
  %216 = vmatpush2.msra.mxu0 0.0
  %217 = vmatprep.subr.mxu0 0.0
  %218 = vmatpush2.msra.mxu0 0.0
  %219 = vmatprep.subr.mxu0 0.0
  %220 = vmatpush2.msra.mxu0 0.0
  %221 = vmatprep.subr.mxu0 0.0
  %222 = vmatpush2.msra.mxu0 0.0
  %223 = vmatprep.subr.mxu0 0.0
  %224 = vmatpush2.msra.mxu0 0.0
  %225 = vmatprep.subr.mxu0 0.0
  %226 = vmatpush2.msra.mxu0 0.0
  %227 = vmatprep.subr.mxu0 0.0
  %228 = vmatpush2.msra.mxu0 0.0
  %229 = vmatprep.subr.mxu0 0.0
  %230 = vmatpush2.msra.mxu0 0.0
  %231 = vmatprep.subr.mxu0 0.0
  %232 = vmatpush2.msra.mxu0 0.0
  %233 = vmatprep.subr.mxu0 0.0
  %234 = vmatpush2.msra.mxu0 0.0
  %235 = vmatprep.subr.mxu0 0.0
  %236 = vmatpush2.msra.mxu0 0.0
  %237 = vmatprep.subr.mxu0 0.0
  %238 = vmatpush2.msra.mxu0 0.0
  %239 = vmatprep.subr.mxu0 0.0
  %240 = vmatpush2.msra.mxu0 0.0
  %241 = vmatprep.subr.mxu0 0.0
  %242 = vmatpush2.msra.mxu0 0.0
  %243 = vmatprep.subr.mxu0 0.0
  %244 = vmatpush2.msra.mxu0 0.0
  %245 = vmatprep.mubr.f32.mxu0 0.0
  %246 = vmatmul.mubr.f32.gmra.mxu0 %v30
  %v247 = vpop.f32.mrf.mxu0
  %v248 = vadd.f32 %v177, %v247
  %v249 = vpop.f32.mrf.mxu0
  %250 = vmatprep.mubr.f32.mxu0 0.0
  %251 = vmatmul.mubr.f32.gmra.mxu0 %v33
  %v252 = vpop.f32.mrf.mxu0
  %v253 = vadd.f32 %v177, %v252
  %v254 = vpop.f32.mrf.mxu0
  %255 = vmatprep.mubr.f32.mxu0 0.0
  %256 = vmatmul.mubr.f32.gmra.mxu0 %v36
  %v257 = vpop.f32.mrf.mxu0
  %v258 = vadd.f32 %v177, %v257
  %v259 = vpop.f32.mrf.mxu0
  %260 = vmatprep.mubr.f32.mxu0 0.0
  %261 = vmatmul.mubr.f32.gmra.mxu0 %v39
  %v262 = vpop.f32.mrf.mxu0
  %v263 = vadd.f32 %v177, %v262
  %v264 = vpop.f32.mrf.mxu0
  %265 = vmatprep.mubr.f32.mxu0 0.0
  %266 = vmatmul.mubr.f32.gmra.mxu0 %v42
  %v267 = vpop.f32.mrf.mxu0
  %v268 = vadd.f32 %v177, %v267
  %v269 = vpop.f32.mrf.mxu0
  %270 = vmatprep.mubr.f32.mxu0 0.0
  %271 = vmatmul.mubr.f32.gmra.mxu0 %v45
  %v272 = vpop.f32.mrf.mxu0
  %v273 = vadd.f32 %v177, %v272
  %v274 = vpop.f32.mrf.mxu0
  %275 = vmatprep.mubr.f32.mxu0 0.0
  %276 = vmatmul.mubr.f32.gmra.mxu0 %v48
  %v277 = vpop.f32.mrf.mxu0
  %v278 = vadd.f32 %v177, %v277
  %v279 = vpop.f32.mrf.mxu0
  %280 = vmatprep.mubr.f32.mxu0 0.0
  %281 = vmatmul.mubr.f32.gmra.mxu0 %v51
  %v282 = vpop.f32.mrf.mxu0
  %v283 = vadd.f32 %v177, %v282
  %v284 = vpop.f32.mrf.mxu0
  %285 = vdwg.mxu0
  %s286 = scalar_lea.vmem [#allocation2], 64
  %287 = vst.msk [vmem:[%s286] sm:$0xff] %vm162, %v248
  %288 = vst.msk [vmem:[%s286 + $0x8] sm:$0xff] %vm162, %v253
  %289 = vst.msk [vmem:[%s286 + $0x10] sm:$0xff] %vm162, %v258
  %290 = vst.msk [vmem:[%s286 + $0x18] sm:$0xff] %vm162, %v263
  %291 = vst.msk [vmem:[%s286 + $0x20] sm:$0xff] %vm162, %v268
  %292 = vst.msk [vmem:[%s286 + $0x28] sm:$0xff] %vm162, %v273
  %293 = vst.msk [vmem:[%s286 + $0x30] sm:$0xff] %vm162, %v278
  %294 = vst.msk [vmem:[%s286 + $0x38] sm:$0xff] %vm162, %v283
  %s295 = scalar_lea.vmem %s1, 96
  %v296 = vld [vmem:[%s295] sm:$0xf]
  %v297 = vld [vmem:[%s295 + $0x28] sm:$0x1]
  %v298 = vlaneseq
  %v299 = vshrl.u32 %v298, 7
  %v300 = vsub.s32 0, %v299
  %v301 = vrot.slane %v297, %v300
  %v303 = vsel %vm53, %v296, 0
  %305 = vmatprep.subr.mxu0 0.0
  %306 = vmatpush1.msra.mxu0 0.0
  %307 = vmatprep.subr.mxu0 0.0
  %308 = vmatpush1.msra.mxu0 0.0
  %309 = vmatprep.subr.mxu0 0.0
  %310 = vmatpush1.msra.mxu0 0.0
  %311 = vmatprep.subr.mxu0 0.0
  %312 = vmatpush1.msra.mxu0 0.0
  %313 = vmatprep.subr.mxu0 0.0
  %314 = vmatpush1.msra.mxu0 0.0
  %315 = vmatprep.subr.mxu0 0.0
  %316 = vmatpush1.msra.mxu0 0.0
  %317 = vmatprep.subr.mxu0 0.0
  %318 = vmatpush1.msra.mxu0 0.0
  %319 = vmatprep.subr.mxu0 0.0
  %320 = vmatpush1.msra.mxu0 0.0
  %321 = vmatprep.subr.mxu0 0.0
  %322 = vmatpush1.msra.mxu0 0.0
  %323 = vmatprep.subr.mxu0 0.0
  %324 = vmatpush1.msra.mxu0 0.0
  %325 = vmatprep.subr.mxu0 0.0
  %326 = vmatpush1.msra.mxu0 0.0
  %327 = vmatprep.subr.mxu0 0.0
  %328 = vmatpush1.msra.mxu0 0.0
  %329 = vmatprep.subr.mxu0 0.0
  %330 = vmatpush1.msra.mxu0 0.0
  %331 = vmatprep.subr.mxu0 0.0
  %332 = vmatpush1.msra.mxu0 0.0
  %333 = vmatprep.subr.mxu0 0.0
  %334 = vmatpush1.msra.mxu0 0.0
  %335 = vmatprep.subr.mxu0 0.0
  %336 = vmatpush1.msra.mxu0 %v303
  %337 = vmatprep.subr.mxu0 0.0
  %338 = vmatpush2.msra.mxu0 0.0
  %339 = vmatprep.subr.mxu0 0.0
  %340 = vmatpush2.msra.mxu0 0.0
  %341 = vmatprep.subr.mxu0 0.0
  %342 = vmatpush2.msra.mxu0 0.0
  %343 = vmatprep.subr.mxu0 0.0
  %344 = vmatpush2.msra.mxu0 0.0
  %345 = vmatprep.subr.mxu0 0.0
  %346 = vmatpush2.msra.mxu0 0.0
  %347 = vmatprep.subr.mxu0 0.0
  %348 = vmatpush2.msra.mxu0 0.0
  %349 = vmatprep.subr.mxu0 0.0
  %350 = vmatpush2.msra.mxu0 0.0
  %351 = vmatprep.subr.mxu0 0.0
  %352 = vmatpush2.msra.mxu0 0.0
  %353 = vmatprep.subr.mxu0 0.0
  %354 = vmatpush2.msra.mxu0 0.0
  %355 = vmatprep.subr.mxu0 0.0
  %356 = vmatpush2.msra.mxu0 0.0
  %357 = vmatprep.subr.mxu0 0.0
  %358 = vmatpush2.msra.mxu0 0.0
  %359 = vmatprep.subr.mxu0 0.0
  %360 = vmatpush2.msra.mxu0 0.0
  %361 = vmatprep.subr.mxu0 0.0
  %362 = vmatpush2.msra.mxu0 0.0
  %363 = vmatprep.subr.mxu0 0.0
  %364 = vmatpush2.msra.mxu0 0.0
  %365 = vmatprep.subr.mxu0 0.0
  %366 = vmatpush2.msra.mxu0 0.0
  %367 = vmatprep.subr.mxu0 0.0
  %368 = vmatpush2.msra.mxu0 0.0
  %369 = vmatprep.mubr.f32.mxu0 0.0
  %370 = vmatmul.mubr.f32.gmra.mxu0 %v30
  %v371 = vpop.f32.mrf.mxu0
  %v372 = vadd.f32 %v301, %v371
  %v373 = vpop.f32.mrf.mxu0
  %374 = vmatprep.mubr.f32.mxu0 0.0
  %375 = vmatmul.mubr.f32.gmra.mxu0 %v33
  %v376 = vpop.f32.mrf.mxu0
  %v377 = vadd.f32 %v301, %v376
  %v378 = vpop.f32.mrf.mxu0
  %379 = vmatprep.mubr.f32.mxu0 0.0
  %380 = vmatmul.mubr.f32.gmra.mxu0 %v36
  %v381 = vpop.f32.mrf.mxu0
  %v382 = vadd.f32 %v301, %v381
  %v383 = vpop.f32.mrf.mxu0
  %384 = vmatprep.mubr.f32.mxu0 0.0
  %385 = vmatmul.mubr.f32.gmra.mxu0 %v39
  %v386 = vpop.f32.mrf.mxu0
  %v387 = vadd.f32 %v301, %v386
  %v388 = vpop.f32.mrf.mxu0
  %389 = vmatprep.mubr.f32.mxu0 0.0
  %390 = vmatmul.mubr.f32.gmra.mxu0 %v42
  %v391 = vpop.f32.mrf.mxu0
  %v392 = vadd.f32 %v301, %v391
  %v393 = vpop.f32.mrf.mxu0
  %394 = vmatprep.mubr.f32.mxu0 0.0
  %395 = vmatmul.mubr.f32.gmra.mxu0 %v45
  %v396 = vpop.f32.mrf.mxu0
  %v397 = vadd.f32 %v301, %v396
  %v398 = vpop.f32.mrf.mxu0
  %399 = vmatprep.mubr.f32.mxu0 0.0
  %400 = vmatmul.mubr.f32.gmra.mxu0 %v48
  %v401 = vpop.f32.mrf.mxu0
  %v402 = vadd.f32 %v301, %v401
  %v403 = vpop.f32.mrf.mxu0
  %404 = vmatprep.mubr.f32.mxu0 0.0
  %405 = vmatmul.mubr.f32.gmra.mxu0 %v51
  %v406 = vpop.f32.mrf.mxu0
  %v407 = vadd.f32 %v301, %v406
  %v408 = vpop.f32.mrf.mxu0
  %409 = vdwg.mxu0
  %s410 = scalar_lea.vmem [#allocation2], 128
  %411 = vst.msk [vmem:[%s410] sm:$0xff] %vm162, %v372
  %412 = vst.msk [vmem:[%s410 + $0x8] sm:$0xff] %vm162, %v377
  %413 = vst.msk [vmem:[%s410 + $0x10] sm:$0xff] %vm162, %v382
  %414 = vst.msk [vmem:[%s410 + $0x18] sm:$0xff] %vm162, %v387
  %415 = vst.msk [vmem:[%s410 + $0x20] sm:$0xff] %vm162, %v392
  %416 = vst.msk [vmem:[%s410 + $0x28] sm:$0xff] %vm162, %v397
  %417 = vst.msk [vmem:[%s410 + $0x30] sm:$0xff] %vm162, %v402
  %418 = vst.msk [vmem:[%s410 + $0x38] sm:$0xff] %vm162, %v407
  %s419 = scalar_lea.vmem %s1, 144
  %v420 = vld [vmem:[%s419] sm:$0xf]
  %v421 = vld [vmem:[%s419 + $0x28] sm:$0x1]
  %v422 = vlaneseq
  %v423 = vshrl.u32 %v422, 7
  %v424 = vsub.s32 0, %v423
  %v425 = vrot.slane %v421, %v424
  %v427 = vsel %vm53, %v420, 0
  %429 = vmatprep.subr.mxu0 0.0
  %430 = vmatpush1.msra.mxu0 0.0
  %431 = vmatprep.subr.mxu0 0.0
  %432 = vmatpush1.msra.mxu0 0.0
  %433 = vmatprep.subr.mxu0 0.0
  %434 = vmatpush1.msra.mxu0 0.0
  %435 = vmatprep.subr.mxu0 0.0
  %436 = vmatpush1.msra.mxu0 0.0
  %437 = vmatprep.subr.mxu0 0.0
  %438 = vmatpush1.msra.mxu0 0.0
  %439 = vmatprep.subr.mxu0 0.0
  %440 = vmatpush1.msra.mxu0 0.0
  %441 = vmatprep.subr.mxu0 0.0
  %442 = vmatpush1.msra.mxu0 0.0
  %443 = vmatprep.subr.mxu0 0.0
  %444 = vmatpush1.msra.mxu0 0.0
  %445 = vmatprep.subr.mxu0 0.0
  %446 = vmatpush1.msra.mxu0 0.0
  %447 = vmatprep.subr.mxu0 0.0
  %448 = vmatpush1.msra.mxu0 0.0
  %449 = vmatprep.subr.mxu0 0.0
  %450 = vmatpush1.msra.mxu0 0.0
  %451 = vmatprep.subr.mxu0 0.0
  %452 = vmatpush1.msra.mxu0 0.0
  %453 = vmatprep.subr.mxu0 0.0
  %454 = vmatpush1.msra.mxu0 0.0
  %455 = vmatprep.subr.mxu0 0.0
  %456 = vmatpush1.msra.mxu0 0.0
  %457 = vmatprep.subr.mxu0 0.0
  %458 = vmatpush1.msra.mxu0 0.0
  %459 = vmatprep.subr.mxu0 0.0
  %460 = vmatpush1.msra.mxu0 %v427
  %461 = vmatprep.subr.mxu0 0.0
  %462 = vmatpush2.msra.mxu0 0.0
  %463 = vmatprep.subr.mxu0 0.0
  %464 = vmatpush2.msra.mxu0 0.0
  %465 = vmatprep.subr.mxu0 0.0
  %466 = vmatpush2.msra.mxu0 0.0
  %467 = vmatprep.subr.mxu0 0.0
  %468 = vmatpush2.msra.mxu0 0.0
  %469 = vmatprep.subr.mxu0 0.0
  %470 = vmatpush2.msra.mxu0 0.0
  %471 = vmatprep.subr.mxu0 0.0
  %472 = vmatpush2.msra.mxu0 0.0
  %473 = vmatprep.subr.mxu0 0.0
  %474 = vmatpush2.msra.mxu0 0.0
  %475 = vmatprep.subr.mxu0 0.0
  %476 = vmatpush2.msra.mxu0 0.0
  %477 = vmatprep.subr.mxu0 0.0
  %478 = vmatpush2.msra.mxu0 0.0
  %479 = vmatprep.subr.mxu0 0.0
  %480 = vmatpush2.msra.mxu0 0.0
  %481 = vmatprep.subr.mxu0 0.0
  %482 = vmatpush2.msra.mxu0 0.0
  %483 = vmatprep.subr.mxu0 0.0
  %484 = vmatpush2.msra.mxu0 0.0
  %485 = vmatprep.subr.mxu0 0.0
  %486 = vmatpush2.msra.mxu0 0.0
  %487 = vmatprep.subr.mxu0 0.0
  %488 = vmatpush2.msra.mxu0 0.0
  %489 = vmatprep.subr.mxu0 0.0
  %490 = vmatpush2.msra.mxu0 0.0
  %491 = vmatprep.subr.mxu0 0.0
  %492 = vmatpush2.msra.mxu0 0.0
  %493 = vmatprep.mubr.f32.mxu0 0.0
  %494 = vmatmul.mubr.f32.gmra.mxu0 %v30
  %v495 = vpop.f32.mrf.mxu0
  %v496 = vadd.f32 %v425, %v495
  %v497 = vpop.f32.mrf.mxu0
  %498 = vmatprep.mubr.f32.mxu0 0.0
  %499 = vmatmul.mubr.f32.gmra.mxu0 %v33
  %v500 = vpop.f32.mrf.mxu0
  %v501 = vadd.f32 %v425, %v500
  %v502 = vpop.f32.mrf.mxu0
  %503 = vmatprep.mubr.f32.mxu0 0.0
  %504 = vmatmul.mubr.f32.gmra.mxu0 %v36
  %v505 = vpop.f32.mrf.mxu0
  %v506 = vadd.f32 %v425, %v505
  %v507 = vpop.f32.mrf.mxu0
  %508 = vmatprep.mubr.f32.mxu0 0.0
  %509 = vmatmul.mubr.f32.gmra.mxu0 %v39
  %v510 = vpop.f32.mrf.mxu0
  %v511 = vadd.f32 %v425, %v510
  %v512 = vpop.f32.mrf.mxu0
  %513 = vmatprep.mubr.f32.mxu0 0.0
  %514 = vmatmul.mubr.f32.gmra.mxu0 %v42
  %v515 = vpop.f32.mrf.mxu0
  %v516 = vadd.f32 %v425, %v515
  %v517 = vpop.f32.mrf.mxu0
  %518 = vmatprep.mubr.f32.mxu0 0.0
  %519 = vmatmul.mubr.f32.gmra.mxu0 %v45
  %v520 = vpop.f32.mrf.mxu0
  %v521 = vadd.f32 %v425, %v520
  %v522 = vpop.f32.mrf.mxu0
  %523 = vmatprep.mubr.f32.mxu0 0.0
  %524 = vmatmul.mubr.f32.gmra.mxu0 %v48
  %v525 = vpop.f32.mrf.mxu0
  %v526 = vadd.f32 %v425, %v525
  %v527 = vpop.f32.mrf.mxu0
  %528 = vmatprep.mubr.f32.mxu0 0.0
  %529 = vmatmul.mubr.f32.gmra.mxu0 %v51
  %v530 = vpop.f32.mrf.mxu0
  %v531 = vadd.f32 %v425, %v530
  %v532 = vpop.f32.mrf.mxu0
  %533 = vdwg.mxu0
  %s534 = scalar_lea.vmem [#allocation2], 192
  %535 = vst.msk [vmem:[%s534] sm:$0xff] %vm162, %v496
  %536 = vst.msk [vmem:[%s534 + $0x8] sm:$0xff] %vm162, %v501
  %537 = vst.msk [vmem:[%s534 + $0x10] sm:$0xff] %vm162, %v506
  %538 = vst.msk [vmem:[%s534 + $0x18] sm:$0xff] %vm162, %v511
  %539 = vst.msk [vmem:[%s534 + $0x20] sm:$0xff] %vm162, %v516
  %540 = vst.msk [vmem:[%s534 + $0x28] sm:$0xff] %vm162, %v521
  %541 = vst.msk [vmem:[%s534 + $0x30] sm:$0xff] %vm162, %v526
  %542 = vst.msk [vmem:[%s534 + $0x38] sm:$0xff] %vm162, %v531
  %v543 = vld [vmem:[%s1 + $0x8] sm:$0xff]
  %v544 = vld [vmem:[%s1 + $0x10] sm:$0xff]
  %v545 = vld [vmem:[%s1 + $0x18] sm:$0xff]
  %v546 = vld [vmem:[%s1 + $0x20] sm:$0xff]
  %v547 = vld [vmem:[%s171 + $0x8] sm:$0xff]
  %v548 = vld [vmem:[%s171 + $0x10] sm:$0xff]
  %v549 = vld [vmem:[%s171 + $0x18] sm:$0xff]
  %v550 = vld [vmem:[%s171 + $0x20] sm:$0xff]
  %v551 = vld [vmem:[%s295 + $0x8] sm:$0xff]
  %v552 = vld [vmem:[%s295 + $0x10] sm:$0xff]
  %v553 = vld [vmem:[%s295 + $0x18] sm:$0xff]
  %v554 = vld [vmem:[%s295 + $0x20] sm:$0xff]
  %v555 = vld [vmem:[%s419 + $0x8] sm:$0xff]
  %v556 = vld [vmem:[%s419 + $0x10] sm:$0xff]
  %v557 = vld [vmem:[%s419 + $0x18] sm:$0xff]
  %v558 = vld [vmem:[%s419 + $0x20] sm:$0xff]
  %v559 = vld [vmem:[#allocation2] sm:$0xff]
  %v561 = vsel %vm162, 0.0, 0
  %563 = vmatprep.subr.mxu0 0.0
  %564 = vmatpush1.msra.mxu0 0.0
  %565 = vmatprep.subr.mxu0 0.0
  %566 = vmatpush1.msra.mxu0 0.0
  %567 = vmatprep.subr.mxu0 0.0
  %568 = vmatpush1.msra.mxu0 0.0
  %569 = vmatprep.subr.mxu0 0.0
  %570 = vmatpush1.msra.mxu0 0.0
  %571 = vmatprep.subr.mxu0 0.0
  %572 = vmatpush1.msra.mxu0 0.0
  %573 = vmatprep.subr.mxu0 0.0
  %574 = vmatpush1.msra.mxu0 0.0
  %575 = vmatprep.subr.mxu0 0.0
  %576 = vmatpush1.msra.mxu0 0.0
  %577 = vmatprep.subr.mxu0 0.0
  %578 = vmatpush1.msra.mxu0 0.0
  %579 = vmatprep.subr.mxu0 0.0
  %580 = vmatpush1.msra.mxu0 0.0
  %581 = vmatprep.subr.mxu0 0.0
  %582 = vmatpush1.msra.mxu0 0.0
  %583 = vmatprep.subr.mxu0 0.0
  %584 = vmatpush1.msra.mxu0 0.0
  %585 = vmatprep.subr.mxu0 0.0
  %586 = vmatpush1.msra.mxu0 0.0
  %587 = vmatprep.subr.mxu0 0.0
  %588 = vmatpush1.msra.mxu0 %v546
  %589 = vmatprep.subr.mxu0 0.0
  %590 = vmatpush1.msra.mxu0 %v545
  %591 = vmatprep.subr.mxu0 0.0
  %592 = vmatpush1.msra.mxu0 %v544
  %593 = vmatprep.subr.mxu0 0.0
  %594 = vmatpush1.msra.mxu0 %v543
  %595 = vmatprep.subr.mxu0 0.0
  %596 = vmatpush2.msra.mxu0 0.0
  %597 = vmatprep.subr.mxu0 0.0
  %598 = vmatpush2.msra.mxu0 0.0
  %599 = vmatprep.subr.mxu0 0.0
  %600 = vmatpush2.msra.mxu0 0.0
  %601 = vmatprep.subr.mxu0 0.0
  %602 = vmatpush2.msra.mxu0 0.0
  %603 = vmatprep.subr.mxu0 0.0
  %604 = vmatpush2.msra.mxu0 0.0
  %605 = vmatprep.subr.mxu0 0.0
  %606 = vmatpush2.msra.mxu0 0.0
  %607 = vmatprep.subr.mxu0 0.0
  %608 = vmatpush2.msra.mxu0 0.0
  %609 = vmatprep.subr.mxu0 0.0
  %610 = vmatpush2.msra.mxu0 0.0
  %611 = vmatprep.subr.mxu0 0.0
  %612 = vmatpush2.msra.mxu0 0.0
  %613 = vmatprep.subr.mxu0 0.0
  %614 = vmatpush2.msra.mxu0 0.0
  %615 = vmatprep.subr.mxu0 0.0
  %616 = vmatpush2.msra.mxu0 0.0
  %617 = vmatprep.subr.mxu0 0.0
  %618 = vmatpush2.msra.mxu0 0.0
  %619 = vmatprep.subr.mxu0 0.0
  %620 = vmatpush2.msra.mxu0 0.0
  %621 = vmatprep.subr.mxu0 0.0
  %622 = vmatpush2.msra.mxu0 0.0
  %623 = vmatprep.subr.mxu0 0.0
  %624 = vmatpush2.msra.mxu0 0.0
  %625 = vmatprep.subr.mxu0 0.0
  %626 = vmatpush2.msra.mxu0 0.0
  %627 = vmatprep.mubr.f32.mxu0 0.0
  %628 = vmatmul.mubr.f32.gmra.mxu0 %v561
  %v629 = vpop.f32.mrf.mxu0
  %v630 = vadd.f32 0.0, %v629
  %v631 = vpop.f32.mrf.mxu0
  %632 = vdwg.mxu0
  %v633 = vadd.f32 %v559, %v630
  %v634 = vld [vmem:[%s286] sm:$0xff]
  %635 = vmatprep.subr.mxu0 0.0
  %636 = vmatpush1.msra.mxu0 0.0
  %637 = vmatprep.subr.mxu0 0.0
  %638 = vmatpush1.msra.mxu0 0.0
  %639 = vmatprep.subr.mxu0 0.0
  %640 = vmatpush1.msra.mxu0 0.0
  %641 = vmatprep.subr.mxu0 0.0
  %642 = vmatpush1.msra.mxu0 0.0
  %643 = vmatprep.subr.mxu0 0.0
  %644 = vmatpush1.msra.mxu0 0.0
  %645 = vmatprep.subr.mxu0 0.0
  %646 = vmatpush1.msra.mxu0 0.0
  %647 = vmatprep.subr.mxu0 0.0
  %648 = vmatpush1.msra.mxu0 0.0
  %649 = vmatprep.subr.mxu0 0.0
  %650 = vmatpush1.msra.mxu0 0.0
  %651 = vmatprep.subr.mxu0 0.0
  %652 = vmatpush1.msra.mxu0 0.0
  %653 = vmatprep.subr.mxu0 0.0
  %654 = vmatpush1.msra.mxu0 0.0
  %655 = vmatprep.subr.mxu0 0.0
  %656 = vmatpush1.msra.mxu0 0.0
  %657 = vmatprep.subr.mxu0 0.0
  %658 = vmatpush1.msra.mxu0 0.0
  %659 = vmatprep.subr.mxu0 0.0
  %660 = vmatpush1.msra.mxu0 %v550
  %661 = vmatprep.subr.mxu0 0.0
  %662 = vmatpush1.msra.mxu0 %v549
  %663 = vmatprep.subr.mxu0 0.0
  %664 = vmatpush1.msra.mxu0 %v548
  %665 = vmatprep.subr.mxu0 0.0
  %666 = vmatpush1.msra.mxu0 %v547
  %667 = vmatprep.subr.mxu0 0.0
  %668 = vmatpush2.msra.mxu0 0.0
  %669 = vmatprep.subr.mxu0 0.0
  %670 = vmatpush2.msra.mxu0 0.0
  %671 = vmatprep.subr.mxu0 0.0
  %672 = vmatpush2.msra.mxu0 0.0
  %673 = vmatprep.subr.mxu0 0.0
  %674 = vmatpush2.msra.mxu0 0.0
  %675 = vmatprep.subr.mxu0 0.0
  %676 = vmatpush2.msra.mxu0 0.0
  %677 = vmatprep.subr.mxu0 0.0
  %678 = vmatpush2.msra.mxu0 0.0
  %679 = vmatprep.subr.mxu0 0.0
  %680 = vmatpush2.msra.mxu0 0.0
  %681 = vmatprep.subr.mxu0 0.0
  %682 = vmatpush2.msra.mxu0 0.0
  %683 = vmatprep.subr.mxu0 0.0
  %684 = vmatpush2.msra.mxu0 0.0
  %685 = vmatprep.subr.mxu0 0.0
  %686 = vmatpush2.msra.mxu0 0.0
  %687 = vmatprep.subr.mxu0 0.0
  %688 = vmatpush2.msra.mxu0 0.0
  %689 = vmatprep.subr.mxu0 0.0
  %690 = vmatpush2.msra.mxu0 0.0
  %691 = vmatprep.subr.mxu0 0.0
  %692 = vmatpush2.msra.mxu0 0.0
  %693 = vmatprep.subr.mxu0 0.0
  %694 = vmatpush2.msra.mxu0 0.0
  %695 = vmatprep.subr.mxu0 0.0
  %696 = vmatpush2.msra.mxu0 0.0
  %697 = vmatprep.subr.mxu0 0.0
  %698 = vmatpush2.msra.mxu0 0.0
  %699 = vmatprep.mubr.f32.mxu0 0.0
  %700 = vmatmul.mubr.f32.gmra.mxu0 %v561
  %v701 = vpop.f32.mrf.mxu0
  %v702 = vadd.f32 0.0, %v701
  %v703 = vpop.f32.mrf.mxu0
  %704 = vdwg.mxu0
  %v705 = vadd.f32 %v634, %v702
  %v706 = vld [vmem:[%s410] sm:$0xff]
  %707 = vmatprep.subr.mxu0 0.0
  %708 = vmatpush1.msra.mxu0 0.0
  %709 = vmatprep.subr.mxu0 0.0
  %710 = vmatpush1.msra.mxu0 0.0
  %711 = vmatprep.subr.mxu0 0.0
  %712 = vmatpush1.msra.mxu0 0.0
  %713 = vmatprep.subr.mxu0 0.0
  %714 = vmatpush1.msra.mxu0 0.0
  %715 = vmatprep.subr.mxu0 0.0
  %716 = vmatpush1.msra.mxu0 0.0
  %717 = vmatprep.subr.mxu0 0.0
  %718 = vmatpush1.msra.mxu0 0.0
  %719 = vmatprep.subr.mxu0 0.0
  %720 = vmatpush1.msra.mxu0 0.0
  %721 = vmatprep.subr.mxu0 0.0
  %722 = vmatpush1.msra.mxu0 0.0
  %723 = vmatprep.subr.mxu0 0.0
  %724 = vmatpush1.msra.mxu0 0.0
  %725 = vmatprep.subr.mxu0 0.0
  %726 = vmatpush1.msra.mxu0 0.0
  %727 = vmatprep.subr.mxu0 0.0
  %728 = vmatpush1.msra.mxu0 0.0
  %729 = vmatprep.subr.mxu0 0.0
  %730 = vmatpush1.msra.mxu0 0.0
  %731 = vmatprep.subr.mxu0 0.0
  %732 = vmatpush1.msra.mxu0 %v554
  %733 = vmatprep.subr.mxu0 0.0
  %734 = vmatpush1.msra.mxu0 %v553
  %735 = vmatprep.subr.mxu0 0.0
  %736 = vmatpush1.msra.mxu0 %v552
  %737 = vmatprep.subr.mxu0 0.0
  %738 = vmatpush1.msra.mxu0 %v551
  %739 = vmatprep.subr.mxu0 0.0
  %740 = vmatpush2.msra.mxu0 0.0
  %741 = vmatprep.subr.mxu0 0.0
  %742 = vmatpush2.msra.mxu0 0.0
  %743 = vmatprep.subr.mxu0 0.0
  %744 = vmatpush2.msra.mxu0 0.0
  %745 = vmatprep.subr.mxu0 0.0
  %746 = vmatpush2.msra.mxu0 0.0
  %747 = vmatprep.subr.mxu0 0.0
  %748 = vmatpush2.msra.mxu0 0.0
  %749 = vmatprep.subr.mxu0 0.0
  %750 = vmatpush2.msra.mxu0 0.0
  %751 = vmatprep.subr.mxu0 0.0
  %752 = vmatpush2.msra.mxu0 0.0
  %753 = vmatprep.subr.mxu0 0.0
  %754 = vmatpush2.msra.mxu0 0.0
  %755 = vmatprep.subr.mxu0 0.0
  %756 = vmatpush2.msra.mxu0 0.0
  %757 = vmatprep.subr.mxu0 0.0
  %758 = vmatpush2.msra.mxu0 0.0
  %759 = vmatprep.subr.mxu0 0.0
  %760 = vmatpush2.msra.mxu0 0.0
  %761 = vmatprep.subr.mxu0 0.0
  %762 = vmatpush2.msra.mxu0 0.0
  %763 = vmatprep.subr.mxu0 0.0
  %764 = vmatpush2.msra.mxu0 0.0
  %765 = vmatprep.subr.mxu0 0.0
  %766 = vmatpush2.msra.mxu0 0.0
  %767 = vmatprep.subr.mxu0 0.0
  %768 = vmatpush2.msra.mxu0 0.0
  %769 = vmatprep.subr.mxu0 0.0
  %770 = vmatpush2.msra.mxu0 0.0
  %771 = vmatprep.mubr.f32.mxu0 0.0
  %772 = vmatmul.mubr.f32.gmra.mxu0 %v561
  %v773 = vpop.f32.mrf.mxu0
  %v774 = vadd.f32 0.0, %v773
  %v775 = vpop.f32.mrf.mxu0
  %776 = vdwg.mxu0
  %v777 = vadd.f32 %v706, %v774
  %v778 = vld [vmem:[%s534] sm:$0xff]
  %779 = vmatprep.subr.mxu0 0.0
  %780 = vmatpush1.msra.mxu0 0.0
  %781 = vmatprep.subr.mxu0 0.0
  %782 = vmatpush1.msra.mxu0 0.0
  %783 = vmatprep.subr.mxu0 0.0
  %784 = vmatpush1.msra.mxu0 0.0
  %785 = vmatprep.subr.mxu0 0.0
  %786 = vmatpush1.msra.mxu0 0.0
  %787 = vmatprep.subr.mxu0 0.0
  %788 = vmatpush1.msra.mxu0 0.0
  %789 = vmatprep.subr.mxu0 0.0
  %790 = vmatpush1.msra.mxu0 0.0
  %791 = vmatprep.subr.mxu0 0.0
  %792 = vmatpush1.msra.mxu0 0.0
  %793 = vmatprep.subr.mxu0 0.0
  %794 = vmatpush1.msra.mxu0 0.0
  %795 = vmatprep.subr.mxu0 0.0
  %796 = vmatpush1.msra.mxu0 0.0
  %797 = vmatprep.subr.mxu0 0.0
  %798 = vmatpush1.msra.mxu0 0.0
  %799 = vmatprep.subr.mxu0 0.0
  %800 = vmatpush1.msra.mxu0 0.0
  %801 = vmatprep.subr.mxu0 0.0
  %802 = vmatpush1.msra.mxu0 0.0
  %803 = vmatprep.subr.mxu0 0.0
  %804 = vmatpush1.msra.mxu0 %v558
  %805 = vmatprep.subr.mxu0 0.0
  %806 = vmatpush1.msra.mxu0 %v557
  %807 = vmatprep.subr.mxu0 0.0
  %808 = vmatpush1.msra.mxu0 %v556
  %809 = vmatprep.subr.mxu0 0.0
  %810 = vmatpush1.msra.mxu0 %v555
  %811 = vmatprep.subr.mxu0 0.0
  %812 = vmatpush2.msra.mxu0 0.0
  %813 = vmatprep.subr.mxu0 0.0
  %814 = vmatpush2.msra.mxu0 0.0
  %815 = vmatprep.subr.mxu0 0.0
  %816 = vmatpush2.msra.mxu0 0.0
  %817 = vmatprep.subr.mxu0 0.0
  %818 = vmatpush2.msra.mxu0 0.0
  %819 = vmatprep.subr.mxu0 0.0
  %820 = vmatpush2.msra.mxu0 0.0
  %821 = vmatprep.subr.mxu0 0.0
  %822 = vmatpush2.msra.mxu0 0.0
  %823 = vmatprep.subr.mxu0 0.0
  %824 = vmatpush2.msra.mxu0 0.0
  %825 = vmatprep.subr.mxu0 0.0
  %826 = vmatpush2.msra.mxu0 0.0
  %827 = vmatprep.subr.mxu0 0.0
  %828 = vmatpush2.msra.mxu0 0.0
  %829 = vmatprep.subr.mxu0 0.0
  %830 = vmatpush2.msra.mxu0 0.0
  %831 = vmatprep.subr.mxu0 0.0
  %832 = vmatpush2.msra.mxu0 0.0
  %833 = vmatprep.subr.mxu0 0.0
  %834 = vmatpush2.msra.mxu0 0.0
  %835 = vmatprep.subr.mxu0 0.0
  %836 = vmatpush2.msra.mxu0 0.0
  %837 = vmatprep.subr.mxu0 0.0
  %838 = vmatpush2.msra.mxu0 0.0
  %839 = vmatprep.subr.mxu0 0.0
  %840 = vmatpush2.msra.mxu0 0.0
  %841 = vmatprep.subr.mxu0 0.0
  %842 = vmatpush2.msra.mxu0 0.0
  %843 = vmatprep.mubr.f32.mxu0 0.0
  %844 = vmatmul.mubr.f32.gmra.mxu0 %v561
  %v845 = vpop.f32.mrf.mxu0
  %v846 = vadd.f32 0.0, %v845
  %v847 = vpop.f32.mrf.mxu0
  %848 = vdwg.mxu0
  %v849 = vadd.f32 %v778, %v846
  %v850 = vxor.u32 %v633, 2147483648
  %v851 = vmul.f32 %v850, 1.442695
  %v852 = vpow.pop %v851
  %v853 = vadd.f32 %v852, 1.0
  %v854 = vrcp.pop %v853
  %v855 = vmul.f32 1.0, %v854
  %v856 = vxor.u32 %v705, 2147483648
  %v857 = vmul.f32 %v856, 1.442695
  %v858 = vpow.pop %v857
  %v859 = vadd.f32 %v858, 1.0
  %v860 = vrcp.pop %v859
  %v861 = vmul.f32 1.0, %v860
  %v862 = vxor.u32 %v849, 2147483648
  %v863 = vmul.f32 %v862, 1.442695
  %v864 = vpow.pop %v863
  %v865 = vadd.f32 %v864, 1.0
  %v866 = vrcp.pop %v865
  %v867 = vmul.f32 1.0, %v866
  %v868 = vtanh.pop %v777
  %v869 = vmul.f32 %v861, 0.0
  %v870 = vmul.f32 %v855, %v868
  %v871 = vadd.f32 %v869, %v870
  %v872 = vtanh.pop %v871
  %v873 = vmul.f32 %v867, %v872
  %v874 = vld [vmem:[#allocation2 + $0x8] sm:$0xff]
  %v876 = vsel %vm162, %v873, 0
  %878 = vmatprep.subr.mxu0 0.0
  %879 = vmatpush1.msra.mxu0 0.0
  %880 = vmatprep.subr.mxu0 0.0
  %881 = vmatpush1.msra.mxu0 0.0
  %882 = vmatprep.subr.mxu0 0.0
  %883 = vmatpush1.msra.mxu0 0.0
  %884 = vmatprep.subr.mxu0 0.0
  %885 = vmatpush1.msra.mxu0 0.0
  %886 = vmatprep.subr.mxu0 0.0
  %887 = vmatpush1.msra.mxu0 0.0
  %888 = vmatprep.subr.mxu0 0.0
  %889 = vmatpush1.msra.mxu0 0.0
  %890 = vmatprep.subr.mxu0 0.0
  %891 = vmatpush1.msra.mxu0 0.0
  %892 = vmatprep.subr.mxu0 0.0
  %893 = vmatpush1.msra.mxu0 0.0
  %894 = vmatprep.subr.mxu0 0.0
  %895 = vmatpush1.msra.mxu0 0.0
  %896 = vmatprep.subr.mxu0 0.0
  %897 = vmatpush1.msra.mxu0 0.0
  %898 = vmatprep.subr.mxu0 0.0
  %899 = vmatpush1.msra.mxu0 0.0
  %900 = vmatprep.subr.mxu0 0.0
  %901 = vmatpush1.msra.mxu0 0.0
  %902 = vmatprep.subr.mxu0 0.0
  %903 = vmatpush1.msra.mxu0 %v546
  %904 = vmatprep.subr.mxu0 0.0
  %905 = vmatpush1.msra.mxu0 %v545
  %906 = vmatprep.subr.mxu0 0.0
  %907 = vmatpush1.msra.mxu0 %v544
  %908 = vmatprep.subr.mxu0 0.0
  %909 = vmatpush1.msra.mxu0 %v543
  %910 = vmatprep.subr.mxu0 0.0
  %911 = vmatpush2.msra.mxu0 0.0
  %912 = vmatprep.subr.mxu0 0.0
  %913 = vmatpush2.msra.mxu0 0.0
  %914 = vmatprep.subr.mxu0 0.0
  %915 = vmatpush2.msra.mxu0 0.0
  %916 = vmatprep.subr.mxu0 0.0
  %917 = vmatpush2.msra.mxu0 0.0
  %918 = vmatprep.subr.mxu0 0.0
  %919 = vmatpush2.msra.mxu0 0.0
  %920 = vmatprep.subr.mxu0 0.0
  %921 = vmatpush2.msra.mxu0 0.0
  %922 = vmatprep.subr.mxu0 0.0
  %923 = vmatpush2.msra.mxu0 0.0
  %924 = vmatprep.subr.mxu0 0.0
  %925 = vmatpush2.msra.mxu0 0.0
  %926 = vmatprep.subr.mxu0 0.0
  %927 = vmatpush2.msra.mxu0 0.0
  %928 = vmatprep.subr.mxu0 0.0
  %929 = vmatpush2.msra.mxu0 0.0
  %930 = vmatprep.subr.mxu0 0.0
  %931 = vmatpush2.msra.mxu0 0.0
  %932 = vmatprep.subr.mxu0 0.0
  %933 = vmatpush2.msra.mxu0 0.0
  %934 = vmatprep.subr.mxu0 0.0
  %935 = vmatpush2.msra.mxu0 0.0
  %936 = vmatprep.subr.mxu0 0.0
  %937 = vmatpush2.msra.mxu0 0.0
  %938 = vmatprep.subr.mxu0 0.0
  %939 = vmatpush2.msra.mxu0 0.0
  %940 = vmatprep.subr.mxu0 0.0
  %941 = vmatpush2.msra.mxu0 0.0
  %942 = vmatprep.mubr.f32.mxu0 0.0
  %943 = vmatmul.mubr.f32.gmra.mxu0 %v876
  %v944 = vpop.f32.mrf.mxu0
  %v945 = vadd.f32 0.0, %v944
  %v946 = vpop.f32.mrf.mxu0
  %947 = vdwg.mxu0
  %v948 = vadd.f32 %v874, %v945
  %v949 = vld [vmem:[%s286 + $0x8] sm:$0xff]
  %950 = vmatprep.subr.mxu0 0.0
  %951 = vmatpush1.msra.mxu0 0.0
  %952 = vmatprep.subr.mxu0 0.0
  %953 = vmatpush1.msra.mxu0 0.0
  %954 = vmatprep.subr.mxu0 0.0
  %955 = vmatpush1.msra.mxu0 0.0
  %956 = vmatprep.subr.mxu0 0.0
  %957 = vmatpush1.msra.mxu0 0.0
  %958 = vmatprep.subr.mxu0 0.0
  %959 = vmatpush1.msra.mxu0 0.0
  %960 = vmatprep.subr.mxu0 0.0
  %961 = vmatpush1.msra.mxu0 0.0
  %962 = vmatprep.subr.mxu0 0.0
  %963 = vmatpush1.msra.mxu0 0.0
  %964 = vmatprep.subr.mxu0 0.0
  %965 = vmatpush1.msra.mxu0 0.0
  %966 = vmatprep.subr.mxu0 0.0
  %967 = vmatpush1.msra.mxu0 0.0
  %968 = vmatprep.subr.mxu0 0.0
  %969 = vmatpush1.msra.mxu0 0.0
  %970 = vmatprep.subr.mxu0 0.0
  %971 = vmatpush1.msra.mxu0 0.0
  %972 = vmatprep.subr.mxu0 0.0
  %973 = vmatpush1.msra.mxu0 0.0
  %974 = vmatprep.subr.mxu0 0.0
  %975 = vmatpush1.msra.mxu0 %v550
  %976 = vmatprep.subr.mxu0 0.0
  %977 = vmatpush1.msra.mxu0 %v549
  %978 = vmatprep.subr.mxu0 0.0
  %979 = vmatpush1.msra.mxu0 %v548
  %980 = vmatprep.subr.mxu0 0.0
  %981 = vmatpush1.msra.mxu0 %v547
  %982 = vmatprep.subr.mxu0 0.0
  %983 = vmatpush2.msra.mxu0 0.0
  %984 = vmatprep.subr.mxu0 0.0
  %985 = vmatpush2.msra.mxu0 0.0
  %986 = vmatprep.subr.mxu0 0.0
  %987 = vmatpush2.msra.mxu0 0.0
  %988 = vmatprep.subr.mxu0 0.0
  %989 = vmatpush2.msra.mxu0 0.0
  %990 = vmatprep.subr.mxu0 0.0
  %991 = vmatpush2.msra.mxu0 0.0
  %992 = vmatprep.subr.mxu0 0.0
  %993 = vmatpush2.msra.mxu0 0.0
  %994 = vmatprep.subr.mxu0 0.0
  %995 = vmatpush2.msra.mxu0 0.0
  %996 = vmatprep.subr.mxu0 0.0
  %997 = vmatpush2.msra.mxu0 0.0
  %998 = vmatprep.subr.mxu0 0.0
  %999 = vmatpush2.msra.mxu0 0.0
  %1000 = vmatprep.subr.mxu0 0.0
  %1001 = vmatpush2.msra.mxu0 0.0
  %1002 = vmatprep.subr.mxu0 0.0
  %1003 = vmatpush2.msra.mxu0 0.0
  %1004 = vmatprep.subr.mxu0 0.0
  %1005 = vmatpush2.msra.mxu0 0.0
  %1006 = vmatprep.subr.mxu0 0.0
  %1007 = vmatpush2.msra.mxu0 0.0
  %1008 = vmatprep.subr.mxu0 0.0
  %1009 = vmatpush2.msra.mxu0 0.0
  %1010 = vmatprep.subr.mxu0 0.0
  %1011 = vmatpush2.msra.mxu0 0.0
  %1012 = vmatprep.subr.mxu0 0.0
  %1013 = vmatpush2.msra.mxu0 0.0
  %1014 = vmatprep.mubr.f32.mxu0 0.0
  %1015 = vmatmul.mubr.f32.gmra.mxu0 %v876
  %v1016 = vpop.f32.mrf.mxu0
  %v1017 = vadd.f32 0.0, %v1016
  %v1018 = vpop.f32.mrf.mxu0
  %1019 = vdwg.mxu0
  %v1020 = vadd.f32 %v949, %v1017
  %v1021 = vld [vmem:[%s410 + $0x8] sm:$0xff]
  %1022 = vmatprep.subr.mxu0 0.0
  %1023 = vmatpush1.msra.mxu0 0.0
  %1024 = vmatprep.subr.mxu0 0.0
  %1025 = vmatpush1.msra.mxu0 0.0
  %1026 = vmatprep.subr.mxu0 0.0
  %1027 = vmatpush1.msra.mxu0 0.0
  %1028 = vmatprep.subr.mxu0 0.0
  %1029 = vmatpush1.msra.mxu0 0.0
  %1030 = vmatprep.subr.mxu0 0.0
  %1031 = vmatpush1.msra.mxu0 0.0
  %1032 = vmatprep.subr.mxu0 0.0
  %1033 = vmatpush1.msra.mxu0 0.0
  %1034 = vmatprep.subr.mxu0 0.0
  %1035 = vmatpush1.msra.mxu0 0.0
  %1036 = vmatprep.subr.mxu0 0.0
  %1037 = vmatpush1.msra.mxu0 0.0
  %1038 = vmatprep.subr.mxu0 0.0
  %1039 = vmatpush1.msra.mxu0 0.0
  %1040 = vmatprep.subr.mxu0 0.0
  %1041 = vmatpush1.msra.mxu0 0.0
  %1042 = vmatprep.subr.mxu0 0.0
  %1043 = vmatpush1.msra.mxu0 0.0
  %1044 = vmatprep.subr.mxu0 0.0
  %1045 = vmatpush1.msra.mxu0 0.0
  %1046 = vmatprep.subr.mxu0 0.0
  %1047 = vmatpush1.msra.mxu0 %v554
  %1048 = vmatprep.subr.mxu0 0.0
  %1049 = vmatpush1.msra.mxu0 %v553
  %1050 = vmatprep.subr.mxu0 0.0
  %1051 = vmatpush1.msra.mxu0 %v552
  %1052 = vmatprep.subr.mxu0 0.0
  %1053 = vmatpush1.msra.mxu0 %v551
  %1054 = vmatprep.subr.mxu0 0.0
  %1055 = vmatpush2.msra.mxu0 0.0
  %1056 = vmatprep.subr.mxu0 0.0
  %1057 = vmatpush2.msra.mxu0 0.0
  %1058 = vmatprep.subr.mxu0 0.0
  %1059 = vmatpush2.msra.mxu0 0.0
  %1060 = vmatprep.subr.mxu0 0.0
  %1061 = vmatpush2.msra.mxu0 0.0
  %1062 = vmatprep.subr.mxu0 0.0
  %1063 = vmatpush2.msra.mxu0 0.0
  %1064 = vmatprep.subr.mxu0 0.0
  %1065 = vmatpush2.msra.mxu0 0.0
  %1066 = vmatprep.subr.mxu0 0.0
  %1067 = vmatpush2.msra.mxu0 0.0
  %1068 = vmatprep.subr.mxu0 0.0
  %1069 = vmatpush2.msra.mxu0 0.0
  %1070 = vmatprep.subr.mxu0 0.0
  %1071 = vmatpush2.msra.mxu0 0.0
  %1072 = vmatprep.subr.mxu0 0.0
  %1073 = vmatpush2.msra.mxu0 0.0
  %1074 = vmatprep.subr.mxu0 0.0
  %1075 = vmatpush2.msra.mxu0 0.0
  %1076 = vmatprep.subr.mxu0 0.0
  %1077 = vmatpush2.msra.mxu0 0.0
  %1078 = vmatprep.subr.mxu0 0.0
  %1079 = vmatpush2.msra.mxu0 0.0
  %1080 = vmatprep.subr.mxu0 0.0
  %1081 = vmatpush2.msra.mxu0 0.0
  %1082 = vmatprep.subr.mxu0 0.0
  %1083 = vmatpush2.msra.mxu0 0.0
  %1084 = vmatprep.subr.mxu0 0.0
  %1085 = vmatpush2.msra.mxu0 0.0
  %1086 = vmatprep.mubr.f32.mxu0 0.0
  %1087 = vmatmul.mubr.f32.gmra.mxu0 %v876
  %v1088 = vpop.f32.mrf.mxu0
  %v1089 = vadd.f32 0.0, %v1088
  %v1090 = vpop.f32.mrf.mxu0
  %1091 = vdwg.mxu0
  %v1092 = vadd.f32 %v1021, %v1089
  %v1093 = vld [vmem:[%s534 + $0x8] sm:$0xff]
  %1094 = vmatprep.subr.mxu0 0.0
  %1095 = vmatpush1.msra.mxu0 0.0
  %1096 = vmatprep.subr.mxu0 0.0
  %1097 = vmatpush1.msra.mxu0 0.0
  %1098 = vmatprep.subr.mxu0 0.0
  %1099 = vmatpush1.msra.mxu0 0.0
  %1100 = vmatprep.subr.mxu0 0.0
  %1101 = vmatpush1.msra.mxu0 0.0
  %1102 = vmatprep.subr.mxu0 0.0
  %1103 = vmatpush1.msra.mxu0 0.0
  %1104 = vmatprep.subr.mxu0 0.0
  %1105 = vmatpush1.msra.mxu0 0.0
  %1106 = vmatprep.subr.mxu0 0.0
  %1107 = vmatpush1.msra.mxu0 0.0
  %1108 = vmatprep.subr.mxu0 0.0
  %1109 = vmatpush1.msra.mxu0 0.0
  %1110 = vmatprep.subr.mxu0 0.0
  %1111 = vmatpush1.msra.mxu0 0.0
  %1112 = vmatprep.subr.mxu0 0.0
  %1113 = vmatpush1.msra.mxu0 0.0
  %1114 = vmatprep.subr.mxu0 0.0
  %1115 = vmatpush1.msra.mxu0 0.0
  %1116 = vmatprep.subr.mxu0 0.0
  %1117 = vmatpush1.msra.mxu0 0.0
  %1118 = vmatprep.subr.mxu0 0.0
  %1119 = vmatpush1.msra.mxu0 %v558
  %1120 = vmatprep.subr.mxu0 0.0
  %1121 = vmatpush1.msra.mxu0 %v557
  %1122 = vmatprep.subr.mxu0 0.0
  %1123 = vmatpush1.msra.mxu0 %v556
  %1124 = vmatprep.subr.mxu0 0.0
  %1125 = vmatpush1.msra.mxu0 %v555
  %1126 = vmatprep.subr.mxu0 0.0
  %1127 = vmatpush2.msra.mxu0 0.0
  %1128 = vmatprep.subr.mxu0 0.0
  %1129 = vmatpush2.msra.mxu0 0.0
  %1130 = vmatprep.subr.mxu0 0.0
  %1131 = vmatpush2.msra.mxu0 0.0
  %1132 = vmatprep.subr.mxu0 0.0
  %1133 = vmatpush2.msra.mxu0 0.0
  %1134 = vmatprep.subr.mxu0 0.0
  %1135 = vmatpush2.msra.mxu0 0.0
  %1136 = vmatprep.subr.mxu0 0.0
  %1137 = vmatpush2.msra.mxu0 0.0
  %1138 = vmatprep.subr.mxu0 0.0
  %1139 = vmatpush2.msra.mxu0 0.0
  %1140 = vmatprep.subr.mxu0 0.0
  %1141 = vmatpush2.msra.mxu0 0.0
  %1142 = vmatprep.subr.mxu0 0.0
  %1143 = vmatpush2.msra.mxu0 0.0
  %1144 = vmatprep.subr.mxu0 0.0
  %1145 = vmatpush2.msra.mxu0 0.0
  %1146 = vmatprep.subr.mxu0 0.0
  %1147 = vmatpush2.msra.mxu0 0.0
  %1148 = vmatprep.subr.mxu0 0.0
  %1149 = vmatpush2.msra.mxu0 0.0
  %1150 = vmatprep.subr.mxu0 0.0
  %1151 = vmatpush2.msra.mxu0 0.0
  %1152 = vmatprep.subr.mxu0 0.0
  %1153 = vmatpush2.msra.mxu0 0.0
  %1154 = vmatprep.subr.mxu0 0.0
  %1155 = vmatpush2.msra.mxu0 0.0
  %1156 = vmatprep.subr.mxu0 0.0
  %1157 = vmatpush2.msra.mxu0 0.0
  %1158 = vmatprep.mubr.f32.mxu0 0.0
  %1159 = vmatmul.mubr.f32.gmra.mxu0 %v876
  %v1160 = vpop.f32.mrf.mxu0
  %v1161 = vadd.f32 0.0, %v1160
  %v1162 = vpop.f32.mrf.mxu0
  %1163 = vdwg.mxu0
  %v1164 = vadd.f32 %v1093, %v1161
  %v1165 = vxor.u32 %v948, 2147483648
  %v1166 = vmul.f32 %v1165, 1.442695
  %v1167 = vpow.pop %v1166
  %v1168 = vadd.f32 %v1167, 1.0
  %v1169 = vrcp.pop %v1168
  %v1170 = vmul.f32 1.0, %v1169
  %v1171 = vxor.u32 %v1020, 2147483648
  %v1172 = vmul.f32 %v1171, 1.442695
  %v1173 = vpow.pop %v1172
  %v1174 = vadd.f32 %v1173, 1.0
  %v1175 = vrcp.pop %v1174
  %v1176 = vmul.f32 1.0, %v1175
  %v1177 = vxor.u32 %v1164, 2147483648
  %v1178 = vmul.f32 %v1177, 1.442695
  %v1179 = vpow.pop %v1178
  %v1180 = vadd.f32 %v1179, 1.0
  %v1181 = vrcp.pop %v1180
  %v1182 = vmul.f32 1.0, %v1181
  %v1183 = vtanh.pop %v1092
  %v1184 = vmul.f32 %v1176, %v871
  %v1185 = vmul.f32 %v1170, %v1183
  %v1186 = vadd.f32 %v1184, %v1185
  %v1187 = vtanh.pop %v1186
  %v1188 = vmul.f32 %v1182, %v1187
  %v1189 = vld [vmem:[#allocation2 + $0x10] sm:$0xff]
  %v1191 = vsel %vm162, %v1188, 0
  %1193 = vmatprep.subr.mxu0 0.0
  %1194 = vmatpush1.msra.mxu0 0.0
  %1195 = vmatprep.subr.mxu0 0.0
  %1196 = vmatpush1.msra.mxu0 0.0
  %1197 = vmatprep.subr.mxu0 0.0
  %1198 = vmatpush1.msra.mxu0 0.0
  %1199 = vmatprep.subr.mxu0 0.0
  %1200 = vmatpush1.msra.mxu0 0.0
  %1201 = vmatprep.subr.mxu0 0.0
  %1202 = vmatpush1.msra.mxu0 0.0
  %1203 = vmatprep.subr.mxu0 0.0
  %1204 = vmatpush1.msra.mxu0 0.0
  %1205 = vmatprep.subr.mxu0 0.0
  %1206 = vmatpush1.msra.mxu0 0.0
  %1207 = vmatprep.subr.mxu0 0.0
  %1208 = vmatpush1.msra.mxu0 0.0
  %1209 = vmatprep.subr.mxu0 0.0
  %1210 = vmatpush1.msra.mxu0 0.0
  %1211 = vmatprep.subr.mxu0 0.0
  %1212 = vmatpush1.msra.mxu0 0.0
  %1213 = vmatprep.subr.mxu0 0.0
  %1214 = vmatpush1.msra.mxu0 0.0
  %1215 = vmatprep.subr.mxu0 0.0
  %1216 = vmatpush1.msra.mxu0 0.0
  %1217 = vmatprep.subr.mxu0 0.0
  %1218 = vmatpush1.msra.mxu0 %v546
  %1219 = vmatprep.subr.mxu0 0.0
  %1220 = vmatpush1.msra.mxu0 %v545
  %1221 = vmatprep.subr.mxu0 0.0
  %1222 = vmatpush1.msra.mxu0 %v544
  %1223 = vmatprep.subr.mxu0 0.0
  %1224 = vmatpush1.msra.mxu0 %v543
  %1225 = vmatprep.subr.mxu0 0.0
  %1226 = vmatpush2.msra.mxu0 0.0
  %1227 = vmatprep.subr.mxu0 0.0
  %1228 = vmatpush2.msra.mxu0 0.0
  %1229 = vmatprep.subr.mxu0 0.0
  %1230 = vmatpush2.msra.mxu0 0.0
  %1231 = vmatprep.subr.mxu0 0.0
  %1232 = vmatpush2.msra.mxu0 0.0
  %1233 = vmatprep.subr.mxu0 0.0
  %1234 = vmatpush2.msra.mxu0 0.0
  %1235 = vmatprep.subr.mxu0 0.0
  %1236 = vmatpush2.msra.mxu0 0.0
  %1237 = vmatprep.subr.mxu0 0.0
  %1238 = vmatpush2.msra.mxu0 0.0
  %1239 = vmatprep.subr.mxu0 0.0
  %1240 = vmatpush2.msra.mxu0 0.0
  %1241 = vmatprep.subr.mxu0 0.0
  %1242 = vmatpush2.msra.mxu0 0.0
  %1243 = vmatprep.subr.mxu0 0.0
  %1244 = vmatpush2.msra.mxu0 0.0
  %1245 = vmatprep.subr.mxu0 0.0
  %1246 = vmatpush2.msra.mxu0 0.0
  %1247 = vmatprep.subr.mxu0 0.0
  %1248 = vmatpush2.msra.mxu0 0.0
  %1249 = vmatprep.subr.mxu0 0.0
  %1250 = vmatpush2.msra.mxu0 0.0
  %1251 = vmatprep.subr.mxu0 0.0
  %1252 = vmatpush2.msra.mxu0 0.0
  %1253 = vmatprep.subr.mxu0 0.0
  %1254 = vmatpush2.msra.mxu0 0.0
  %1255 = vmatprep.subr.mxu0 0.0
  %1256 = vmatpush2.msra.mxu0 0.0
  %1257 = vmatprep.mubr.f32.mxu0 0.0
  %1258 = vmatmul.mubr.f32.gmra.mxu0 %v1191
  %v1259 = vpop.f32.mrf.mxu0
  %v1260 = vadd.f32 0.0, %v1259
  %v1261 = vpop.f32.mrf.mxu0
  %1262 = vdwg.mxu0
  %v1263 = vadd.f32 %v1189, %v1260
  %v1264 = vld [vmem:[%s286 + $0x10] sm:$0xff]
  %1265 = vmatprep.subr.mxu0 0.0
  %1266 = vmatpush1.msra.mxu0 0.0
  %1267 = vmatprep.subr.mxu0 0.0
  %1268 = vmatpush1.msra.mxu0 0.0
  %1269 = vmatprep.subr.mxu0 0.0
  %1270 = vmatpush1.msra.mxu0 0.0
  %1271 = vmatprep.subr.mxu0 0.0
  %1272 = vmatpush1.msra.mxu0 0.0
  %1273 = vmatprep.subr.mxu0 0.0
  %1274 = vmatpush1.msra.mxu0 0.0
  %1275 = vmatprep.subr.mxu0 0.0
  %1276 = vmatpush1.msra.mxu0 0.0
  %1277 = vmatprep.subr.mxu0 0.0
  %1278 = vmatpush1.msra.mxu0 0.0
  %1279 = vmatprep.subr.mxu0 0.0
  %1280 = vmatpush1.msra.mxu0 0.0
  %1281 = vmatprep.subr.mxu0 0.0
  %1282 = vmatpush1.msra.mxu0 0.0
  %1283 = vmatprep.subr.mxu0 0.0
  %1284 = vmatpush1.msra.mxu0 0.0
  %1285 = vmatprep.subr.mxu0 0.0
  %1286 = vmatpush1.msra.mxu0 0.0
  %1287 = vmatprep.subr.mxu0 0.0
  %1288 = vmatpush1.msra.mxu0 0.0
  %1289 = vmatprep.subr.mxu0 0.0
  %1290 = vmatpush1.msra.mxu0 %v550
  %1291 = vmatprep.subr.mxu0 0.0
  %1292 = vmatpush1.msra.mxu0 %v549
  %1293 = vmatprep.subr.mxu0 0.0
  %1294 = vmatpush1.msra.mxu0 %v548
  %1295 = vmatprep.subr.mxu0 0.0
  %1296 = vmatpush1.msra.mxu0 %v547
  %1297 = vmatprep.subr.mxu0 0.0
  %1298 = vmatpush2.msra.mxu0 0.0
  %1299 = vmatprep.subr.mxu0 0.0
  %1300 = vmatpush2.msra.mxu0 0.0
  %1301 = vmatprep.subr.mxu0 0.0
  %1302 = vmatpush2.msra.mxu0 0.0
  %1303 = vmatprep.subr.mxu0 0.0
  %1304 = vmatpush2.msra.mxu0 0.0
  %1305 = vmatprep.subr.mxu0 0.0
  %1306 = vmatpush2.msra.mxu0 0.0
  %1307 = vmatprep.subr.mxu0 0.0
  %1308 = vmatpush2.msra.mxu0 0.0
  %1309 = vmatprep.subr.mxu0 0.0
  %1310 = vmatpush2.msra.mxu0 0.0
  %1311 = vmatprep.subr.mxu0 0.0
  %1312 = vmatpush2.msra.mxu0 0.0
  %1313 = vmatprep.subr.mxu0 0.0
  %1314 = vmatpush2.msra.mxu0 0.0
  %1315 = vmatprep.subr.mxu0 0.0
  %1316 = vmatpush2.msra.mxu0 0.0
  %1317 = vmatprep.subr.mxu0 0.0
  %1318 = vmatpush2.msra.mxu0 0.0
  %1319 = vmatprep.subr.mxu0 0.0
  %1320 = vmatpush2.msra.mxu0 0.0
  %1321 = vmatprep.subr.mxu0 0.0
  %1322 = vmatpush2.msra.mxu0 0.0
  %1323 = vmatprep.subr.mxu0 0.0
  %1324 = vmatpush2.msra.mxu0 0.0
  %1325 = vmatprep.subr.mxu0 0.0
  %1326 = vmatpush2.msra.mxu0 0.0
  %1327 = vmatprep.subr.mxu0 0.0
  %1328 = vmatpush2.msra.mxu0 0.0
  %1329 = vmatprep.mubr.f32.mxu0 0.0
  %1330 = vmatmul.mubr.f32.gmra.mxu0 %v1191
  %v1331 = vpop.f32.mrf.mxu0
  %v1332 = vadd.f32 0.0, %v1331
  %v1333 = vpop.f32.mrf.mxu0
  %1334 = vdwg.mxu0
  %v1335 = vadd.f32 %v1264, %v1332
  %v1336 = vld [vmem:[%s410 + $0x10] sm:$0xff]
  %1337 = vmatprep.subr.mxu0 0.0
  %1338 = vmatpush1.msra.mxu0 0.0
  %1339 = vmatprep.subr.mxu0 0.0
  %1340 = vmatpush1.msra.mxu0 0.0
  %1341 = vmatprep.subr.mxu0 0.0
  %1342 = vmatpush1.msra.mxu0 0.0
  %1343 = vmatprep.subr.mxu0 0.0
  %1344 = vmatpush1.msra.mxu0 0.0
  %1345 = vmatprep.subr.mxu0 0.0
  %1346 = vmatpush1.msra.mxu0 0.0
  %1347 = vmatprep.subr.mxu0 0.0
  %1348 = vmatpush1.msra.mxu0 0.0
  %1349 = vmatprep.subr.mxu0 0.0
  %1350 = vmatpush1.msra.mxu0 0.0
  %1351 = vmatprep.subr.mxu0 0.0
  %1352 = vmatpush1.msra.mxu0 0.0
  %1353 = vmatprep.subr.mxu0 0.0
  %1354 = vmatpush1.msra.mxu0 0.0
  %1355 = vmatprep.subr.mxu0 0.0
  %1356 = vmatpush1.msra.mxu0 0.0
  %1357 = vmatprep.subr.mxu0 0.0
  %1358 = vmatpush1.msra.mxu0 0.0
  %1359 = vmatprep.subr.mxu0 0.0
  %1360 = vmatpush1.msra.mxu0 0.0
  %1361 = vmatprep.subr.mxu0 0.0
  %1362 = vmatpush1.msra.mxu0 %v554
  %1363 = vmatprep.subr.mxu0 0.0
  %1364 = vmatpush1.msra.mxu0 %v553
  %1365 = vmatprep.subr.mxu0 0.0
  %1366 = vmatpush1.msra.mxu0 %v552
  %1367 = vmatprep.subr.mxu0 0.0
  %1368 = vmatpush1.msra.mxu0 %v551
  %1369 = vmatprep.subr.mxu0 0.0
  %1370 = vmatpush2.msra.mxu0 0.0
  %1371 = vmatprep.subr.mxu0 0.0
  %1372 = vmatpush2.msra.mxu0 0.0
  %1373 = vmatprep.subr.mxu0 0.0
  %1374 = vmatpush2.msra.mxu0 0.0
  %1375 = vmatprep.subr.mxu0 0.0
  %1376 = vmatpush2.msra.mxu0 0.0
  %1377 = vmatprep.subr.mxu0 0.0
  %1378 = vmatpush2.msra.mxu0 0.0
  %1379 = vmatprep.subr.mxu0 0.0
  %1380 = vmatpush2.msra.mxu0 0.0
  %1381 = vmatprep.subr.mxu0 0.0
  %1382 = vmatpush2.msra.mxu0 0.0
  %1383 = vmatprep.subr.mxu0 0.0
  %1384 = vmatpush2.msra.mxu0 0.0
  %1385 = vmatprep.subr.mxu0 0.0
  %1386 = vmatpush2.msra.mxu0 0.0
  %1387 = vmatprep.subr.mxu0 0.0
  %1388 = vmatpush2.msra.mxu0 0.0
  %1389 = vmatprep.subr.mxu0 0.0
  %1390 = vmatpush2.msra.mxu0 0.0
  %1391 = vmatprep.subr.mxu0 0.0
  %1392 = vmatpush2.msra.mxu0 0.0
  %1393 = vmatprep.subr.mxu0 0.0
  %1394 = vmatpush2.msra.mxu0 0.0
  %1395 = vmatprep.subr.mxu0 0.0
  %1396 = vmatpush2.msra.mxu0 0.0
  %1397 = vmatprep.subr.mxu0 0.0
  %1398 = vmatpush2.msra.mxu0 0.0
  %1399 = vmatprep.subr.mxu0 0.0
  %1400 = vmatpush2.msra.mxu0 0.0
  %1401 = vmatprep.mubr.f32.mxu0 0.0
  %1402 = vmatmul.mubr.f32.gmra.mxu0 %v1191
  %v1403 = vpop.f32.mrf.mxu0
  %v1404 = vadd.f32 0.0, %v1403
  %v1405 = vpop.f32.mrf.mxu0
  %1406 = vdwg.mxu0
  %v1407 = vadd.f32 %v1336, %v1404
  %v1408 = vld [vmem:[%s534 + $0x10] sm:$0xff]
  %1409 = vmatprep.subr.mxu0 0.0
  %1410 = vmatpush1.msra.mxu0 0.0
  %1411 = vmatprep.subr.mxu0 0.0
  %1412 = vmatpush1.msra.mxu0 0.0
  %1413 = vmatprep.subr.mxu0 0.0
  %1414 = vmatpush1.msra.mxu0 0.0
  %1415 = vmatprep.subr.mxu0 0.0
  %1416 = vmatpush1.msra.mxu0 0.0
  %1417 = vmatprep.subr.mxu0 0.0
  %1418 = vmatpush1.msra.mxu0 0.0
  %1419 = vmatprep.subr.mxu0 0.0
  %1420 = vmatpush1.msra.mxu0 0.0
  %1421 = vmatprep.subr.mxu0 0.0
  %1422 = vmatpush1.msra.mxu0 0.0
  %1423 = vmatprep.subr.mxu0 0.0
  %1424 = vmatpush1.msra.mxu0 0.0
  %1425 = vmatprep.subr.mxu0 0.0
  %1426 = vmatpush1.msra.mxu0 0.0
  %1427 = vmatprep.subr.mxu0 0.0
  %1428 = vmatpush1.msra.mxu0 0.0
  %1429 = vmatprep.subr.mxu0 0.0
  %1430 = vmatpush1.msra.mxu0 0.0
  %1431 = vmatprep.subr.mxu0 0.0
  %1432 = vmatpush1.msra.mxu0 0.0
  %1433 = vmatprep.subr.mxu0 0.0
  %1434 = vmatpush1.msra.mxu0 %v558
  %1435 = vmatprep.subr.mxu0 0.0
  %1436 = vmatpush1.msra.mxu0 %v557
  %1437 = vmatprep.subr.mxu0 0.0
  %1438 = vmatpush1.msra.mxu0 %v556
  %1439 = vmatprep.subr.mxu0 0.0
  %1440 = vmatpush1.msra.mxu0 %v555
  %1441 = vmatprep.subr.mxu0 0.0
  %1442 = vmatpush2.msra.mxu0 0.0
  %1443 = vmatprep.subr.mxu0 0.0
  %1444 = vmatpush2.msra.mxu0 0.0
  %1445 = vmatprep.subr.mxu0 0.0
  %1446 = vmatpush2.msra.mxu0 0.0
  %1447 = vmatprep.subr.mxu0 0.0
  %1448 = vmatpush2.msra.mxu0 0.0
  %1449 = vmatprep.subr.mxu0 0.0
  %1450 = vmatpush2.msra.mxu0 0.0
  %1451 = vmatprep.subr.mxu0 0.0
  %1452 = vmatpush2.msra.mxu0 0.0
  %1453 = vmatprep.subr.mxu0 0.0
  %1454 = vmatpush2.msra.mxu0 0.0
  %1455 = vmatprep.subr.mxu0 0.0
  %1456 = vmatpush2.msra.mxu0 0.0
  %1457 = vmatprep.subr.mxu0 0.0
  %1458 = vmatpush2.msra.mxu0 0.0
  %1459 = vmatprep.subr.mxu0 0.0
  %1460 = vmatpush2.msra.mxu0 0.0
  %1461 = vmatprep.subr.mxu0 0.0
  %1462 = vmatpush2.msra.mxu0 0.0
  %1463 = vmatprep.subr.mxu0 0.0
  %1464 = vmatpush2.msra.mxu0 0.0
  %1465 = vmatprep.subr.mxu0 0.0
  %1466 = vmatpush2.msra.mxu0 0.0
  %1467 = vmatprep.subr.mxu0 0.0
  %1468 = vmatpush2.msra.mxu0 0.0
  %1469 = vmatprep.subr.mxu0 0.0
  %1470 = vmatpush2.msra.mxu0 0.0
  %1471 = vmatprep.subr.mxu0 0.0
  %1472 = vmatpush2.msra.mxu0 0.0
  %1473 = vmatprep.mubr.f32.mxu0 0.0
  %1474 = vmatmul.mubr.f32.gmra.mxu0 %v1191
  %v1475 = vpop.f32.mrf.mxu0
  %v1476 = vadd.f32 0.0, %v1475
  %v1477 = vpop.f32.mrf.mxu0
  %1478 = vdwg.mxu0
  %v1479 = vadd.f32 %v1408, %v1476
  %v1480 = vxor.u32 %v1263, 2147483648
  %v1481 = vmul.f32 %v1480, 1.442695
  %v1482 = vpow.pop %v1481
  %v1483 = vadd.f32 %v1482, 1.0
  %v1484 = vrcp.pop %v1483
  %v1485 = vmul.f32 1.0, %v1484
  %v1486 = vxor.u32 %v1335, 2147483648
  %v1487 = vmul.f32 %v1486, 1.442695
  %v1488 = vpow.pop %v1487
  %v1489 = vadd.f32 %v1488, 1.0
  %v1490 = vrcp.pop %v1489
  %v1491 = vmul.f32 1.0, %v1490
  %v1492 = vxor.u32 %v1479, 2147483648
  %v1493 = vmul.f32 %v1492, 1.442695
  %v1494 = vpow.pop %v1493
  %v1495 = vadd.f32 %v1494, 1.0
  %v1496 = vrcp.pop %v1495
  %v1497 = vmul.f32 1.0, %v1496
  %v1498 = vtanh.pop %v1407
  %v1499 = vmul.f32 %v1491, %v1186
  %v1500 = vmul.f32 %v1485, %v1498
  %v1501 = vadd.f32 %v1499, %v1500
  %v1502 = vtanh.pop %v1501
  %v1503 = vmul.f32 %v1497, %v1502
  %v1504 = vld [vmem:[#allocation2 + $0x18] sm:$0xff]
  %v1506 = vsel %vm162, %v1503, 0
  %1508 = vmatprep.subr.mxu0 0.0
  %1509 = vmatpush1.msra.mxu0 0.0
  %1510 = vmatprep.subr.mxu0 0.0
  %1511 = vmatpush1.msra.mxu0 0.0
  %1512 = vmatprep.subr.mxu0 0.0
  %1513 = vmatpush1.msra.mxu0 0.0
  %1514 = vmatprep.subr.mxu0 0.0
  %1515 = vmatpush1.msra.mxu0 0.0
  %1516 = vmatprep.subr.mxu0 0.0
  %1517 = vmatpush1.msra.mxu0 0.0
  %1518 = vmatprep.subr.mxu0 0.0
  %1519 = vmatpush1.msra.mxu0 0.0
  %1520 = vmatprep.subr.mxu0 0.0
  %1521 = vmatpush1.msra.mxu0 0.0
  %1522 = vmatprep.subr.mxu0 0.0
  %1523 = vmatpush1.msra.mxu0 0.0
  %1524 = vmatprep.subr.mxu0 0.0
  %1525 = vmatpush1.msra.mxu0 0.0
  %1526 = vmatprep.subr.mxu0 0.0
  %1527 = vmatpush1.msra.mxu0 0.0
  %1528 = vmatprep.subr.mxu0 0.0
  %1529 = vmatpush1.msra.mxu0 0.0
  %1530 = vmatprep.subr.mxu0 0.0
  %1531 = vmatpush1.msra.mxu0 0.0
  %1532 = vmatprep.subr.mxu0 0.0
  %1533 = vmatpush1.msra.mxu0 %v546
  %1534 = vmatprep.subr.mxu0 0.0
  %1535 = vmatpush1.msra.mxu0 %v545
  %1536 = vmatprep.subr.mxu0 0.0
  %1537 = vmatpush1.msra.mxu0 %v544
  %1538 = vmatprep.subr.mxu0 0.0
  %1539 = vmatpush1.msra.mxu0 %v543
  %1540 = vmatprep.subr.mxu0 0.0
  %1541 = vmatpush2.msra.mxu0 0.0
  %1542 = vmatprep.subr.mxu0 0.0
  %1543 = vmatpush2.msra.mxu0 0.0
  %1544 = vmatprep.subr.mxu0 0.0
  %1545 = vmatpush2.msra.mxu0 0.0
  %1546 = vmatprep.subr.mxu0 0.0
  %1547 = vmatpush2.msra.mxu0 0.0
  %1548 = vmatprep.subr.mxu0 0.0
  %1549 = vmatpush2.msra.mxu0 0.0
  %1550 = vmatprep.subr.mxu0 0.0
  %1551 = vmatpush2.msra.mxu0 0.0
  %1552 = vmatprep.subr.mxu0 0.0
  %1553 = vmatpush2.msra.mxu0 0.0
  %1554 = vmatprep.subr.mxu0 0.0
  %1555 = vmatpush2.msra.mxu0 0.0
  %1556 = vmatprep.subr.mxu0 0.0
  %1557 = vmatpush2.msra.mxu0 0.0
  %1558 = vmatprep.subr.mxu0 0.0
  %1559 = vmatpush2.msra.mxu0 0.0
  %1560 = vmatprep.subr.mxu0 0.0
  %1561 = vmatpush2.msra.mxu0 0.0
  %1562 = vmatprep.subr.mxu0 0.0
  %1563 = vmatpush2.msra.mxu0 0.0
  %1564 = vmatprep.subr.mxu0 0.0
  %1565 = vmatpush2.msra.mxu0 0.0
  %1566 = vmatprep.subr.mxu0 0.0
  %1567 = vmatpush2.msra.mxu0 0.0
  %1568 = vmatprep.subr.mxu0 0.0
  %1569 = vmatpush2.msra.mxu0 0.0
  %1570 = vmatprep.subr.mxu0 0.0
  %1571 = vmatpush2.msra.mxu0 0.0
  %1572 = vmatprep.mubr.f32.mxu0 0.0
  %1573 = vmatmul.mubr.f32.gmra.mxu0 %v1506
  %v1574 = vpop.f32.mrf.mxu0
  %v1575 = vadd.f32 0.0, %v1574
  %v1576 = vpop.f32.mrf.mxu0
  %1577 = vdwg.mxu0
  %v1578 = vadd.f32 %v1504, %v1575
  %v1579 = vld [vmem:[%s286 + $0x18] sm:$0xff]
  %1580 = vmatprep.subr.mxu0 0.0
  %1581 = vmatpush1.msra.mxu0 0.0
  %1582 = vmatprep.subr.mxu0 0.0
  %1583 = vmatpush1.msra.mxu0 0.0
  %1584 = vmatprep.subr.mxu0 0.0
  %1585 = vmatpush1.msra.mxu0 0.0
  %1586 = vmatprep.subr.mxu0 0.0
  %1587 = vmatpush1.msra.mxu0 0.0
  %1588 = vmatprep.subr.mxu0 0.0
  %1589 = vmatpush1.msra.mxu0 0.0
  %1590 = vmatprep.subr.mxu0 0.0
  %1591 = vmatpush1.msra.mxu0 0.0
  %1592 = vmatprep.subr.mxu0 0.0
  %1593 = vmatpush1.msra.mxu0 0.0
  %1594 = vmatprep.subr.mxu0 0.0
  %1595 = vmatpush1.msra.mxu0 0.0
  %1596 = vmatprep.subr.mxu0 0.0
  %1597 = vmatpush1.msra.mxu0 0.0
  %1598 = vmatprep.subr.mxu0 0.0
  %1599 = vmatpush1.msra.mxu0 0.0
  %1600 = vmatprep.subr.mxu0 0.0
  %1601 = vmatpush1.msra.mxu0 0.0
  %1602 = vmatprep.subr.mxu0 0.0
  %1603 = vmatpush1.msra.mxu0 0.0
  %1604 = vmatprep.subr.mxu0 0.0
  %1605 = vmatpush1.msra.mxu0 %v550
  %1606 = vmatprep.subr.mxu0 0.0
  %1607 = vmatpush1.msra.mxu0 %v549
  %1608 = vmatprep.subr.mxu0 0.0
  %1609 = vmatpush1.msra.mxu0 %v548
  %1610 = vmatprep.subr.mxu0 0.0
  %1611 = vmatpush1.msra.mxu0 %v547
  %1612 = vmatprep.subr.mxu0 0.0
  %1613 = vmatpush2.msra.mxu0 0.0
  %1614 = vmatprep.subr.mxu0 0.0
  %1615 = vmatpush2.msra.mxu0 0.0
  %1616 = vmatprep.subr.mxu0 0.0
  %1617 = vmatpush2.msra.mxu0 0.0
  %1618 = vmatprep.subr.mxu0 0.0
  %1619 = vmatpush2.msra.mxu0 0.0
  %1620 = vmatprep.subr.mxu0 0.0
  %1621 = vmatpush2.msra.mxu0 0.0
  %1622 = vmatprep.subr.mxu0 0.0
  %1623 = vmatpush2.msra.mxu0 0.0
  %1624 = vmatprep.subr.mxu0 0.0
  %1625 = vmatpush2.msra.mxu0 0.0
  %1626 = vmatprep.subr.mxu0 0.0
  %1627 = vmatpush2.msra.mxu0 0.0
  %1628 = vmatprep.subr.mxu0 0.0
  %1629 = vmatpush2.msra.mxu0 0.0
  %1630 = vmatprep.subr.mxu0 0.0
  %1631 = vmatpush2.msra.mxu0 0.0
  %1632 = vmatprep.subr.mxu0 0.0
  %1633 = vmatpush2.msra.mxu0 0.0
  %1634 = vmatprep.subr.mxu0 0.0
  %1635 = vmatpush2.msra.mxu0 0.0
  %1636 = vmatprep.subr.mxu0 0.0
  %1637 = vmatpush2.msra.mxu0 0.0
  %1638 = vmatprep.subr.mxu0 0.0
  %1639 = vmatpush2.msra.mxu0 0.0
  %1640 = vmatprep.subr.mxu0 0.0
  %1641 = vmatpush2.msra.mxu0 0.0
  %1642 = vmatprep.subr.mxu0 0.0
  %1643 = vmatpush2.msra.mxu0 0.0
  %1644 = vmatprep.mubr.f32.mxu0 0.0
  %1645 = vmatmul.mubr.f32.gmra.mxu0 %v1506
  %v1646 = vpop.f32.mrf.mxu0
  %v1647 = vadd.f32 0.0, %v1646
  %v1648 = vpop.f32.mrf.mxu0
  %1649 = vdwg.mxu0
  %v1650 = vadd.f32 %v1579, %v1647
  %v1651 = vld [vmem:[%s410 + $0x18] sm:$0xff]
  %1652 = vmatprep.subr.mxu0 0.0
  %1653 = vmatpush1.msra.mxu0 0.0
  %1654 = vmatprep.subr.mxu0 0.0
  %1655 = vmatpush1.msra.mxu0 0.0
  %1656 = vmatprep.subr.mxu0 0.0
  %1657 = vmatpush1.msra.mxu0 0.0
  %1658 = vmatprep.subr.mxu0 0.0
  %1659 = vmatpush1.msra.mxu0 0.0
  %1660 = vmatprep.subr.mxu0 0.0
  %1661 = vmatpush1.msra.mxu0 0.0
  %1662 = vmatprep.subr.mxu0 0.0
  %1663 = vmatpush1.msra.mxu0 0.0
  %1664 = vmatprep.subr.mxu0 0.0
  %1665 = vmatpush1.msra.mxu0 0.0
  %1666 = vmatprep.subr.mxu0 0.0
  %1667 = vmatpush1.msra.mxu0 0.0
  %1668 = vmatprep.subr.mxu0 0.0
  %1669 = vmatpush1.msra.mxu0 0.0
  %1670 = vmatprep.subr.mxu0 0.0
  %1671 = vmatpush1.msra.mxu0 0.0
  %1672 = vmatprep.subr.mxu0 0.0
  %1673 = vmatpush1.msra.mxu0 0.0
  %1674 = vmatprep.subr.mxu0 0.0
  %1675 = vmatpush1.msra.mxu0 0.0
  %1676 = vmatprep.subr.mxu0 0.0
  %1677 = vmatpush1.msra.mxu0 %v554
  %1678 = vmatprep.subr.mxu0 0.0
  %1679 = vmatpush1.msra.mxu0 %v553
  %1680 = vmatprep.subr.mxu0 0.0
  %1681 = vmatpush1.msra.mxu0 %v552
  %1682 = vmatprep.subr.mxu0 0.0
  %1683 = vmatpush1.msra.mxu0 %v551
  %1684 = vmatprep.subr.mxu0 0.0
  %1685 = vmatpush2.msra.mxu0 0.0
  %1686 = vmatprep.subr.mxu0 0.0
  %1687 = vmatpush2.msra.mxu0 0.0
  %1688 = vmatprep.subr.mxu0 0.0
  %1689 = vmatpush2.msra.mxu0 0.0
  %1690 = vmatprep.subr.mxu0 0.0
  %1691 = vmatpush2.msra.mxu0 0.0
  %1692 = vmatprep.subr.mxu0 0.0
  %1693 = vmatpush2.msra.mxu0 0.0
  %1694 = vmatprep.subr.mxu0 0.0
  %1695 = vmatpush2.msra.mxu0 0.0
  %1696 = vmatprep.subr.mxu0 0.0
  %1697 = vmatpush2.msra.mxu0 0.0
  %1698 = vmatprep.subr.mxu0 0.0
  %1699 = vmatpush2.msra.mxu0 0.0
  %1700 = vmatprep.subr.mxu0 0.0
  %1701 = vmatpush2.msra.mxu0 0.0
  %1702 = vmatprep.subr.mxu0 0.0
  %1703 = vmatpush2.msra.mxu0 0.0
  %1704 = vmatprep.subr.mxu0 0.0
  %1705 = vmatpush2.msra.mxu0 0.0
  %1706 = vmatprep.subr.mxu0 0.0
  %1707 = vmatpush2.msra.mxu0 0.0
  %1708 = vmatprep.subr.mxu0 0.0
  %1709 = vmatpush2.msra.mxu0 0.0
  %1710 = vmatprep.subr.mxu0 0.0
  %1711 = vmatpush2.msra.mxu0 0.0
  %1712 = vmatprep.subr.mxu0 0.0
  %1713 = vmatpush2.msra.mxu0 0.0
  %1714 = vmatprep.subr.mxu0 0.0
  %1715 = vmatpush2.msra.mxu0 0.0
  %1716 = vmatprep.mubr.f32.mxu0 0.0
  %1717 = vmatmul.mubr.f32.gmra.mxu0 %v1506
  %v1718 = vpop.f32.mrf.mxu0
  %v1719 = vadd.f32 0.0, %v1718
  %v1720 = vpop.f32.mrf.mxu0
  %1721 = vdwg.mxu0
  %v1722 = vadd.f32 %v1651, %v1719
  %v1723 = vld [vmem:[%s534 + $0x18] sm:$0xff]
  %1724 = vmatprep.subr.mxu0 0.0
  %1725 = vmatpush1.msra.mxu0 0.0
  %1726 = vmatprep.subr.mxu0 0.0
  %1727 = vmatpush1.msra.mxu0 0.0
  %1728 = vmatprep.subr.mxu0 0.0
  %1729 = vmatpush1.msra.mxu0 0.0
  %1730 = vmatprep.subr.mxu0 0.0
  %1731 = vmatpush1.msra.mxu0 0.0
  %1732 = vmatprep.subr.mxu0 0.0
  %1733 = vmatpush1.msra.mxu0 0.0
  %1734 = vmatprep.subr.mxu0 0.0
  %1735 = vmatpush1.msra.mxu0 0.0
  %1736 = vmatprep.subr.mxu0 0.0
  %1737 = vmatpush1.msra.mxu0 0.0
  %1738 = vmatprep.subr.mxu0 0.0
  %1739 = vmatpush1.msra.mxu0 0.0
  %1740 = vmatprep.subr.mxu0 0.0
  %1741 = vmatpush1.msra.mxu0 0.0
  %1742 = vmatprep.subr.mxu0 0.0
  %1743 = vmatpush1.msra.mxu0 0.0
  %1744 = vmatprep.subr.mxu0 0.0
  %1745 = vmatpush1.msra.mxu0 0.0
  %1746 = vmatprep.subr.mxu0 0.0
  %1747 = vmatpush1.msra.mxu0 0.0
  %1748 = vmatprep.subr.mxu0 0.0
  %1749 = vmatpush1.msra.mxu0 %v558
  %1750 = vmatprep.subr.mxu0 0.0
  %1751 = vmatpush1.msra.mxu0 %v557
  %1752 = vmatprep.subr.mxu0 0.0
  %1753 = vmatpush1.msra.mxu0 %v556
  %1754 = vmatprep.subr.mxu0 0.0
  %1755 = vmatpush1.msra.mxu0 %v555
  %1756 = vmatprep.subr.mxu0 0.0
  %1757 = vmatpush2.msra.mxu0 0.0
  %1758 = vmatprep.subr.mxu0 0.0
  %1759 = vmatpush2.msra.mxu0 0.0
  %1760 = vmatprep.subr.mxu0 0.0
  %1761 = vmatpush2.msra.mxu0 0.0
  %1762 = vmatprep.subr.mxu0 0.0
  %1763 = vmatpush2.msra.mxu0 0.0
  %1764 = vmatprep.subr.mxu0 0.0
  %1765 = vmatpush2.msra.mxu0 0.0
  %1766 = vmatprep.subr.mxu0 0.0
  %1767 = vmatpush2.msra.mxu0 0.0
  %1768 = vmatprep.subr.mxu0 0.0
  %1769 = vmatpush2.msra.mxu0 0.0
  %1770 = vmatprep.subr.mxu0 0.0
  %1771 = vmatpush2.msra.mxu0 0.0
  %1772 = vmatprep.subr.mxu0 0.0
  %1773 = vmatpush2.msra.mxu0 0.0
  %1774 = vmatprep.subr.mxu0 0.0
  %1775 = vmatpush2.msra.mxu0 0.0
  %1776 = vmatprep.subr.mxu0 0.0
  %1777 = vmatpush2.msra.mxu0 0.0
  %1778 = vmatprep.subr.mxu0 0.0
  %1779 = vmatpush2.msra.mxu0 0.0
  %1780 = vmatprep.subr.mxu0 0.0
  %1781 = vmatpush2.msra.mxu0 0.0
  %1782 = vmatprep.subr.mxu0 0.0
  %1783 = vmatpush2.msra.mxu0 0.0
  %1784 = vmatprep.subr.mxu0 0.0
  %1785 = vmatpush2.msra.mxu0 0.0
  %1786 = vmatprep.subr.mxu0 0.0
  %1787 = vmatpush2.msra.mxu0 0.0
  %1788 = vmatprep.mubr.f32.mxu0 0.0
  %1789 = vmatmul.mubr.f32.gmra.mxu0 %v1506
  %v1790 = vpop.f32.mrf.mxu0
  %v1791 = vadd.f32 0.0, %v1790
  %v1792 = vpop.f32.mrf.mxu0
  %1793 = vdwg.mxu0
  %v1794 = vadd.f32 %v1723, %v1791
  %v1795 = vxor.u32 %v1578, 2147483648
  %v1796 = vmul.f32 %v1795, 1.442695
  %v1797 = vpow.pop %v1796
  %v1798 = vadd.f32 %v1797, 1.0
  %v1799 = vrcp.pop %v1798
  %v1800 = vmul.f32 1.0, %v1799
  %v1801 = vxor.u32 %v1650, 2147483648
  %v1802 = vmul.f32 %v1801, 1.442695
  %v1803 = vpow.pop %v1802
  %v1804 = vadd.f32 %v1803, 1.0
  %v1805 = vrcp.pop %v1804
  %v1806 = vmul.f32 1.0, %v1805
  %v1807 = vxor.u32 %v1794, 2147483648
  %v1808 = vmul.f32 %v1807, 1.442695
  %v1809 = vpow.pop %v1808
  %v1810 = vadd.f32 %v1809, 1.0
  %v1811 = vrcp.pop %v1810
  %v1812 = vmul.f32 1.0, %v1811
  %v1813 = vtanh.pop %v1722
  %v1814 = vmul.f32 %v1806, %v1501
  %v1815 = vmul.f32 %v1800, %v1813
  %v1816 = vadd.f32 %v1814, %v1815
  %v1817 = vtanh.pop %v1816
  %v1818 = vmul.f32 %v1812, %v1817
  %v1819 = vld [vmem:[#allocation2 + $0x20] sm:$0xff]
  %v1821 = vsel %vm162, %v1818, 0
  %1823 = vmatprep.subr.mxu0 0.0
  %1824 = vmatpush1.msra.mxu0 0.0
  %1825 = vmatprep.subr.mxu0 0.0
  %1826 = vmatpush1.msra.mxu0 0.0
  %1827 = vmatprep.subr.mxu0 0.0
  %1828 = vmatpush1.msra.mxu0 0.0
  %1829 = vmatprep.subr.mxu0 0.0
  %1830 = vmatpush1.msra.mxu0 0.0
  %1831 = vmatprep.subr.mxu0 0.0
  %1832 = vmatpush1.msra.mxu0 0.0
  %1833 = vmatprep.subr.mxu0 0.0
  %1834 = vmatpush1.msra.mxu0 0.0
  %1835 = vmatprep.subr.mxu0 0.0
  %1836 = vmatpush1.msra.mxu0 0.0
  %1837 = vmatprep.subr.mxu0 0.0
  %1838 = vmatpush1.msra.mxu0 0.0
  %1839 = vmatprep.subr.mxu0 0.0
  %1840 = vmatpush1.msra.mxu0 0.0
  %1841 = vmatprep.subr.mxu0 0.0
  %1842 = vmatpush1.msra.mxu0 0.0
  %1843 = vmatprep.subr.mxu0 0.0
  %1844 = vmatpush1.msra.mxu0 0.0
  %1845 = vmatprep.subr.mxu0 0.0
  %1846 = vmatpush1.msra.mxu0 0.0
  %1847 = vmatprep.subr.mxu0 0.0
  %1848 = vmatpush1.msra.mxu0 %v546
  %1849 = vmatprep.subr.mxu0 0.0
  %1850 = vmatpush1.msra.mxu0 %v545
  %1851 = vmatprep.subr.mxu0 0.0
  %1852 = vmatpush1.msra.mxu0 %v544
  %1853 = vmatprep.subr.mxu0 0.0
  %1854 = vmatpush1.msra.mxu0 %v543
  %1855 = vmatprep.subr.mxu0 0.0
  %1856 = vmatpush2.msra.mxu0 0.0
  %1857 = vmatprep.subr.mxu0 0.0
  %1858 = vmatpush2.msra.mxu0 0.0
  %1859 = vmatprep.subr.mxu0 0.0
  %1860 = vmatpush2.msra.mxu0 0.0
  %1861 = vmatprep.subr.mxu0 0.0
  %1862 = vmatpush2.msra.mxu0 0.0
  %1863 = vmatprep.subr.mxu0 0.0
  %1864 = vmatpush2.msra.mxu0 0.0
  %1865 = vmatprep.subr.mxu0 0.0
  %1866 = vmatpush2.msra.mxu0 0.0
  %1867 = vmatprep.subr.mxu0 0.0
  %1868 = vmatpush2.msra.mxu0 0.0
  %1869 = vmatprep.subr.mxu0 0.0
  %1870 = vmatpush2.msra.mxu0 0.0
  %1871 = vmatprep.subr.mxu0 0.0
  %1872 = vmatpush2.msra.mxu0 0.0
  %1873 = vmatprep.subr.mxu0 0.0
  %1874 = vmatpush2.msra.mxu0 0.0
  %1875 = vmatprep.subr.mxu0 0.0
  %1876 = vmatpush2.msra.mxu0 0.0
  %1877 = vmatprep.subr.mxu0 0.0
  %1878 = vmatpush2.msra.mxu0 0.0
  %1879 = vmatprep.subr.mxu0 0.0
  %1880 = vmatpush2.msra.mxu0 0.0
  %1881 = vmatprep.subr.mxu0 0.0
  %1882 = vmatpush2.msra.mxu0 0.0
  %1883 = vmatprep.subr.mxu0 0.0
  %1884 = vmatpush2.msra.mxu0 0.0
  %1885 = vmatprep.subr.mxu0 0.0
  %1886 = vmatpush2.msra.mxu0 0.0
  %1887 = vmatprep.mubr.f32.mxu0 0.0
  %1888 = vmatmul.mubr.f32.gmra.mxu0 %v1821
  %v1889 = vpop.f32.mrf.mxu0
  %v1890 = vadd.f32 0.0, %v1889
  %v1891 = vpop.f32.mrf.mxu0
  %1892 = vdwg.mxu0
  %v1893 = vadd.f32 %v1819, %v1890
  %v1894 = vld [vmem:[%s286 + $0x20] sm:$0xff]
  %1895 = vmatprep.subr.mxu0 0.0
  %1896 = vmatpush1.msra.mxu0 0.0
  %1897 = vmatprep.subr.mxu0 0.0
  %1898 = vmatpush1.msra.mxu0 0.0
  %1899 = vmatprep.subr.mxu0 0.0
  %1900 = vmatpush1.msra.mxu0 0.0
  %1901 = vmatprep.subr.mxu0 0.0
  %1902 = vmatpush1.msra.mxu0 0.0
  %1903 = vmatprep.subr.mxu0 0.0
  %1904 = vmatpush1.msra.mxu0 0.0
  %1905 = vmatprep.subr.mxu0 0.0
  %1906 = vmatpush1.msra.mxu0 0.0
  %1907 = vmatprep.subr.mxu0 0.0
  %1908 = vmatpush1.msra.mxu0 0.0
  %1909 = vmatprep.subr.mxu0 0.0
  %1910 = vmatpush1.msra.mxu0 0.0
  %1911 = vmatprep.subr.mxu0 0.0
  %1912 = vmatpush1.msra.mxu0 0.0
  %1913 = vmatprep.subr.mxu0 0.0
  %1914 = vmatpush1.msra.mxu0 0.0
  %1915 = vmatprep.subr.mxu0 0.0
  %1916 = vmatpush1.msra.mxu0 0.0
  %1917 = vmatprep.subr.mxu0 0.0
  %1918 = vmatpush1.msra.mxu0 0.0
  %1919 = vmatprep.subr.mxu0 0.0
  %1920 = vmatpush1.msra.mxu0 %v550
  %1921 = vmatprep.subr.mxu0 0.0
  %1922 = vmatpush1.msra.mxu0 %v549
  %1923 = vmatprep.subr.mxu0 0.0
  %1924 = vmatpush1.msra.mxu0 %v548
  %1925 = vmatprep.subr.mxu0 0.0
  %1926 = vmatpush1.msra.mxu0 %v547
  %1927 = vmatprep.subr.mxu0 0.0
  %1928 = vmatpush2.msra.mxu0 0.0
  %1929 = vmatprep.subr.mxu0 0.0
  %1930 = vmatpush2.msra.mxu0 0.0
  %1931 = vmatprep.subr.mxu0 0.0
  %1932 = vmatpush2.msra.mxu0 0.0
  %1933 = vmatprep.subr.mxu0 0.0
  %1934 = vmatpush2.msra.mxu0 0.0
  %1935 = vmatprep.subr.mxu0 0.0
  %1936 = vmatpush2.msra.mxu0 0.0
  %1937 = vmatprep.subr.mxu0 0.0
  %1938 = vmatpush2.msra.mxu0 0.0
  %1939 = vmatprep.subr.mxu0 0.0
  %1940 = vmatpush2.msra.mxu0 0.0
  %1941 = vmatprep.subr.mxu0 0.0
  %1942 = vmatpush2.msra.mxu0 0.0
  %1943 = vmatprep.subr.mxu0 0.0
  %1944 = vmatpush2.msra.mxu0 0.0
  %1945 = vmatprep.subr.mxu0 0.0
  %1946 = vmatpush2.msra.mxu0 0.0
  %1947 = vmatprep.subr.mxu0 0.0
  %1948 = vmatpush2.msra.mxu0 0.0
  %1949 = vmatprep.subr.mxu0 0.0
  %1950 = vmatpush2.msra.mxu0 0.0
  %1951 = vmatprep.subr.mxu0 0.0
  %1952 = vmatpush2.msra.mxu0 0.0
  %1953 = vmatprep.subr.mxu0 0.0
  %1954 = vmatpush2.msra.mxu0 0.0
  %1955 = vmatprep.subr.mxu0 0.0
  %1956 = vmatpush2.msra.mxu0 0.0
  %1957 = vmatprep.subr.mxu0 0.0
  %1958 = vmatpush2.msra.mxu0 0.0
  %1959 = vmatprep.mubr.f32.mxu0 0.0
  %1960 = vmatmul.mubr.f32.gmra.mxu0 %v1821
  %v1961 = vpop.f32.mrf.mxu0
  %v1962 = vadd.f32 0.0, %v1961
  %v1963 = vpop.f32.mrf.mxu0
  %1964 = vdwg.mxu0
  %v1965 = vadd.f32 %v1894, %v1962
  %v1966 = vld [vmem:[%s410 + $0x20] sm:$0xff]
  %1967 = vmatprep.subr.mxu0 0.0
  %1968 = vmatpush1.msra.mxu0 0.0
  %1969 = vmatprep.subr.mxu0 0.0
  %1970 = vmatpush1.msra.mxu0 0.0
  %1971 = vmatprep.subr.mxu0 0.0
  %1972 = vmatpush1.msra.mxu0 0.0
  %1973 = vmatprep.subr.mxu0 0.0
  %1974 = vmatpush1.msra.mxu0 0.0
  %1975 = vmatprep.subr.mxu0 0.0
  %1976 = vmatpush1.msra.mxu0 0.0
  %1977 = vmatprep.subr.mxu0 0.0
  %1978 = vmatpush1.msra.mxu0 0.0
  %1979 = vmatprep.subr.mxu0 0.0
  %1980 = vmatpush1.msra.mxu0 0.0
  %1981 = vmatprep.subr.mxu0 0.0
  %1982 = vmatpush1.msra.mxu0 0.0
  %1983 = vmatprep.subr.mxu0 0.0
  %1984 = vmatpush1.msra.mxu0 0.0
  %1985 = vmatprep.subr.mxu0 0.0
  %1986 = vmatpush1.msra.mxu0 0.0
  %1987 = vmatprep.subr.mxu0 0.0
  %1988 = vmatpush1.msra.mxu0 0.0
  %1989 = vmatprep.subr.mxu0 0.0
  %1990 = vmatpush1.msra.mxu0 0.0
  %1991 = vmatprep.subr.mxu0 0.0
  %1992 = vmatpush1.msra.mxu0 %v554
  %1993 = vmatprep.subr.mxu0 0.0
  %1994 = vmatpush1.msra.mxu0 %v553
  %1995 = vmatprep.subr.mxu0 0.0
  %1996 = vmatpush1.msra.mxu0 %v552
  %1997 = vmatprep.subr.mxu0 0.0
  %1998 = vmatpush1.msra.mxu0 %v551
  %1999 = vmatprep.subr.mxu0 0.0
  %2000 = vmatpush2.msra.mxu0 0.0
  %2001 = vmatprep.subr.mxu0 0.0
  %2002 = vmatpush2.msra.mxu0 0.0
  %2003 = vmatprep.subr.mxu0 0.0
  %2004 = vmatpush2.msra.mxu0 0.0
  %2005 = vmatprep.subr.mxu0 0.0
  %2006 = vmatpush2.msra.mxu0 0.0
  %2007 = vmatprep.subr.mxu0 0.0
  %2008 = vmatpush2.msra.mxu0 0.0
  %2009 = vmatprep.subr.mxu0 0.0
  %2010 = vmatpush2.msra.mxu0 0.0
  %2011 = vmatprep.subr.mxu0 0.0
  %2012 = vmatpush2.msra.mxu0 0.0
  %2013 = vmatprep.subr.mxu0 0.0
  %2014 = vmatpush2.msra.mxu0 0.0
  %2015 = vmatprep.subr.mxu0 0.0
  %2016 = vmatpush2.msra.mxu0 0.0
  %2017 = vmatprep.subr.mxu0 0.0
  %2018 = vmatpush2.msra.mxu0 0.0
  %2019 = vmatprep.subr.mxu0 0.0
  %2020 = vmatpush2.msra.mxu0 0.0
  %2021 = vmatprep.subr.mxu0 0.0
  %2022 = vmatpush2.msra.mxu0 0.0
  %2023 = vmatprep.subr.mxu0 0.0
  %2024 = vmatpush2.msra.mxu0 0.0
  %2025 = vmatprep.subr.mxu0 0.0
  %2026 = vmatpush2.msra.mxu0 0.0
  %2027 = vmatprep.subr.mxu0 0.0
  %2028 = vmatpush2.msra.mxu0 0.0
  %2029 = vmatprep.subr.mxu0 0.0
  %2030 = vmatpush2.msra.mxu0 0.0
  %2031 = vmatprep.mubr.f32.mxu0 0.0
  %2032 = vmatmul.mubr.f32.gmra.mxu0 %v1821
  %v2033 = vpop.f32.mrf.mxu0
  %v2034 = vadd.f32 0.0, %v2033
  %v2035 = vpop.f32.mrf.mxu0
  %2036 = vdwg.mxu0
  %v2037 = vadd.f32 %v1966, %v2034
  %v2038 = vld [vmem:[%s534 + $0x20] sm:$0xff]
  %2039 = vmatprep.subr.mxu0 0.0
  %2040 = vmatpush1.msra.mxu0 0.0
  %2041 = vmatprep.subr.mxu0 0.0
  %2042 = vmatpush1.msra.mxu0 0.0
  %2043 = vmatprep.subr.mxu0 0.0
  %2044 = vmatpush1.msra.mxu0 0.0
  %2045 = vmatprep.subr.mxu0 0.0
  %2046 = vmatpush1.msra.mxu0 0.0
  %2047 = vmatprep.subr.mxu0 0.0
  %2048 = vmatpush1.msra.mxu0 0.0
  %2049 = vmatprep.subr.mxu0 0.0
  %2050 = vmatpush1.msra.mxu0 0.0
  %2051 = vmatprep.subr.mxu0 0.0
  %2052 = vmatpush1.msra.mxu0 0.0
  %2053 = vmatprep.subr.mxu0 0.0
  %2054 = vmatpush1.msra.mxu0 0.0
  %2055 = vmatprep.subr.mxu0 0.0
  %2056 = vmatpush1.msra.mxu0 0.0
  %2057 = vmatprep.subr.mxu0 0.0
  %2058 = vmatpush1.msra.mxu0 0.0
  %2059 = vmatprep.subr.mxu0 0.0
  %2060 = vmatpush1.msra.mxu0 0.0
  %2061 = vmatprep.subr.mxu0 0.0
  %2062 = vmatpush1.msra.mxu0 0.0
  %2063 = vmatprep.subr.mxu0 0.0
  %2064 = vmatpush1.msra.mxu0 %v558
  %2065 = vmatprep.subr.mxu0 0.0
  %2066 = vmatpush1.msra.mxu0 %v557
  %2067 = vmatprep.subr.mxu0 0.0
  %2068 = vmatpush1.msra.mxu0 %v556
  %2069 = vmatprep.subr.mxu0 0.0
  %2070 = vmatpush1.msra.mxu0 %v555
  %2071 = vmatprep.subr.mxu0 0.0
  %2072 = vmatpush2.msra.mxu0 0.0
  %2073 = vmatprep.subr.mxu0 0.0
  %2074 = vmatpush2.msra.mxu0 0.0
  %2075 = vmatprep.subr.mxu0 0.0
  %2076 = vmatpush2.msra.mxu0 0.0
  %2077 = vmatprep.subr.mxu0 0.0
  %2078 = vmatpush2.msra.mxu0 0.0
  %2079 = vmatprep.subr.mxu0 0.0
  %2080 = vmatpush2.msra.mxu0 0.0
  %2081 = vmatprep.subr.mxu0 0.0
  %2082 = vmatpush2.msra.mxu0 0.0
  %2083 = vmatprep.subr.mxu0 0.0
  %2084 = vmatpush2.msra.mxu0 0.0
  %2085 = vmatprep.subr.mxu0 0.0
  %2086 = vmatpush2.msra.mxu0 0.0
  %2087 = vmatprep.subr.mxu0 0.0
  %2088 = vmatpush2.msra.mxu0 0.0
  %2089 = vmatprep.subr.mxu0 0.0
  %2090 = vmatpush2.msra.mxu0 0.0
  %2091 = vmatprep.subr.mxu0 0.0
  %2092 = vmatpush2.msra.mxu0 0.0
  %2093 = vmatprep.subr.mxu0 0.0
  %2094 = vmatpush2.msra.mxu0 0.0
  %2095 = vmatprep.subr.mxu0 0.0
  %2096 = vmatpush2.msra.mxu0 0.0
  %2097 = vmatprep.subr.mxu0 0.0
  %2098 = vmatpush2.msra.mxu0 0.0
  %2099 = vmatprep.subr.mxu0 0.0
  %2100 = vmatpush2.msra.mxu0 0.0
  %2101 = vmatprep.subr.mxu0 0.0
  %2102 = vmatpush2.msra.mxu0 0.0
  %2103 = vmatprep.mubr.f32.mxu0 0.0
  %2104 = vmatmul.mubr.f32.gmra.mxu0 %v1821
  %v2105 = vpop.f32.mrf.mxu0
  %v2106 = vadd.f32 0.0, %v2105
  %v2107 = vpop.f32.mrf.mxu0
  %2108 = vdwg.mxu0
  %v2109 = vadd.f32 %v2038, %v2106
  %v2110 = vxor.u32 %v1893, 2147483648
  %v2111 = vmul.f32 %v2110, 1.442695
  %v2112 = vpow.pop %v2111
  %v2113 = vadd.f32 %v2112, 1.0
  %v2114 = vrcp.pop %v2113
  %v2115 = vmul.f32 1.0, %v2114
  %v2116 = vxor.u32 %v1965, 2147483648
  %v2117 = vmul.f32 %v2116, 1.442695
  %v2118 = vpow.pop %v2117
  %v2119 = vadd.f32 %v2118, 1.0
  %v2120 = vrcp.pop %v2119
  %v2121 = vmul.f32 1.0, %v2120
  %v2122 = vxor.u32 %v2109, 2147483648
  %v2123 = vmul.f32 %v2122, 1.442695
  %v2124 = vpow.pop %v2123
  %v2125 = vadd.f32 %v2124, 1.0
  %v2126 = vrcp.pop %v2125
  %v2127 = vmul.f32 1.0, %v2126
  %v2128 = vtanh.pop %v2037
  %v2129 = vmul.f32 %v2121, %v1816
  %v2130 = vmul.f32 %v2115, %v2128
  %v2131 = vadd.f32 %v2129, %v2130
  %v2132 = vtanh.pop %v2131
  %v2133 = vmul.f32 %v2127, %v2132
  %v2134 = vld [vmem:[#allocation2 + $0x28] sm:$0xff]
  %v2136 = vsel %vm162, %v2133, 0
  %2138 = vmatprep.subr.mxu0 0.0
  %2139 = vmatpush1.msra.mxu0 0.0
  %2140 = vmatprep.subr.mxu0 0.0
  %2141 = vmatpush1.msra.mxu0 0.0
  %2142 = vmatprep.subr.mxu0 0.0
  %2143 = vmatpush1.msra.mxu0 0.0
  %2144 = vmatprep.subr.mxu0 0.0
  %2145 = vmatpush1.msra.mxu0 0.0
  %2146 = vmatprep.subr.mxu0 0.0
  %2147 = vmatpush1.msra.mxu0 0.0
  %2148 = vmatprep.subr.mxu0 0.0
  %2149 = vmatpush1.msra.mxu0 0.0
  %2150 = vmatprep.subr.mxu0 0.0
  %2151 = vmatpush1.msra.mxu0 0.0
  %2152 = vmatprep.subr.mxu0 0.0
  %2153 = vmatpush1.msra.mxu0 0.0
  %2154 = vmatprep.subr.mxu0 0.0
  %2155 = vmatpush1.msra.mxu0 0.0
  %2156 = vmatprep.subr.mxu0 0.0
  %2157 = vmatpush1.msra.mxu0 0.0
  %2158 = vmatprep.subr.mxu0 0.0
  %2159 = vmatpush1.msra.mxu0 0.0
  %2160 = vmatprep.subr.mxu0 0.0
  %2161 = vmatpush1.msra.mxu0 0.0
  %2162 = vmatprep.subr.mxu0 0.0
  %2163 = vmatpush1.msra.mxu0 %v546
  %2164 = vmatprep.subr.mxu0 0.0
  %2165 = vmatpush1.msra.mxu0 %v545
  %2166 = vmatprep.subr.mxu0 0.0
  %2167 = vmatpush1.msra.mxu0 %v544
  %2168 = vmatprep.subr.mxu0 0.0
  %2169 = vmatpush1.msra.mxu0 %v543
  %2170 = vmatprep.subr.mxu0 0.0
  %2171 = vmatpush2.msra.mxu0 0.0
  %2172 = vmatprep.subr.mxu0 0.0
  %2173 = vmatpush2.msra.mxu0 0.0
  %2174 = vmatprep.subr.mxu0 0.0
  %2175 = vmatpush2.msra.mxu0 0.0
  %2176 = vmatprep.subr.mxu0 0.0
  %2177 = vmatpush2.msra.mxu0 0.0
  %2178 = vmatprep.subr.mxu0 0.0
  %2179 = vmatpush2.msra.mxu0 0.0
  %2180 = vmatprep.subr.mxu0 0.0
  %2181 = vmatpush2.msra.mxu0 0.0
  %2182 = vmatprep.subr.mxu0 0.0
  %2183 = vmatpush2.msra.mxu0 0.0
  %2184 = vmatprep.subr.mxu0 0.0
  %2185 = vmatpush2.msra.mxu0 0.0
  %2186 = vmatprep.subr.mxu0 0.0
  %2187 = vmatpush2.msra.mxu0 0.0
  %2188 = vmatprep.subr.mxu0 0.0
  %2189 = vmatpush2.msra.mxu0 0.0
  %2190 = vmatprep.subr.mxu0 0.0
  %2191 = vmatpush2.msra.mxu0 0.0
  %2192 = vmatprep.subr.mxu0 0.0
  %2193 = vmatpush2.msra.mxu0 0.0
  %2194 = vmatprep.subr.mxu0 0.0
  %2195 = vmatpush2.msra.mxu0 0.0
  %2196 = vmatprep.subr.mxu0 0.0
  %2197 = vmatpush2.msra.mxu0 0.0
  %2198 = vmatprep.subr.mxu0 0.0
  %2199 = vmatpush2.msra.mxu0 0.0
  %2200 = vmatprep.subr.mxu0 0.0
  %2201 = vmatpush2.msra.mxu0 0.0
  %2202 = vmatprep.mubr.f32.mxu0 0.0
  %2203 = vmatmul.mubr.f32.gmra.mxu0 %v2136
  %v2204 = vpop.f32.mrf.mxu0
  %v2205 = vadd.f32 0.0, %v2204
  %v2206 = vpop.f32.mrf.mxu0
  %2207 = vdwg.mxu0
  %v2208 = vadd.f32 %v2134, %v2205
  %v2209 = vld [vmem:[%s286 + $0x28] sm:$0xff]
  %2210 = vmatprep.subr.mxu0 0.0
  %2211 = vmatpush1.msra.mxu0 0.0
  %2212 = vmatprep.subr.mxu0 0.0
  %2213 = vmatpush1.msra.mxu0 0.0
  %2214 = vmatprep.subr.mxu0 0.0
  %2215 = vmatpush1.msra.mxu0 0.0
  %2216 = vmatprep.subr.mxu0 0.0
  %2217 = vmatpush1.msra.mxu0 0.0
  %2218 = vmatprep.subr.mxu0 0.0
  %2219 = vmatpush1.msra.mxu0 0.0
  %2220 = vmatprep.subr.mxu0 0.0
  %2221 = vmatpush1.msra.mxu0 0.0
  %2222 = vmatprep.subr.mxu0 0.0
  %2223 = vmatpush1.msra.mxu0 0.0
  %2224 = vmatprep.subr.mxu0 0.0
  %2225 = vmatpush1.msra.mxu0 0.0
  %2226 = vmatprep.subr.mxu0 0.0
  %2227 = vmatpush1.msra.mxu0 0.0
  %2228 = vmatprep.subr.mxu0 0.0
  %2229 = vmatpush1.msra.mxu0 0.0
  %2230 = vmatprep.subr.mxu0 0.0
  %2231 = vmatpush1.msra.mxu0 0.0
  %2232 = vmatprep.subr.mxu0 0.0
  %2233 = vmatpush1.msra.mxu0 0.0
  %2234 = vmatprep.subr.mxu0 0.0
  %2235 = vmatpush1.msra.mxu0 %v550
  %2236 = vmatprep.subr.mxu0 0.0
  %2237 = vmatpush1.msra.mxu0 %v549
  %2238 = vmatprep.subr.mxu0 0.0
  %2239 = vmatpush1.msra.mxu0 %v548
  %2240 = vmatprep.subr.mxu0 0.0
  %2241 = vmatpush1.msra.mxu0 %v547
  %2242 = vmatprep.subr.mxu0 0.0
  %2243 = vmatpush2.msra.mxu0 0.0
  %2244 = vmatprep.subr.mxu0 0.0
  %2245 = vmatpush2.msra.mxu0 0.0
  %2246 = vmatprep.subr.mxu0 0.0
  %2247 = vmatpush2.msra.mxu0 0.0
  %2248 = vmatprep.subr.mxu0 0.0
  %2249 = vmatpush2.msra.mxu0 0.0
  %2250 = vmatprep.subr.mxu0 0.0
  %2251 = vmatpush2.msra.mxu0 0.0
  %2252 = vmatprep.subr.mxu0 0.0
  %2253 = vmatpush2.msra.mxu0 0.0
  %2254 = vmatprep.subr.mxu0 0.0
  %2255 = vmatpush2.msra.mxu0 0.0
  %2256 = vmatprep.subr.mxu0 0.0
  %2257 = vmatpush2.msra.mxu0 0.0
  %2258 = vmatprep.subr.mxu0 0.0
  %2259 = vmatpush2.msra.mxu0 0.0
  %2260 = vmatprep.subr.mxu0 0.0
  %2261 = vmatpush2.msra.mxu0 0.0
  %2262 = vmatprep.subr.mxu0 0.0
  %2263 = vmatpush2.msra.mxu0 0.0
  %2264 = vmatprep.subr.mxu0 0.0
  %2265 = vmatpush2.msra.mxu0 0.0
  %2266 = vmatprep.subr.mxu0 0.0
  %2267 = vmatpush2.msra.mxu0 0.0
  %2268 = vmatprep.subr.mxu0 0.0
  %2269 = vmatpush2.msra.mxu0 0.0
  %2270 = vmatprep.subr.mxu0 0.0
  %2271 = vmatpush2.msra.mxu0 0.0
  %2272 = vmatprep.subr.mxu0 0.0
  %2273 = vmatpush2.msra.mxu0 0.0
  %2274 = vmatprep.mubr.f32.mxu0 0.0
  %2275 = vmatmul.mubr.f32.gmra.mxu0 %v2136
  %v2276 = vpop.f32.mrf.mxu0
  %v2277 = vadd.f32 0.0, %v2276
  %v2278 = vpop.f32.mrf.mxu0
  %2279 = vdwg.mxu0
  %v2280 = vadd.f32 %v2209, %v2277
  %v2281 = vld [vmem:[%s410 + $0x28] sm:$0xff]
  %2282 = vmatprep.subr.mxu0 0.0
  %2283 = vmatpush1.msra.mxu0 0.0
  %2284 = vmatprep.subr.mxu0 0.0
  %2285 = vmatpush1.msra.mxu0 0.0
  %2286 = vmatprep.subr.mxu0 0.0
  %2287 = vmatpush1.msra.mxu0 0.0
  %2288 = vmatprep.subr.mxu0 0.0
  %2289 = vmatpush1.msra.mxu0 0.0
  %2290 = vmatprep.subr.mxu0 0.0
  %2291 = vmatpush1.msra.mxu0 0.0
  %2292 = vmatprep.subr.mxu0 0.0
  %2293 = vmatpush1.msra.mxu0 0.0
  %2294 = vmatprep.subr.mxu0 0.0
  %2295 = vmatpush1.msra.mxu0 0.0
  %2296 = vmatprep.subr.mxu0 0.0
  %2297 = vmatpush1.msra.mxu0 0.0
  %2298 = vmatprep.subr.mxu0 0.0
  %2299 = vmatpush1.msra.mxu0 0.0
  %2300 = vmatprep.subr.mxu0 0.0
  %2301 = vmatpush1.msra.mxu0 0.0
  %2302 = vmatprep.subr.mxu0 0.0
  %2303 = vmatpush1.msra.mxu0 0.0
  %2304 = vmatprep.subr.mxu0 0.0
  %2305 = vmatpush1.msra.mxu0 0.0
  %2306 = vmatprep.subr.mxu0 0.0
  %2307 = vmatpush1.msra.mxu0 %v554
  %2308 = vmatprep.subr.mxu0 0.0
  %2309 = vmatpush1.msra.mxu0 %v553
  %2310 = vmatprep.subr.mxu0 0.0
  %2311 = vmatpush1.msra.mxu0 %v552
  %2312 = vmatprep.subr.mxu0 0.0
  %2313 = vmatpush1.msra.mxu0 %v551
  %2314 = vmatprep.subr.mxu0 0.0
  %2315 = vmatpush2.msra.mxu0 0.0
  %2316 = vmatprep.subr.mxu0 0.0
  %2317 = vmatpush2.msra.mxu0 0.0
  %2318 = vmatprep.subr.mxu0 0.0
  %2319 = vmatpush2.msra.mxu0 0.0
  %2320 = vmatprep.subr.mxu0 0.0
  %2321 = vmatpush2.msra.mxu0 0.0
  %2322 = vmatprep.subr.mxu0 0.0
  %2323 = vmatpush2.msra.mxu0 0.0
  %2324 = vmatprep.subr.mxu0 0.0
  %2325 = vmatpush2.msra.mxu0 0.0
  %2326 = vmatprep.subr.mxu0 0.0
  %2327 = vmatpush2.msra.mxu0 0.0
  %2328 = vmatprep.subr.mxu0 0.0
  %2329 = vmatpush2.msra.mxu0 0.0
  %2330 = vmatprep.subr.mxu0 0.0
  %2331 = vmatpush2.msra.mxu0 0.0
  %2332 = vmatprep.subr.mxu0 0.0
  %2333 = vmatpush2.msra.mxu0 0.0
  %2334 = vmatprep.subr.mxu0 0.0
  %2335 = vmatpush2.msra.mxu0 0.0
  %2336 = vmatprep.subr.mxu0 0.0
  %2337 = vmatpush2.msra.mxu0 0.0
  %2338 = vmatprep.subr.mxu0 0.0
  %2339 = vmatpush2.msra.mxu0 0.0
  %2340 = vmatprep.subr.mxu0 0.0
  %2341 = vmatpush2.msra.mxu0 0.0
  %2342 = vmatprep.subr.mxu0 0.0
  %2343 = vmatpush2.msra.mxu0 0.0
  %2344 = vmatprep.subr.mxu0 0.0
  %2345 = vmatpush2.msra.mxu0 0.0
  %2346 = vmatprep.mubr.f32.mxu0 0.0
  %2347 = vmatmul.mubr.f32.gmra.mxu0 %v2136
  %v2348 = vpop.f32.mrf.mxu0
  %v2349 = vadd.f32 0.0, %v2348
  %v2350 = vpop.f32.mrf.mxu0
  %2351 = vdwg.mxu0
  %v2352 = vadd.f32 %v2281, %v2349
  %v2353 = vld [vmem:[%s534 + $0x28] sm:$0xff]
  %2354 = vmatprep.subr.mxu0 0.0
  %2355 = vmatpush1.msra.mxu0 0.0
  %2356 = vmatprep.subr.mxu0 0.0
  %2357 = vmatpush1.msra.mxu0 0.0
  %2358 = vmatprep.subr.mxu0 0.0
  %2359 = vmatpush1.msra.mxu0 0.0
  %2360 = vmatprep.subr.mxu0 0.0
  %2361 = vmatpush1.msra.mxu0 0.0
  %2362 = vmatprep.subr.mxu0 0.0
  %2363 = vmatpush1.msra.mxu0 0.0
  %2364 = vmatprep.subr.mxu0 0.0
  %2365 = vmatpush1.msra.mxu0 0.0
  %2366 = vmatprep.subr.mxu0 0.0
  %2367 = vmatpush1.msra.mxu0 0.0
  %2368 = vmatprep.subr.mxu0 0.0
  %2369 = vmatpush1.msra.mxu0 0.0
  %2370 = vmatprep.subr.mxu0 0.0
  %2371 = vmatpush1.msra.mxu0 0.0
  %2372 = vmatprep.subr.mxu0 0.0
  %2373 = vmatpush1.msra.mxu0 0.0
  %2374 = vmatprep.subr.mxu0 0.0
  %2375 = vmatpush1.msra.mxu0 0.0
  %2376 = vmatprep.subr.mxu0 0.0
  %2377 = vmatpush1.msra.mxu0 0.0
  %2378 = vmatprep.subr.mxu0 0.0
  %2379 = vmatpush1.msra.mxu0 %v558
  %2380 = vmatprep.subr.mxu0 0.0
  %2381 = vmatpush1.msra.mxu0 %v557
  %2382 = vmatprep.subr.mxu0 0.0
  %2383 = vmatpush1.msra.mxu0 %v556
  %2384 = vmatprep.subr.mxu0 0.0
  %2385 = vmatpush1.msra.mxu0 %v555
  %2386 = vmatprep.subr.mxu0 0.0
  %2387 = vmatpush2.msra.mxu0 0.0
  %2388 = vmatprep.subr.mxu0 0.0
  %2389 = vmatpush2.msra.mxu0 0.0
  %2390 = vmatprep.subr.mxu0 0.0
  %2391 = vmatpush2.msra.mxu0 0.0
  %2392 = vmatprep.subr.mxu0 0.0
  %2393 = vmatpush2.msra.mxu0 0.0
  %2394 = vmatprep.subr.mxu0 0.0
  %2395 = vmatpush2.msra.mxu0 0.0
  %2396 = vmatprep.subr.mxu0 0.0
  %2397 = vmatpush2.msra.mxu0 0.0
  %2398 = vmatprep.subr.mxu0 0.0
  %2399 = vmatpush2.msra.mxu0 0.0
  %2400 = vmatprep.subr.mxu0 0.0
  %2401 = vmatpush2.msra.mxu0 0.0
  %2402 = vmatprep.subr.mxu0 0.0
  %2403 = vmatpush2.msra.mxu0 0.0
  %2404 = vmatprep.subr.mxu0 0.0
  %2405 = vmatpush2.msra.mxu0 0.0
  %2406 = vmatprep.subr.mxu0 0.0
  %2407 = vmatpush2.msra.mxu0 0.0
  %2408 = vmatprep.subr.mxu0 0.0
  %2409 = vmatpush2.msra.mxu0 0.0
  %2410 = vmatprep.subr.mxu0 0.0
  %2411 = vmatpush2.msra.mxu0 0.0
  %2412 = vmatprep.subr.mxu0 0.0
  %2413 = vmatpush2.msra.mxu0 0.0
  %2414 = vmatprep.subr.mxu0 0.0
  %2415 = vmatpush2.msra.mxu0 0.0
  %2416 = vmatprep.subr.mxu0 0.0
  %2417 = vmatpush2.msra.mxu0 0.0
  %2418 = vmatprep.mubr.f32.mxu0 0.0
  %2419 = vmatmul.mubr.f32.gmra.mxu0 %v2136
  %v2420 = vpop.f32.mrf.mxu0
  %v2421 = vadd.f32 0.0, %v2420
  %v2422 = vpop.f32.mrf.mxu0
  %2423 = vdwg.mxu0
  %v2424 = vadd.f32 %v2353, %v2421
  %v2425 = vxor.u32 %v2208, 2147483648
  %v2426 = vmul.f32 %v2425, 1.442695
  %v2427 = vpow.pop %v2426
  %v2428 = vadd.f32 %v2427, 1.0
  %v2429 = vrcp.pop %v2428
  %v2430 = vmul.f32 1.0, %v2429
  %v2431 = vxor.u32 %v2280, 2147483648
  %v2432 = vmul.f32 %v2431, 1.442695
  %v2433 = vpow.pop %v2432
  %v2434 = vadd.f32 %v2433, 1.0
  %v2435 = vrcp.pop %v2434
  %v2436 = vmul.f32 1.0, %v2435
  %v2437 = vxor.u32 %v2424, 2147483648
  %v2438 = vmul.f32 %v2437, 1.442695
  %v2439 = vpow.pop %v2438
  %v2440 = vadd.f32 %v2439, 1.0
  %v2441 = vrcp.pop %v2440
  %v2442 = vmul.f32 1.0, %v2441
  %v2443 = vtanh.pop %v2352
  %v2444 = vmul.f32 %v2436, %v2131
  %v2445 = vmul.f32 %v2430, %v2443
  %v2446 = vadd.f32 %v2444, %v2445
  %v2447 = vtanh.pop %v2446
  %v2448 = vmul.f32 %v2442, %v2447
  %v2449 = vld [vmem:[#allocation2 + $0x30] sm:$0xff]
  %v2451 = vsel %vm162, %v2448, 0
  %2453 = vmatprep.subr.mxu0 0.0
  %2454 = vmatpush1.msra.mxu0 0.0
  %2455 = vmatprep.subr.mxu0 0.0
  %2456 = vmatpush1.msra.mxu0 0.0
  %2457 = vmatprep.subr.mxu0 0.0
  %2458 = vmatpush1.msra.mxu0 0.0
  %2459 = vmatprep.subr.mxu0 0.0
  %2460 = vmatpush1.msra.mxu0 0.0
  %2461 = vmatprep.subr.mxu0 0.0
  %2462 = vmatpush1.msra.mxu0 0.0
  %2463 = vmatprep.subr.mxu0 0.0
  %2464 = vmatpush1.msra.mxu0 0.0
  %2465 = vmatprep.subr.mxu0 0.0
  %2466 = vmatpush1.msra.mxu0 0.0
  %2467 = vmatprep.subr.mxu0 0.0
  %2468 = vmatpush1.msra.mxu0 0.0
  %2469 = vmatprep.subr.mxu0 0.0
  %2470 = vmatpush1.msra.mxu0 0.0
  %2471 = vmatprep.subr.mxu0 0.0
  %2472 = vmatpush1.msra.mxu0 0.0
  %2473 = vmatprep.subr.mxu0 0.0
  %2474 = vmatpush1.msra.mxu0 0.0
  %2475 = vmatprep.subr.mxu0 0.0
  %2476 = vmatpush1.msra.mxu0 0.0
  %2477 = vmatprep.subr.mxu0 0.0
  %2478 = vmatpush1.msra.mxu0 %v546
  %2479 = vmatprep.subr.mxu0 0.0
  %2480 = vmatpush1.msra.mxu0 %v545
  %2481 = vmatprep.subr.mxu0 0.0
  %2482 = vmatpush1.msra.mxu0 %v544
  %2483 = vmatprep.subr.mxu0 0.0
  %2484 = vmatpush1.msra.mxu0 %v543
  %2485 = vmatprep.subr.mxu0 0.0
  %2486 = vmatpush2.msra.mxu0 0.0
  %2487 = vmatprep.subr.mxu0 0.0
  %2488 = vmatpush2.msra.mxu0 0.0
  %2489 = vmatprep.subr.mxu0 0.0
  %2490 = vmatpush2.msra.mxu0 0.0
  %2491 = vmatprep.subr.mxu0 0.0
  %2492 = vmatpush2.msra.mxu0 0.0
  %2493 = vmatprep.subr.mxu0 0.0
  %2494 = vmatpush2.msra.mxu0 0.0
  %2495 = vmatprep.subr.mxu0 0.0
  %2496 = vmatpush2.msra.mxu0 0.0
  %2497 = vmatprep.subr.mxu0 0.0
  %2498 = vmatpush2.msra.mxu0 0.0
  %2499 = vmatprep.subr.mxu0 0.0
  %2500 = vmatpush2.msra.mxu0 0.0
  %2501 = vmatprep.subr.mxu0 0.0
  %2502 = vmatpush2.msra.mxu0 0.0
  %2503 = vmatprep.subr.mxu0 0.0
  %2504 = vmatpush2.msra.mxu0 0.0
  %2505 = vmatprep.subr.mxu0 0.0
  %2506 = vmatpush2.msra.mxu0 0.0
  %2507 = vmatprep.subr.mxu0 0.0
  %2508 = vmatpush2.msra.mxu0 0.0
  %2509 = vmatprep.subr.mxu0 0.0
  %2510 = vmatpush2.msra.mxu0 0.0
  %2511 = vmatprep.subr.mxu0 0.0
  %2512 = vmatpush2.msra.mxu0 0.0
  %2513 = vmatprep.subr.mxu0 0.0
  %2514 = vmatpush2.msra.mxu0 0.0
  %2515 = vmatprep.subr.mxu0 0.0
  %2516 = vmatpush2.msra.mxu0 0.0
  %2517 = vmatprep.mubr.f32.mxu0 0.0
  %2518 = vmatmul.mubr.f32.gmra.mxu0 %v2451
  %v2519 = vpop.f32.mrf.mxu0
  %v2520 = vadd.f32 0.0, %v2519
  %v2521 = vpop.f32.mrf.mxu0
  %2522 = vdwg.mxu0
  %v2523 = vadd.f32 %v2449, %v2520
  %v2524 = vld [vmem:[%s286 + $0x30] sm:$0xff]
  %2525 = vmatprep.subr.mxu0 0.0
  %2526 = vmatpush1.msra.mxu0 0.0
  %2527 = vmatprep.subr.mxu0 0.0
  %2528 = vmatpush1.msra.mxu0 0.0
  %2529 = vmatprep.subr.mxu0 0.0
  %2530 = vmatpush1.msra.mxu0 0.0
  %2531 = vmatprep.subr.mxu0 0.0
  %2532 = vmatpush1.msra.mxu0 0.0
  %2533 = vmatprep.subr.mxu0 0.0
  %2534 = vmatpush1.msra.mxu0 0.0
  %2535 = vmatprep.subr.mxu0 0.0
  %2536 = vmatpush1.msra.mxu0 0.0
  %2537 = vmatprep.subr.mxu0 0.0
  %2538 = vmatpush1.msra.mxu0 0.0
  %2539 = vmatprep.subr.mxu0 0.0
  %2540 = vmatpush1.msra.mxu0 0.0
  %2541 = vmatprep.subr.mxu0 0.0
  %2542 = vmatpush1.msra.mxu0 0.0
  %2543 = vmatprep.subr.mxu0 0.0
  %2544 = vmatpush1.msra.mxu0 0.0
  %2545 = vmatprep.subr.mxu0 0.0
  %2546 = vmatpush1.msra.mxu0 0.0
  %2547 = vmatprep.subr.mxu0 0.0
  %2548 = vmatpush1.msra.mxu0 0.0
  %2549 = vmatprep.subr.mxu0 0.0
  %2550 = vmatpush1.msra.mxu0 %v550
  %2551 = vmatprep.subr.mxu0 0.0
  %2552 = vmatpush1.msra.mxu0 %v549
  %2553 = vmatprep.subr.mxu0 0.0
  %2554 = vmatpush1.msra.mxu0 %v548
  %2555 = vmatprep.subr.mxu0 0.0
  %2556 = vmatpush1.msra.mxu0 %v547
  %2557 = vmatprep.subr.mxu0 0.0
  %2558 = vmatpush2.msra.mxu0 0.0
  %2559 = vmatprep.subr.mxu0 0.0
  %2560 = vmatpush2.msra.mxu0 0.0
  %2561 = vmatprep.subr.mxu0 0.0
  %2562 = vmatpush2.msra.mxu0 0.0
  %2563 = vmatprep.subr.mxu0 0.0
  %2564 = vmatpush2.msra.mxu0 0.0
  %2565 = vmatprep.subr.mxu0 0.0
  %2566 = vmatpush2.msra.mxu0 0.0
  %2567 = vmatprep.subr.mxu0 0.0
  %2568 = vmatpush2.msra.mxu0 0.0
  %2569 = vmatprep.subr.mxu0 0.0
  %2570 = vmatpush2.msra.mxu0 0.0
  %2571 = vmatprep.subr.mxu0 0.0
  %2572 = vmatpush2.msra.mxu0 0.0
  %2573 = vmatprep.subr.mxu0 0.0
  %2574 = vmatpush2.msra.mxu0 0.0
  %2575 = vmatprep.subr.mxu0 0.0
  %2576 = vmatpush2.msra.mxu0 0.0
  %2577 = vmatprep.subr.mxu0 0.0
  %2578 = vmatpush2.msra.mxu0 0.0
  %2579 = vmatprep.subr.mxu0 0.0
  %2580 = vmatpush2.msra.mxu0 0.0
  %2581 = vmatprep.subr.mxu0 0.0
  %2582 = vmatpush2.msra.mxu0 0.0
  %2583 = vmatprep.subr.mxu0 0.0
  %2584 = vmatpush2.msra.mxu0 0.0
  %2585 = vmatprep.subr.mxu0 0.0
  %2586 = vmatpush2.msra.mxu0 0.0
  %2587 = vmatprep.subr.mxu0 0.0
  %2588 = vmatpush2.msra.mxu0 0.0
  %2589 = vmatprep.mubr.f32.mxu0 0.0
  %2590 = vmatmul.mubr.f32.gmra.mxu0 %v2451
  %v2591 = vpop.f32.mrf.mxu0
  %v2592 = vadd.f32 0.0, %v2591
  %v2593 = vpop.f32.mrf.mxu0
  %2594 = vdwg.mxu0
  %v2595 = vadd.f32 %v2524, %v2592
  %v2596 = vld [vmem:[%s410 + $0x30] sm:$0xff]
  %2597 = vmatprep.subr.mxu0 0.0
  %2598 = vmatpush1.msra.mxu0 0.0
  %2599 = vmatprep.subr.mxu0 0.0
  %2600 = vmatpush1.msra.mxu0 0.0
  %2601 = vmatprep.subr.mxu0 0.0
  %2602 = vmatpush1.msra.mxu0 0.0
  %2603 = vmatprep.subr.mxu0 0.0
  %2604 = vmatpush1.msra.mxu0 0.0
  %2605 = vmatprep.subr.mxu0 0.0
  %2606 = vmatpush1.msra.mxu0 0.0
  %2607 = vmatprep.subr.mxu0 0.0
  %2608 = vmatpush1.msra.mxu0 0.0
  %2609 = vmatprep.subr.mxu0 0.0
  %2610 = vmatpush1.msra.mxu0 0.0
  %2611 = vmatprep.subr.mxu0 0.0
  %2612 = vmatpush1.msra.mxu0 0.0
  %2613 = vmatprep.subr.mxu0 0.0
  %2614 = vmatpush1.msra.mxu0 0.0
  %2615 = vmatprep.subr.mxu0 0.0
  %2616 = vmatpush1.msra.mxu0 0.0
  %2617 = vmatprep.subr.mxu0 0.0
  %2618 = vmatpush1.msra.mxu0 0.0
  %2619 = vmatprep.subr.mxu0 0.0
  %2620 = vmatpush1.msra.mxu0 0.0
  %2621 = vmatprep.subr.mxu0 0.0
  %2622 = vmatpush1.msra.mxu0 %v554
  %2623 = vmatprep.subr.mxu0 0.0
  %2624 = vmatpush1.msra.mxu0 %v553
  %2625 = vmatprep.subr.mxu0 0.0
  %2626 = vmatpush1.msra.mxu0 %v552
  %2627 = vmatprep.subr.mxu0 0.0
  %2628 = vmatpush1.msra.mxu0 %v551
  %2629 = vmatprep.subr.mxu0 0.0
  %2630 = vmatpush2.msra.mxu0 0.0
  %2631 = vmatprep.subr.mxu0 0.0
  %2632 = vmatpush2.msra.mxu0 0.0
  %2633 = vmatprep.subr.mxu0 0.0
  %2634 = vmatpush2.msra.mxu0 0.0
  %2635 = vmatprep.subr.mxu0 0.0
  %2636 = vmatpush2.msra.mxu0 0.0
  %2637 = vmatprep.subr.mxu0 0.0
  %2638 = vmatpush2.msra.mxu0 0.0
  %2639 = vmatprep.subr.mxu0 0.0
  %2640 = vmatpush2.msra.mxu0 0.0
  %2641 = vmatprep.subr.mxu0 0.0
  %2642 = vmatpush2.msra.mxu0 0.0
  %2643 = vmatprep.subr.mxu0 0.0
  %2644 = vmatpush2.msra.mxu0 0.0
  %2645 = vmatprep.subr.mxu0 0.0
  %2646 = vmatpush2.msra.mxu0 0.0
  %2647 = vmatprep.subr.mxu0 0.0
  %2648 = vmatpush2.msra.mxu0 0.0
  %2649 = vmatprep.subr.mxu0 0.0
  %2650 = vmatpush2.msra.mxu0 0.0
  %2651 = vmatprep.subr.mxu0 0.0
  %2652 = vmatpush2.msra.mxu0 0.0
  %2653 = vmatprep.subr.mxu0 0.0
  %2654 = vmatpush2.msra.mxu0 0.0
  %2655 = vmatprep.subr.mxu0 0.0
  %2656 = vmatpush2.msra.mxu0 0.0
  %2657 = vmatprep.subr.mxu0 0.0
  %2658 = vmatpush2.msra.mxu0 0.0
  %2659 = vmatprep.subr.mxu0 0.0
  %2660 = vmatpush2.msra.mxu0 0.0
  %2661 = vmatprep.mubr.f32.mxu0 0.0
  %2662 = vmatmul.mubr.f32.gmra.mxu0 %v2451
  %v2663 = vpop.f32.mrf.mxu0
  %v2664 = vadd.f32 0.0, %v2663
  %v2665 = vpop.f32.mrf.mxu0
  %2666 = vdwg.mxu0
  %v2667 = vadd.f32 %v2596, %v2664
  %v2668 = vld [vmem:[%s534 + $0x30] sm:$0xff]
  %2669 = vmatprep.subr.mxu0 0.0
  %2670 = vmatpush1.msra.mxu0 0.0
  %2671 = vmatprep.subr.mxu0 0.0
  %2672 = vmatpush1.msra.mxu0 0.0
  %2673 = vmatprep.subr.mxu0 0.0
  %2674 = vmatpush1.msra.mxu0 0.0
  %2675 = vmatprep.subr.mxu0 0.0
  %2676 = vmatpush1.msra.mxu0 0.0
  %2677 = vmatprep.subr.mxu0 0.0
  %2678 = vmatpush1.msra.mxu0 0.0
  %2679 = vmatprep.subr.mxu0 0.0
  %2680 = vmatpush1.msra.mxu0 0.0
  %2681 = vmatprep.subr.mxu0 0.0
  %2682 = vmatpush1.msra.mxu0 0.0
  %2683 = vmatprep.subr.mxu0 0.0
  %2684 = vmatpush1.msra.mxu0 0.0
  %2685 = vmatprep.subr.mxu0 0.0
  %2686 = vmatpush1.msra.mxu0 0.0
  %2687 = vmatprep.subr.mxu0 0.0
  %2688 = vmatpush1.msra.mxu0 0.0
  %2689 = vmatprep.subr.mxu0 0.0
  %2690 = vmatpush1.msra.mxu0 0.0
  %2691 = vmatprep.subr.mxu0 0.0
  %2692 = vmatpush1.msra.mxu0 0.0
  %2693 = vmatprep.subr.mxu0 0.0
  %2694 = vmatpush1.msra.mxu0 %v558
  %2695 = vmatprep.subr.mxu0 0.0
  %2696 = vmatpush1.msra.mxu0 %v557
  %2697 = vmatprep.subr.mxu0 0.0
  %2698 = vmatpush1.msra.mxu0 %v556
  %2699 = vmatprep.subr.mxu0 0.0
  %2700 = vmatpush1.msra.mxu0 %v555
  %2701 = vmatprep.subr.mxu0 0.0
  %2702 = vmatpush2.msra.mxu0 0.0
  %2703 = vmatprep.subr.mxu0 0.0
  %2704 = vmatpush2.msra.mxu0 0.0
  %2705 = vmatprep.subr.mxu0 0.0
  %2706 = vmatpush2.msra.mxu0 0.0
  %2707 = vmatprep.subr.mxu0 0.0
  %2708 = vmatpush2.msra.mxu0 0.0
  %2709 = vmatprep.subr.mxu0 0.0
  %2710 = vmatpush2.msra.mxu0 0.0
  %2711 = vmatprep.subr.mxu0 0.0
  %2712 = vmatpush2.msra.mxu0 0.0
  %2713 = vmatprep.subr.mxu0 0.0
  %2714 = vmatpush2.msra.mxu0 0.0
  %2715 = vmatprep.subr.mxu0 0.0
  %2716 = vmatpush2.msra.mxu0 0.0
  %2717 = vmatprep.subr.mxu0 0.0
  %2718 = vmatpush2.msra.mxu0 0.0
  %2719 = vmatprep.subr.mxu0 0.0
  %2720 = vmatpush2.msra.mxu0 0.0
  %2721 = vmatprep.subr.mxu0 0.0
  %2722 = vmatpush2.msra.mxu0 0.0
  %2723 = vmatprep.subr.mxu0 0.0
  %2724 = vmatpush2.msra.mxu0 0.0
  %2725 = vmatprep.subr.mxu0 0.0
  %2726 = vmatpush2.msra.mxu0 0.0
  %2727 = vmatprep.subr.mxu0 0.0
  %2728 = vmatpush2.msra.mxu0 0.0
  %2729 = vmatprep.subr.mxu0 0.0
  %2730 = vmatpush2.msra.mxu0 0.0
  %2731 = vmatprep.subr.mxu0 0.0
  %2732 = vmatpush2.msra.mxu0 0.0
  %2733 = vmatprep.mubr.f32.mxu0 0.0
  %2734 = vmatmul.mubr.f32.gmra.mxu0 %v2451
  %v2735 = vpop.f32.mrf.mxu0
  %v2736 = vadd.f32 0.0, %v2735
  %v2737 = vpop.f32.mrf.mxu0
  %2738 = vdwg.mxu0
  %v2739 = vadd.f32 %v2668, %v2736
  %v2740 = vxor.u32 %v2523, 2147483648
  %v2741 = vmul.f32 %v2740, 1.442695
  %v2742 = vpow.pop %v2741
  %v2743 = vadd.f32 %v2742, 1.0
  %v2744 = vrcp.pop %v2743
  %v2745 = vmul.f32 1.0, %v2744
  %v2746 = vxor.u32 %v2595, 2147483648
  %v2747 = vmul.f32 %v2746, 1.442695
  %v2748 = vpow.pop %v2747
  %v2749 = vadd.f32 %v2748, 1.0
  %v2750 = vrcp.pop %v2749
  %v2751 = vmul.f32 1.0, %v2750
  %v2752 = vxor.u32 %v2739, 2147483648
  %v2753 = vmul.f32 %v2752, 1.442695
  %v2754 = vpow.pop %v2753
  %v2755 = vadd.f32 %v2754, 1.0
  %v2756 = vrcp.pop %v2755
  %v2757 = vmul.f32 1.0, %v2756
  %v2758 = vtanh.pop %v2667
  %v2759 = vmul.f32 %v2751, %v2446
  %v2760 = vmul.f32 %v2745, %v2758
  %v2761 = vadd.f32 %v2759, %v2760
  %v2762 = vtanh.pop %v2761
  %v2763 = vmul.f32 %v2757, %v2762
  %v2764 = vld [vmem:[#allocation2 + $0x38] sm:$0xff]
  %v2766 = vsel %vm162, %v2763, 0
  %2768 = vmatprep.subr.mxu0 0.0
  %2769 = vmatpush1.msra.mxu0 0.0
  %2770 = vmatprep.subr.mxu0 0.0
  %2771 = vmatpush1.msra.mxu0 0.0
  %2772 = vmatprep.subr.mxu0 0.0
  %2773 = vmatpush1.msra.mxu0 0.0
  %2774 = vmatprep.subr.mxu0 0.0
  %2775 = vmatpush1.msra.mxu0 0.0
  %2776 = vmatprep.subr.mxu0 0.0
  %2777 = vmatpush1.msra.mxu0 0.0
  %2778 = vmatprep.subr.mxu0 0.0
  %2779 = vmatpush1.msra.mxu0 0.0
  %2780 = vmatprep.subr.mxu0 0.0
  %2781 = vmatpush1.msra.mxu0 0.0
  %2782 = vmatprep.subr.mxu0 0.0
  %2783 = vmatpush1.msra.mxu0 0.0
  %2784 = vmatprep.subr.mxu0 0.0
  %2785 = vmatpush1.msra.mxu0 0.0
  %2786 = vmatprep.subr.mxu0 0.0
  %2787 = vmatpush1.msra.mxu0 0.0
  %2788 = vmatprep.subr.mxu0 0.0
  %2789 = vmatpush1.msra.mxu0 0.0
  %2790 = vmatprep.subr.mxu0 0.0
  %2791 = vmatpush1.msra.mxu0 0.0
  %2792 = vmatprep.subr.mxu0 0.0
  %2793 = vmatpush1.msra.mxu0 %v546
  %2794 = vmatprep.subr.mxu0 0.0
  %2795 = vmatpush1.msra.mxu0 %v545
  %2796 = vmatprep.subr.mxu0 0.0
  %2797 = vmatpush1.msra.mxu0 %v544
  %2798 = vmatprep.subr.mxu0 0.0
  %2799 = vmatpush1.msra.mxu0 %v543
  %2800 = vmatprep.subr.mxu0 0.0
  %2801 = vmatpush2.msra.mxu0 0.0
  %2802 = vmatprep.subr.mxu0 0.0
  %2803 = vmatpush2.msra.mxu0 0.0
  %2804 = vmatprep.subr.mxu0 0.0
  %2805 = vmatpush2.msra.mxu0 0.0
  %2806 = vmatprep.subr.mxu0 0.0
  %2807 = vmatpush2.msra.mxu0 0.0
  %2808 = vmatprep.subr.mxu0 0.0
  %2809 = vmatpush2.msra.mxu0 0.0
  %2810 = vmatprep.subr.mxu0 0.0
  %2811 = vmatpush2.msra.mxu0 0.0
  %2812 = vmatprep.subr.mxu0 0.0
  %2813 = vmatpush2.msra.mxu0 0.0
  %2814 = vmatprep.subr.mxu0 0.0
  %2815 = vmatpush2.msra.mxu0 0.0
  %2816 = vmatprep.subr.mxu0 0.0
  %2817 = vmatpush2.msra.mxu0 0.0
  %2818 = vmatprep.subr.mxu0 0.0
  %2819 = vmatpush2.msra.mxu0 0.0
  %2820 = vmatprep.subr.mxu0 0.0
  %2821 = vmatpush2.msra.mxu0 0.0
  %2822 = vmatprep.subr.mxu0 0.0
  %2823 = vmatpush2.msra.mxu0 0.0
  %2824 = vmatprep.subr.mxu0 0.0
  %2825 = vmatpush2.msra.mxu0 0.0
  %2826 = vmatprep.subr.mxu0 0.0
  %2827 = vmatpush2.msra.mxu0 0.0
  %2828 = vmatprep.subr.mxu0 0.0
  %2829 = vmatpush2.msra.mxu0 0.0
  %2830 = vmatprep.subr.mxu0 0.0
  %2831 = vmatpush2.msra.mxu0 0.0
  %2832 = vmatprep.mubr.f32.mxu0 0.0
  %2833 = vmatmul.mubr.f32.gmra.mxu0 %v2766
  %v2834 = vpop.f32.mrf.mxu0
  %v2835 = vadd.f32 0.0, %v2834
  %v2836 = vpop.f32.mrf.mxu0
  %2837 = vdwg.mxu0
  %v2838 = vadd.f32 %v2764, %v2835
  %v2839 = vld [vmem:[%s286 + $0x38] sm:$0xff]
  %2840 = vmatprep.subr.mxu0 0.0
  %2841 = vmatpush1.msra.mxu0 0.0
  %2842 = vmatprep.subr.mxu0 0.0
  %2843 = vmatpush1.msra.mxu0 0.0
  %2844 = vmatprep.subr.mxu0 0.0
  %2845 = vmatpush1.msra.mxu0 0.0
  %2846 = vmatprep.subr.mxu0 0.0
  %2847 = vmatpush1.msra.mxu0 0.0
  %2848 = vmatprep.subr.mxu0 0.0
  %2849 = vmatpush1.msra.mxu0 0.0
  %2850 = vmatprep.subr.mxu0 0.0
  %2851 = vmatpush1.msra.mxu0 0.0
  %2852 = vmatprep.subr.mxu0 0.0
  %2853 = vmatpush1.msra.mxu0 0.0
  %2854 = vmatprep.subr.mxu0 0.0
  %2855 = vmatpush1.msra.mxu0 0.0
  %2856 = vmatprep.subr.mxu0 0.0
  %2857 = vmatpush1.msra.mxu0 0.0
  %2858 = vmatprep.subr.mxu0 0.0
  %2859 = vmatpush1.msra.mxu0 0.0
  %2860 = vmatprep.subr.mxu0 0.0
  %2861 = vmatpush1.msra.mxu0 0.0
  %2862 = vmatprep.subr.mxu0 0.0
  %2863 = vmatpush1.msra.mxu0 0.0
  %2864 = vmatprep.subr.mxu0 0.0
  %2865 = vmatpush1.msra.mxu0 %v550
  %2866 = vmatprep.subr.mxu0 0.0
  %2867 = vmatpush1.msra.mxu0 %v549
  %2868 = vmatprep.subr.mxu0 0.0
  %2869 = vmatpush1.msra.mxu0 %v548
  %2870 = vmatprep.subr.mxu0 0.0
  %2871 = vmatpush1.msra.mxu0 %v547
  %2872 = vmatprep.subr.mxu0 0.0
  %2873 = vmatpush2.msra.mxu0 0.0
  %2874 = vmatprep.subr.mxu0 0.0
  %2875 = vmatpush2.msra.mxu0 0.0
  %2876 = vmatprep.subr.mxu0 0.0
  %2877 = vmatpush2.msra.mxu0 0.0
  %2878 = vmatprep.subr.mxu0 0.0
  %2879 = vmatpush2.msra.mxu0 0.0
  %2880 = vmatprep.subr.mxu0 0.0
  %2881 = vmatpush2.msra.mxu0 0.0
  %2882 = vmatprep.subr.mxu0 0.0
  %2883 = vmatpush2.msra.mxu0 0.0
  %2884 = vmatprep.subr.mxu0 0.0
  %2885 = vmatpush2.msra.mxu0 0.0
  %2886 = vmatprep.subr.mxu0 0.0
  %2887 = vmatpush2.msra.mxu0 0.0
  %2888 = vmatprep.subr.mxu0 0.0
  %2889 = vmatpush2.msra.mxu0 0.0
  %2890 = vmatprep.subr.mxu0 0.0
  %2891 = vmatpush2.msra.mxu0 0.0
  %2892 = vmatprep.subr.mxu0 0.0
  %2893 = vmatpush2.msra.mxu0 0.0
  %2894 = vmatprep.subr.mxu0 0.0
  %2895 = vmatpush2.msra.mxu0 0.0
  %2896 = vmatprep.subr.mxu0 0.0
  %2897 = vmatpush2.msra.mxu0 0.0
  %2898 = vmatprep.subr.mxu0 0.0
  %2899 = vmatpush2.msra.mxu0 0.0
  %2900 = vmatprep.subr.mxu0 0.0
  %2901 = vmatpush2.msra.mxu0 0.0
  %2902 = vmatprep.subr.mxu0 0.0
  %2903 = vmatpush2.msra.mxu0 0.0
  %2904 = vmatprep.mubr.f32.mxu0 0.0
  %2905 = vmatmul.mubr.f32.gmra.mxu0 %v2766
  %v2906 = vpop.f32.mrf.mxu0
  %v2907 = vadd.f32 0.0, %v2906
  %v2908 = vpop.f32.mrf.mxu0
  %2909 = vdwg.mxu0
  %v2910 = vadd.f32 %v2839, %v2907
  %v2911 = vld [vmem:[%s410 + $0x38] sm:$0xff]
  %2912 = vmatprep.subr.mxu0 0.0
  %2913 = vmatpush1.msra.mxu0 0.0
  %2914 = vmatprep.subr.mxu0 0.0
  %2915 = vmatpush1.msra.mxu0 0.0
  %2916 = vmatprep.subr.mxu0 0.0
  %2917 = vmatpush1.msra.mxu0 0.0
  %2918 = vmatprep.subr.mxu0 0.0
  %2919 = vmatpush1.msra.mxu0 0.0
  %2920 = vmatprep.subr.mxu0 0.0
  %2921 = vmatpush1.msra.mxu0 0.0
  %2922 = vmatprep.subr.mxu0 0.0
  %2923 = vmatpush1.msra.mxu0 0.0
  %2924 = vmatprep.subr.mxu0 0.0
  %2925 = vmatpush1.msra.mxu0 0.0
  %2926 = vmatprep.subr.mxu0 0.0
  %2927 = vmatpush1.msra.mxu0 0.0
  %2928 = vmatprep.subr.mxu0 0.0
  %2929 = vmatpush1.msra.mxu0 0.0
  %2930 = vmatprep.subr.mxu0 0.0
  %2931 = vmatpush1.msra.mxu0 0.0
  %2932 = vmatprep.subr.mxu0 0.0
  %2933 = vmatpush1.msra.mxu0 0.0
  %2934 = vmatprep.subr.mxu0 0.0
  %2935 = vmatpush1.msra.mxu0 0.0
  %2936 = vmatprep.subr.mxu0 0.0
  %2937 = vmatpush1.msra.mxu0 %v554
  %2938 = vmatprep.subr.mxu0 0.0
  %2939 = vmatpush1.msra.mxu0 %v553
  %2940 = vmatprep.subr.mxu0 0.0
  %2941 = vmatpush1.msra.mxu0 %v552
  %2942 = vmatprep.subr.mxu0 0.0
  %2943 = vmatpush1.msra.mxu0 %v551
  %2944 = vmatprep.subr.mxu0 0.0
  %2945 = vmatpush2.msra.mxu0 0.0
  %2946 = vmatprep.subr.mxu0 0.0
  %2947 = vmatpush2.msra.mxu0 0.0
  %2948 = vmatprep.subr.mxu0 0.0
  %2949 = vmatpush2.msra.mxu0 0.0
  %2950 = vmatprep.subr.mxu0 0.0
  %2951 = vmatpush2.msra.mxu0 0.0
  %2952 = vmatprep.subr.mxu0 0.0
  %2953 = vmatpush2.msra.mxu0 0.0
  %2954 = vmatprep.subr.mxu0 0.0
  %2955 = vmatpush2.msra.mxu0 0.0
  %2956 = vmatprep.subr.mxu0 0.0
  %2957 = vmatpush2.msra.mxu0 0.0
  %2958 = vmatprep.subr.mxu0 0.0
  %2959 = vmatpush2.msra.mxu0 0.0
  %2960 = vmatprep.subr.mxu0 0.0
  %2961 = vmatpush2.msra.mxu0 0.0
  %2962 = vmatprep.subr.mxu0 0.0
  %2963 = vmatpush2.msra.mxu0 0.0
  %2964 = vmatprep.subr.mxu0 0.0
  %2965 = vmatpush2.msra.mxu0 0.0
  %2966 = vmatprep.subr.mxu0 0.0
  %2967 = vmatpush2.msra.mxu0 0.0
  %2968 = vmatprep.subr.mxu0 0.0
  %2969 = vmatpush2.msra.mxu0 0.0
  %2970 = vmatprep.subr.mxu0 0.0
  %2971 = vmatpush2.msra.mxu0 0.0
  %2972 = vmatprep.subr.mxu0 0.0
  %2973 = vmatpush2.msra.mxu0 0.0
  %2974 = vmatprep.subr.mxu0 0.0
  %2975 = vmatpush2.msra.mxu0 0.0
  %2976 = vmatprep.mubr.f32.mxu0 0.0
  %2977 = vmatmul.mubr.f32.gmra.mxu0 %v2766
  %v2978 = vpop.f32.mrf.mxu0
  %v2979 = vadd.f32 0.0, %v2978
  %v2980 = vpop.f32.mrf.mxu0
  %2981 = vdwg.mxu0
  %v2982 = vadd.f32 %v2911, %v2979
  %v2983 = vld [vmem:[%s534 + $0x38] sm:$0xff]
  %2984 = vmatprep.subr.mxu0 0.0
  %2985 = vmatpush1.msra.mxu0 0.0
  %2986 = vmatprep.subr.mxu0 0.0
  %2987 = vmatpush1.msra.mxu0 0.0
  %2988 = vmatprep.subr.mxu0 0.0
  %2989 = vmatpush1.msra.mxu0 0.0
  %2990 = vmatprep.subr.mxu0 0.0
  %2991 = vmatpush1.msra.mxu0 0.0
  %2992 = vmatprep.subr.mxu0 0.0
  %2993 = vmatpush1.msra.mxu0 0.0
  %2994 = vmatprep.subr.mxu0 0.0
  %2995 = vmatpush1.msra.mxu0 0.0
  %2996 = vmatprep.subr.mxu0 0.0
  %2997 = vmatpush1.msra.mxu0 0.0
  %2998 = vmatprep.subr.mxu0 0.0
  %2999 = vmatpush1.msra.mxu0 0.0
  %3000 = vmatprep.subr.mxu0 0.0
  %3001 = vmatpush1.msra.mxu0 0.0
  %3002 = vmatprep.subr.mxu0 0.0
  %3003 = vmatpush1.msra.mxu0 0.0
  %3004 = vmatprep.subr.mxu0 0.0
  %3005 = vmatpush1.msra.mxu0 0.0
  %3006 = vmatprep.subr.mxu0 0.0
  %3007 = vmatpush1.msra.mxu0 0.0
  %3008 = vmatprep.subr.mxu0 0.0
  %3009 = vmatpush1.msra.mxu0 %v558
  %3010 = vmatprep.subr.mxu0 0.0
  %3011 = vmatpush1.msra.mxu0 %v557
  %3012 = vmatprep.subr.mxu0 0.0
  %3013 = vmatpush1.msra.mxu0 %v556
  %3014 = vmatprep.subr.mxu0 0.0
  %3015 = vmatpush1.msra.mxu0 %v555
  %3016 = vmatprep.subr.mxu0 0.0
  %3017 = vmatpush2.msra.mxu0 0.0
  %3018 = vmatprep.subr.mxu0 0.0
  %3019 = vmatpush2.msra.mxu0 0.0
  %3020 = vmatprep.subr.mxu0 0.0
  %3021 = vmatpush2.msra.mxu0 0.0
  %3022 = vmatprep.subr.mxu0 0.0
  %3023 = vmatpush2.msra.mxu0 0.0
  %3024 = vmatprep.subr.mxu0 0.0
  %3025 = vmatpush2.msra.mxu0 0.0
  %3026 = vmatprep.subr.mxu0 0.0
  %3027 = vmatpush2.msra.mxu0 0.0
  %3028 = vmatprep.subr.mxu0 0.0
  %3029 = vmatpush2.msra.mxu0 0.0
  %3030 = vmatprep.subr.mxu0 0.0
  %3031 = vmatpush2.msra.mxu0 0.0
  %3032 = vmatprep.subr.mxu0 0.0
  %3033 = vmatpush2.msra.mxu0 0.0
  %3034 = vmatprep.subr.mxu0 0.0
  %3035 = vmatpush2.msra.mxu0 0.0
  %3036 = vmatprep.subr.mxu0 0.0
  %3037 = vmatpush2.msra.mxu0 0.0
  %3038 = vmatprep.subr.mxu0 0.0
  %3039 = vmatpush2.msra.mxu0 0.0
  %3040 = vmatprep.subr.mxu0 0.0
  %3041 = vmatpush2.msra.mxu0 0.0
  %3042 = vmatprep.subr.mxu0 0.0
  %3043 = vmatpush2.msra.mxu0 0.0
  %3044 = vmatprep.subr.mxu0 0.0
  %3045 = vmatpush2.msra.mxu0 0.0
  %3046 = vmatprep.subr.mxu0 0.0
  %3047 = vmatpush2.msra.mxu0 0.0
  %3048 = vmatprep.mubr.f32.mxu0 0.0
  %3049 = vmatmul.mubr.f32.gmra.mxu0 %v2766
  %v3050 = vpop.f32.mrf.mxu0
  %v3051 = vadd.f32 0.0, %v3050
  %v3052 = vpop.f32.mrf.mxu0
  %3053 = vdwg.mxu0
  %v3054 = vadd.f32 %v2983, %v3051
  %v3055 = vxor.u32 %v2838, 2147483648
  %v3056 = vmul.f32 %v3055, 1.442695
  %v3057 = vpow.pop %v3056
  %v3058 = vadd.f32 %v3057, 1.0
  %v3059 = vrcp.pop %v3058
  %v3060 = vmul.f32 1.0, %v3059
  %v3061 = vxor.u32 %v2910, 2147483648
  %v3062 = vmul.f32 %v3061, 1.442695
  %v3063 = vpow.pop %v3062
  %v3064 = vadd.f32 %v3063, 1.0
  %v3065 = vrcp.pop %v3064
  %v3066 = vmul.f32 1.0, %v3065
  %v3067 = vxor.u32 %v3054, 2147483648
  %v3068 = vmul.f32 %v3067, 1.442695
  %v3069 = vpow.pop %v3068
  %v3070 = vadd.f32 %v3069, 1.0
  %v3071 = vrcp.pop %v3070
  %v3072 = vmul.f32 1.0, %v3071
  %v3073 = vtanh.pop %v2982
  %v3074 = vmul.f32 %v3066, %v2761
  %v3075 = vmul.f32 %v3060, %v3073
  %v3076 = vadd.f32 %v3074, %v3075
  %v3077 = vtanh.pop %v3076
  %v3078 = vmul.f32 %v3072, %v3077
  %v3079 = vld [vmem:[%s2] sm:$0xff]
  %v3080 = vld [vmem:[%s2 + $0x8] sm:$0xff]
  %v3081 = vld [vmem:[%s2 + $0x10] sm:$0xff]
  %v3082 = vld [vmem:[%s2 + $0x18] sm:$0xff]
  %v3083 = vld [vmem:[%s2 + $0x20] sm:$0xff]
  %v3084 = vld [vmem:[%s2 + $0x28] sm:$0xff]
  %v3085 = vld [vmem:[%s2 + $0x30] sm:$0xff]
  %v3086 = vld [vmem:[%s2 + $0x38] sm:$0xff]
  %v3087 = vld [vmem:[%s2 + $0x40] sm:$0xff]
  %v3088 = vld [vmem:[%s2 + $0x48] sm:$0xff]
  %v3089 = vld [vmem:[%s2 + $0x50] sm:$0xff]
  %v3090 = vld [vmem:[%s2 + $0x58] sm:$0xff]
  %v3091 = vld [vmem:[%s2 + $0x60] sm:$0xff]
  %v3092 = vld [vmem:[%s2 + $0x68] sm:$0xff]
  %v3093 = vld [vmem:[%s2 + $0x70] sm:$0xff]
  %v3094 = vld [vmem:[%s2 + $0x78] sm:$0xff]
  %v3095 = vld [vmem:[%s2 + $0x80] sm:$0xff]
  %v3096 = vld [vmem:[%s2 + $0x88] sm:$0xff]
  %v3097 = vld [vmem:[%s2 + $0x90] sm:$0xff]
  %v3098 = vld [vmem:[%s2 + $0x98] sm:$0xff]
  %v3099 = vld [vmem:[%s2 + $0xa0] sm:$0x1]
  %v3100 = vld [vmem:[%s2 + $0xa8] sm:$0x1]
  %v3101 = vlaneseq
  %v3102 = vshrl.u32 %v3101, 7
  %v3103 = vsub.s32 0, %v3102
  %v3104 = vrot.slane %v3099, %v3103
  %v3106 = vsel %vm162, %v3078, 0
  %3108 = vmatprep.subr.mxu0 0.0
  %3109 = vmatpush1.msra.mxu0 0.0
  %3110 = vmatprep.subr.mxu0 0.0
  %3111 = vmatpush1.msra.mxu0 0.0
  %3112 = vmatprep.subr.mxu0 0.0
  %3113 = vmatpush1.msra.mxu0 0.0
  %3114 = vmatprep.subr.mxu0 0.0
  %3115 = vmatpush1.msra.mxu0 0.0
  %3116 = vmatprep.subr.mxu0 0.0
  %3117 = vmatpush1.msra.mxu0 0.0
  %3118 = vmatprep.subr.mxu0 0.0
  %3119 = vmatpush1.msra.mxu0 0.0
  %3120 = vmatprep.subr.mxu0 0.0
  %3121 = vmatpush1.msra.mxu0 0.0
  %3122 = vmatprep.subr.mxu0 0.0
  %3123 = vmatpush1.msra.mxu0 0.0
  %3124 = vmatprep.subr.mxu0 0.0
  %3125 = vmatpush1.msra.mxu0 0.0
  %3126 = vmatprep.subr.mxu0 0.0
  %3127 = vmatpush1.msra.mxu0 0.0
  %3128 = vmatprep.subr.mxu0 0.0
  %3129 = vmatpush1.msra.mxu0 0.0
  %3130 = vmatprep.subr.mxu0 0.0
  %3131 = vmatpush1.msra.mxu0 0.0
  %3132 = vmatprep.subr.mxu0 0.0
  %3133 = vmatpush1.msra.mxu0 %v3082
  %3134 = vmatprep.subr.mxu0 0.0
  %3135 = vmatpush1.msra.mxu0 %v3081
  %3136 = vmatprep.subr.mxu0 0.0
  %3137 = vmatpush1.msra.mxu0 %v3080
  %3138 = vmatprep.subr.mxu0 0.0
  %3139 = vmatpush1.msra.mxu0 %v3079
  %3140 = vmatprep.subr.mxu0 0.0
  %3141 = vmatpush2.msra.mxu0 0.0
  %3142 = vmatprep.subr.mxu0 0.0
  %3143 = vmatpush2.msra.mxu0 0.0
  %3144 = vmatprep.subr.mxu0 0.0
  %3145 = vmatpush2.msra.mxu0 0.0
  %3146 = vmatprep.subr.mxu0 0.0
  %3147 = vmatpush2.msra.mxu0 0.0
  %3148 = vmatprep.subr.mxu0 0.0
  %3149 = vmatpush2.msra.mxu0 0.0
  %3150 = vmatprep.subr.mxu0 0.0
  %3151 = vmatpush2.msra.mxu0 0.0
  %3152 = vmatprep.subr.mxu0 0.0
  %3153 = vmatpush2.msra.mxu0 0.0
  %3154 = vmatprep.subr.mxu0 0.0
  %3155 = vmatpush2.msra.mxu0 0.0
  %3156 = vmatprep.subr.mxu0 0.0
  %3157 = vmatpush2.msra.mxu0 0.0
  %3158 = vmatprep.subr.mxu0 0.0
  %3159 = vmatpush2.msra.mxu0 0.0
  %3160 = vmatprep.subr.mxu0 0.0
  %3161 = vmatpush2.msra.mxu0 0.0
  %3162 = vmatprep.subr.mxu0 0.0
  %3163 = vmatpush2.msra.mxu0 0.0
  %3164 = vmatprep.subr.mxu0 0.0
  %3165 = vmatpush2.msra.mxu0 0.0
  %3166 = vmatprep.subr.mxu0 0.0
  %3167 = vmatpush2.msra.mxu0 0.0
  %3168 = vmatprep.subr.mxu0 0.0
  %3169 = vmatpush2.msra.mxu0 0.0
  %3170 = vmatprep.subr.mxu0 0.0
  %3171 = vmatpush2.msra.mxu0 0.0
  %3172 = vmatprep.mubr.f32.mxu0 0.0
  %3173 = vmatmul.mubr.f32.gmra.mxu0 %v3106
  %v3174 = vpop.f32.mrf.mxu0
  %v3175 = vadd.f32 %v3104, %v3174
  %v3176 = vpop.f32.mrf.mxu0
  %3177 = vdwg.mxu0
  %v3178 = vmax.f32 %v3175, 0.0
  %v3179 = vlaneseq
  %v3180 = vshrl.u32 %v3179, 7
  %v3181 = vsub.s32 0, %v3180
  %v3182 = vrot.slane %v3100, %v3181
  %3183 = vmatprep.subr.mxu0 0.0
  %3184 = vmatpush1.msra.mxu0 %v3098
  %3185 = vmatprep.subr.mxu0 0.0
  %3186 = vmatpush1.msra.mxu0 %v3097
  %3187 = vmatprep.subr.mxu0 0.0
  %3188 = vmatpush1.msra.mxu0 %v3096
  %3189 = vmatprep.subr.mxu0 0.0
  %3190 = vmatpush1.msra.mxu0 %v3095
  %3191 = vmatprep.subr.mxu0 0.0
  %3192 = vmatpush1.msra.mxu0 %v3094
  %3193 = vmatprep.subr.mxu0 0.0
  %3194 = vmatpush1.msra.mxu0 %v3093
  %3195 = vmatprep.subr.mxu0 0.0
  %3196 = vmatpush1.msra.mxu0 %v3092
  %3197 = vmatprep.subr.mxu0 0.0
  %3198 = vmatpush1.msra.mxu0 %v3091
  %3199 = vmatprep.subr.mxu0 0.0
  %3200 = vmatpush1.msra.mxu0 %v3090
  %3201 = vmatprep.subr.mxu0 0.0
  %3202 = vmatpush1.msra.mxu0 %v3089
  %3203 = vmatprep.subr.mxu0 0.0
  %3204 = vmatpush1.msra.mxu0 %v3088
  %3205 = vmatprep.subr.mxu0 0.0
  %3206 = vmatpush1.msra.mxu0 %v3087
  %3207 = vmatprep.subr.mxu0 0.0
  %3208 = vmatpush1.msra.mxu0 %v3086
  %3209 = vmatprep.subr.mxu0 0.0
  %3210 = vmatpush1.msra.mxu0 %v3085
  %3211 = vmatprep.subr.mxu0 0.0
  %3212 = vmatpush1.msra.mxu0 %v3084
  %3213 = vmatprep.subr.mxu0 0.0
  %3214 = vmatpush1.msra.mxu0 %v3083
  %3215 = vmatprep.subr.mxu0 0.0
  %3216 = vmatpush2.msra.mxu0 0.0
  %3217 = vmatprep.subr.mxu0 0.0
  %3218 = vmatpush2.msra.mxu0 0.0
  %3219 = vmatprep.subr.mxu0 0.0
  %3220 = vmatpush2.msra.mxu0 0.0
  %3221 = vmatprep.subr.mxu0 0.0
  %3222 = vmatpush2.msra.mxu0 0.0
  %3223 = vmatprep.subr.mxu0 0.0
  %3224 = vmatpush2.msra.mxu0 0.0
  %3225 = vmatprep.subr.mxu0 0.0
  %3226 = vmatpush2.msra.mxu0 0.0
  %3227 = vmatprep.subr.mxu0 0.0
  %3228 = vmatpush2.msra.mxu0 0.0
  %3229 = vmatprep.subr.mxu0 0.0
  %3230 = vmatpush2.msra.mxu0 0.0
  %3231 = vmatprep.subr.mxu0 0.0
  %3232 = vmatpush2.msra.mxu0 0.0
  %3233 = vmatprep.subr.mxu0 0.0
  %3234 = vmatpush2.msra.mxu0 0.0
  %3235 = vmatprep.subr.mxu0 0.0
  %3236 = vmatpush2.msra.mxu0 0.0
  %3237 = vmatprep.subr.mxu0 0.0
  %3238 = vmatpush2.msra.mxu0 0.0
  %3239 = vmatprep.subr.mxu0 0.0
  %3240 = vmatpush2.msra.mxu0 0.0
  %3241 = vmatprep.subr.mxu0 0.0
  %3242 = vmatpush2.msra.mxu0 0.0
  %3243 = vmatprep.subr.mxu0 0.0
  %3244 = vmatpush2.msra.mxu0 0.0
  %3245 = vmatprep.subr.mxu0 0.0
  %3246 = vmatpush2.msra.mxu0 0.0
  %3247 = vmatprep.mubr.f32.mxu0 0.0
  %3248 = vmatmul.mubr.f32.gmra.mxu0 %v3178
  %v3249 = vpop.f32.mrf.mxu0
  %v3250 = vadd.f32 %v3182, %v3249
  %v3251 = vpop.f32.mrf.mxu0
  %3252 = vdwg.mxu0
  %3253 = vst [vmem:[%s3] sm:$0xff] %v3250
  // Predicated region
  $region14: #{hybrid_lstm_forward.1} parent=0 // pred_check
    _
  $region15: #{hybrid_lstm_forward.1} parent=0 // pred_check_branch
    %3255 = sbr.rel (0) target = $region17
  $region16: #{hybrid_lstm_forward.1} parent=0 // pred_region
    _
  $region17: #{hybrid_lstm_forward.1} parent=0 // pred_fallthru
    _
  // Predicated region
  $region18: #{hybrid_lstm_forward.1} parent=0 // pred_check
    _
  $region19: #{hybrid_lstm_forward.1} parent=0 // pred_check_branch
    %3257 = sbr.rel (0) target = $region21
  $region20: #{hybrid_lstm_forward.1} parent=0 // pred_region
    _
  $region21: #{hybrid_lstm_forward.1} parent=0 // pred_fallthru
    _

</llo_original>
